<compile_context>
chip_gen: v7x
topology: tpu7x:2x2x1
jax: 0.10.0
libtpu: 0.0.40
codegen_flags: <defaults>
</compile_context>

<pallas_src>
import math

import jax
import jax.numpy as jnp
from jax import lax
from jax.experimental import pallas as pl
from jax.experimental.pallas import tpu as pltpu  # noqa: F401  (kept for TPU-specific tuning hooks)

LANE = 128


def _round_up(x, m):
    return ((x + m - 1) // m) * m


# ----------------------------------------------------------------------------
# Kernel 1: hoisted input projection  GI = X_flat @ W_ih^T + b   (all timesteps at once)
# ----------------------------------------------------------------------------
def _input_proj_kernel(x_ref, w_ref, b_ref, out_ref):
    out_ref[...] = (
        jnp.dot(x_ref[...], w_ref[...], preferred_element_type=jnp.float32) + b_ref[...]
    ).astype(out_ref.dtype)


def input_projection(x_flat, w_t, b):
    """x_flat: (M, K) with M = T*B, w_t: (K, 3*HP), b: (1, 3*HP) -> (M, 3*HP).

    Single full-block call at these sizes; for large M this would tile M over a grid.
    """
    M, K = x_flat.shape
    N = w_t.shape[1]
    return pl.pallas_call(
        _input_proj_kernel,
        out_shape=jax.ShapeDtypeStruct((M, N), jnp.float32),
        in_specs=[
            pl.BlockSpec((M, K), lambda: (0, 0)),
            pl.BlockSpec((K, N), lambda: (0, 0)),
            pl.BlockSpec((1, N), lambda: (0, 0)),
        ],
        out_specs=pl.BlockSpec((M, N), lambda: (0, 0)),
    )(x_flat, w_t, b)


# ----------------------------------------------------------------------------
# Shared GRU cell math (gates are lane-aligned HP-wide slices).
#   r = sigmoid(gi_r + h@W_hr^T)                (b_ir + b_hr folded into gi_r)
#   z = sigmoid(gi_z + h@W_hz^T)                (b_iz + b_hz folded into gi_z)
#   n = tanh(gi_n + r * (h@W_hn^T + b_hn))      (b_in folded into gi_n)
#   h' = (1 - z) * n + z * h
# ----------------------------------------------------------------------------
def _gru_cell(gi_t, h_prev, whh, b_hn, hp):
    gh = jnp.dot(h_prev, whh, preferred_element_type=jnp.float32)   # (B, 3*HP)
    r = jax.nn.sigmoid(gi_t[:, 0:hp] + gh[:, 0:hp])
    z = jax.nn.sigmoid(gi_t[:, hp:2 * hp] + gh[:, hp:2 * hp])
    n = jnp.tanh(gi_t[:, 2 * hp:3 * hp] + r * (gh[:, 2 * hp:3 * hp] + b_hn))
    return (1.0 - z) * n + z * h_prev


# ----------------------------------------------------------------------------
# Kernel 2: recurrence for a non-final layer. Whole sequence VMEM-resident,
# unrolled fori_loop over time, writes the full hidden sequence (T, B, HP).
# ----------------------------------------------------------------------------
def _gru_recurrence_kernel(gi_ref, whh_ref, bhn_ref, seq_ref):
    T, B, g3 = gi_ref.shape
    hp = g3 // 3
    whh = whh_ref[...]          # hoisted loads: reused by every step
    b_hn = bhn_ref[...]

    def step(t, h):
        h_new = _gru_cell(gi_ref[t], h, whh, b_hn, hp)
        seq_ref[t] = h_new.astype(seq_ref.dtype)
        return h_new

    lax.fori_loop(0, T, step, jnp.zeros((B, hp), jnp.float32), unroll=True)


def gru_recurrence(gi_tbg, whh_t, b_hn):
    T, B, g3 = gi_tbg.shape
    hp = g3 // 3
    return pl.pallas_call(
        _gru_recurrence_kernel,
        out_shape=jax.ShapeDtypeStruct((T, B, hp), jnp.float32),
        in_specs=[
            pl.BlockSpec((T, B, g3), lambda: (0, 0, 0)),
            pl.BlockSpec((hp, g3), lambda: (0, 0)),
            pl.BlockSpec((1, hp), lambda: (0, 0)),
        ],
        out_specs=pl.BlockSpec((T, B, hp), lambda: (0, 0, 0)),
    )(gi_tbg, whh_t, b_hn)


# ----------------------------------------------------------------------------
# Kernel 3: final layer recurrence + fused classifier  softmax(relu(h_T @ W_fc^T + b_fc))
# ----------------------------------------------------------------------------
def _gru_last_layer_kernel(gi_ref, whh_ref, bhn_ref, wfc_ref, bfc_ref, out_ref):
    T, B, g3 = gi_ref.shape
    hp = g3 // 3
    whh = whh_ref[...]
    b_hn = bhn_ref[...]

    def step(t, h):
        return _gru_cell(gi_ref[t], h, whh, b_hn, hp)

    h_last = lax.fori_loop(0, T, step, jnp.zeros((B, hp), jnp.float32), unroll=True)

    logits = jnp.dot(h_last, wfc_ref[...], preferred_element_type=jnp.float32) + bfc_ref[...]
    act = jnp.maximum(logits, 0.0)
    e = jnp.exp(act - jnp.max(act, axis=-1, keepdims=True))
    inv = pl.reciprocal(jnp.sum(e, axis=-1, keepdims=True), approx=True)
    out_ref[...] = (e * inv).astype(out_ref.dtype)


def gru_last_layer(gi_tbg, whh_t, b_hn, fc_w_t, fc_b):
    T, B, g3 = gi_tbg.shape
    hp = g3 // 3
    O = fc_w_t.shape[1]
    return pl.pallas_call(
        _gru_last_layer_kernel,
        out_shape=jax.ShapeDtypeStruct((B, O), jnp.float32),
        in_specs=[
            pl.BlockSpec((T, B, g3), lambda: (0, 0, 0)),
            pl.BlockSpec((hp, g3), lambda: (0, 0)),
            pl.BlockSpec((1, hp), lambda: (0, 0)),
            pl.BlockSpec((hp, O), lambda: (0, 0)),
            pl.BlockSpec((1, O), lambda: (0, 0)),
        ],
        out_specs=pl.BlockSpec((B, O), lambda: (0, 0)),
    )(gi_tbg, whh_t, b_hn, fc_w_t, fc_b)


# ----------------------------------------------------------------------------
# Parameter init (PyTorch default shapes/distributions) + lane-aligned padding.
# ----------------------------------------------------------------------------
def _pad_gate_matrix(w, hp, in_pad):
    """w: (3H, in_size) PyTorch layout -> (in_pad, 3*hp), per-gate zero-padded & transposed."""
    h = w.shape[0] // 3
    in_size = w.shape[1]
    gates = jnp.split(w, 3, axis=0)
    padded = [jnp.zeros((hp, in_pad), w.dtype).at[:h, :in_size].set(g) for g in gates]
    return jnp.concatenate(padded, axis=0).T


def _pad_gate_vector(v, hp):
    h = v.shape[0] // 3
    gates = jnp.split(v, 3)
    return jnp.concatenate([jnp.zeros((hp,), v.dtype).at[:h].set(g) for g in gates])


def _pad_vector(v, hp):
    return jnp.zeros((hp,), v.dtype).at[: v.shape[0]].set(v)


def init_params(key, d_model, hidden_size, num_layer, output_size):
    hp = _round_up(hidden_size, LANE)
    k = 1.0 / math.sqrt(hidden_size)
    layers, raw_layers = [], []
    for layer in range(num_layer):
        in_size = d_model if layer == 0 else hidden_size
        in_pad = d_model if layer == 0 else hp
        key, k1, k2, k3, k4 = jax.random.split(key, 5)
        w_ih = jax.random.uniform(k1, (3 * hidden_size, in_size), jnp.float32, -k, k)
        w_hh = jax.random.uniform(k2, (3 * hidden_size, hidden_size), jnp.float32, -k, k)
        b_ih = jax.random.uniform(k3, (3 * hidden_size,), jnp.float32, -k, k)
        b_hh = jax.random.uniform(k4, (3 * hidden_size,), jnp.float32, -k, k)
        raw_layers.append((w_ih, w_hh, b_ih, b_hh))

        b_ir, b_iz, b_in = jnp.split(b_ih, 3)
        b_hr, b_hz, b_hn = jnp.split(b_hh, 3)
        b_comb = jnp.concatenate([b_ir + b_hr, b_iz + b_hz, b_in])     # folded r/z biases

        layers.append(dict(
            w_ih_t=_pad_gate_matrix(w_ih, hp, in_pad),                 # (in_pad, 3*HP)
            w_hh_t=_pad_gate_matrix(w_hh, hp, hp),                     # (HP, 3*HP)
            b_comb=_pad_gate_vector(b_comb, hp).reshape(1, -1),        # (1, 3*HP)
            b_hn=_pad_vector(b_hn, hp).reshape(1, -1),                 # (1, HP)
        ))

    kl = 1.0 / math.sqrt(hidden_size)
    key, k1, k2 = jax.random.split(key, 3)
    w_fc = jax.random.uniform(k1, (output_size, hidden_size), jnp.float32, -kl, kl)
    b_fc = jax.random.uniform(k2, (output_size,), jnp.float32, -kl, kl)
    params = dict(
        layers=layers,
        fc_w_t=jnp.zeros((hp, output_size), jnp.float32).at[:hidden_size, :].set(w_fc.T),
        fc_b=b_fc.reshape(1, -1),
    )
    raw = dict(layers=raw_layers, fc_w=w_fc, fc_b=b_fc)
    return params, raw


# ----------------------------------------------------------------------------
# Full forward: per layer [hoisted projection kernel] -> [fori_loop recurrence kernel];
# classifier fused into the last layer's kernel.
# ----------------------------------------------------------------------------
@jax.jit
def gru_forward(x_btd, params):
    B, T, D = x_btd.shape
    # One small relayout to time-major; all later (T,B,*) <-> (T*B,*) reshapes are free.
    seq_flat = jnp.transpose(x_btd, (1, 0, 2)).reshape(T * B, D)
    n_layers = len(params["layers"])
    out = None
    for li, lp in enumerate(params["layers"]):
        gi = input_projection(seq_flat, lp["w_ih_t"], lp["b_comb"])       # (T*B, 3*HP)
        gi = gi.reshape(T, B, gi.shape[-1])                               # free reshape
        if li + 1 < n_layers:
            seq = gru_recurrence(gi, lp["w_hh_t"], lp["b_hn"])            # (T, B, HP)
            seq_flat = seq.reshape(T * B, seq.shape[-1])                  # free reshape
        else:
            out = gru_last_layer(gi, lp["w_hh_t"], lp["b_hn"],
                                 params["fc_w_t"], params["fc_b"])        # (B, O)
    return out


# ----------------------------------------------------------------------------
# Pure-JAX reference (unpadded, PyTorch GRU semantics) for numerical validation.
# ----------------------------------------------------------------------------
def reference_forward(x, raw):
    B, T, _ = x.shape
    seq = x
    for (w_ih, w_hh, b_ih, b_hh) in raw["layers"]:
        H = w_hh.shape[1]
        h = jnp.zeros((B, H), jnp.float32)
        outs = []
        for t in range(T):
            gi = seq[:, t, :] @ w_ih.T + b_ih
            gh = h @ w_hh.T + b_hh
            i_r, i_z, i_n = jnp.split(gi, 3, axis=-1)
            h_r, h_z, h_n = jnp.split(gh, 3, axis=-1)
            r = jax.nn.sigmoid(i_r + h_r)
            z = jax.nn.sigmoid(i_z + h_z)
            n = jnp.tanh(i_n + r * h_n)
            h = (1.0 - z) * n + z * h
            outs.append(h)
        seq = jnp.stack(outs, axis=1)
    logits = seq[:, -1, :] @ raw["fc_w"].T + raw["fc_b"]
    return jax.nn.softmax(jax.nn.relu(logits), axis=-1)


if __name__ == "__main__":
    B, T = 2, 8
    d_model, hidden_size, num_layer, output_size = 16, 32, 2, 8

    key = jax.random.PRNGKey(0)
    key, kx, kp = jax.random.split(key, 3)
    x = jax.random.normal(kx, (B, T, d_model), jnp.float32)
    params, raw = init_params(kp, d_model, hidden_size, num_layer, output_size)

    out = jax.block_until_ready(gru_forward(x, params))

    assert out.shape == (B, output_size)
    # softmax rows sum to 1 (approx EUP reciprocal -> loose tolerance)
    assert bool(jnp.allclose(jnp.sum(out, axis=-1), 1.0, atol=2e-3))
    # matches the unpadded pure-JAX reference
    ref = reference_forward(x, raw)
    assert bool(jnp.allclose(out, ref, atol=2e-3)), (out, ref)
    print("KERNEL_OK")
</pallas_src>

<mosaic_0001>
module attributes {stable_mosaic.version = 11 : i64} {
  func.func @_gru_recurrence_kernel(%arg0: memref<8x2x384xf32, #tpu.memory_space<vmem>>, %arg1: memref<128x384xf32, #tpu.memory_space<vmem>>, %arg2: memref<1x128xf32, #tpu.memory_space<vmem>>, %arg3: memref<8x2x128xf32, #tpu.memory_space<vmem>>) attributes {dimension_semantics = [], scalar_prefetch = 0 : i64, scratch_operands = 0 : i64, tpu.core_type = #tpu.core_type<tc>} {
    %c0 = arith.constant 0 : index
    %c0_0 = arith.constant 0 : index
    %0 = vector.load %arg1[%c0, %c0_0] : memref<128x384xf32, #tpu.memory_space<vmem>>, vector<128x384xf32>
    %c0_1 = arith.constant 0 : index
    %c0_2 = arith.constant 0 : index
    %1 = vector.load %arg2[%c0_1, %c0_2] : memref<1x128xf32, #tpu.memory_space<vmem>>, vector<1x128xf32>
    %cst = arith.constant 0.000000e+00 : f32
    %2 = vector.broadcast %cst : f32 to vector<2x128xf32>
    %c0_i32 = arith.constant 0 : i32
    %3 = arith.index_cast %c0_i32 : i32 to index
    %c0_3 = arith.constant 0 : index
    %c0_4 = arith.constant 0 : index
    %4 = vector.load %arg0[%3, %c0_3, %c0_4] : memref<8x2x384xf32, #tpu.memory_space<vmem>>, vector<1x2x384xf32>
    %5 = vector.shape_cast %4 : vector<1x2x384xf32> to vector<2x384xf32>
    %cst_5 = arith.constant dense<0.000000e+00> : vector<2x384xf32>
    %6 = tpu.matmul %2, %0, %cst_5 {dimension_numbers = #tpu.dot_dimension_numbers<[1], [0], [0], [1], [0, 0, 1, 1], [], []>} : vector<2x128xf32>, vector<128x384xf32>, vector<2x384xf32> -> vector<2x384xf32>
    %7 = vector.extract_strided_slice %5 {offsets = [0, 0], sizes = [2, 128], strides = [1, 1]} : vector<2x384xf32> to vector<2x128xf32>
    %8 = vector.extract_strided_slice %6 {offsets = [0, 0], sizes = [2, 128], strides = [1, 1]} : vector<2x384xf32> to vector<2x128xf32>
    %9 = arith.addf %7, %8 : vector<2x128xf32>
    %10 = arith.negf %9 : vector<2x128xf32>
    %11 = math.exp %10 : vector<2x128xf32>
    %cst_6 = arith.constant 1.000000e+00 : f32
    %12 = vector.broadcast %cst_6 : f32 to vector<2x128xf32>
    %13 = arith.addf %12, %11 : vector<2x128xf32>
    %14 = arith.divf %12, %13 : vector<2x128xf32>
    %15 = vector.extract_strided_slice %5 {offsets = [0, 128], sizes = [2, 128], strides = [1, 1]} : vector<2x384xf32> to vector<2x128xf32>
    %16 = vector.extract_strided_slice %6 {offsets = [0, 128], sizes = [2, 128], strides = [1, 1]} : vector<2x384xf32> to vector<2x128xf32>
    %17 = arith.addf %15, %16 : vector<2x128xf32>
    %18 = arith.negf %17 : vector<2x128xf32>
    %19 = math.exp %18 : vector<2x128xf32>
    %cst_7 = arith.constant 1.000000e+00 : f32
    %20 = vector.broadcast %cst_7 : f32 to vector<2x128xf32>
    %21 = arith.addf %20, %19 : vector<2x128xf32>
    %22 = arith.divf %20, %21 : vector<2x128xf32>
    %23 = vector.extract_strided_slice %5 {offsets = [0, 256], sizes = [2, 128], strides = [1, 1]} : vector<2x384xf32> to vector<2x128xf32>
    %24 = vector.extract_strided_slice %6 {offsets = [0, 256], sizes = [2, 128], strides = [1, 1]} : vector<2x384xf32> to vector<2x128xf32>
    %25 = vector.broadcast %1 : vector<1x128xf32> to vector<2x128xf32>
    %26 = arith.addf %24, %25 : vector<2x128xf32>
    %27 = arith.mulf %14, %26 : vector<2x128xf32>
    %28 = arith.addf %23, %27 : vector<2x128xf32>
    %29 = math.tanh %28 : vector<2x128xf32>
    %cst_8 = arith.constant 1.000000e+00 : f32
    %30 = vector.broadcast %cst_8 : f32 to vector<2x128xf32>
    %31 = arith.subf %30, %22 : vector<2x128xf32>
    %32 = arith.mulf %31, %29 : vector<2x128xf32>
    %33 = arith.mulf %22, %2 : vector<2x128xf32>
    %34 = arith.addf %32, %33 : vector<2x128xf32>
    %35 = arith.index_cast %c0_i32 : i32 to index
    %c0_9 = arith.constant 0 : index
    %c0_10 = arith.constant 0 : index
    %36 = vector.load %arg3[%35, %c0_9, %c0_10] : memref<8x2x128xf32, #tpu.memory_space<vmem>>, vector<1x2x128xf32>
    %37 = vector.shape_cast %36 : vector<1x2x128xf32> to vector<2x128xf32>
    %38 = vector.shape_cast %34 : vector<2x128xf32> to vector<1x2x128xf32>
    tpu.vector_store %arg3[%35, %c0_9, %c0_10], %38 {strides = array<i32>} : memref<8x2x128xf32, #tpu.memory_space<vmem>>, vector<1x2x128xf32>,
    %c1_i32 = arith.constant 1 : i32
    %39 = arith.index_cast %c1_i32 : i32 to index
    %c0_11 = arith.constant 0 : index
    %c0_12 = arith.constant 0 : index
    %40 = vector.load %arg0[%39, %c0_11, %c0_12] : memref<8x2x384xf32, #tpu.memory_space<vmem>>, vector<1x2x384xf32>
    %41 = vector.shape_cast %40 : vector<1x2x384xf32> to vector<2x384xf32>
    %cst_13 = arith.constant dense<0.000000e+00> : vector<2x384xf32>
    %42 = tpu.matmul %34, %0, %cst_13 {dimension_numbers = #tpu.dot_dimension_numbers<[1], [0], [0], [1], [0, 0, 1, 1], [], []>} : vector<2x128xf32>, vector<128x384xf32>, vector<2x384xf32> -> vector<2x384xf32>
    %43 = vector.extract_strided_slice %41 {offsets = [0, 0], sizes = [2, 128], strides = [1, 1]} : vector<2x384xf32> to vector<2x128xf32>
    %44 = vector.extract_strided_slice %42 {offsets = [0, 0], sizes = [2, 128], strides = [1, 1]} : vector<2x384xf32> to vector<2x128xf32>
    %45 = arith.addf %43, %44 : vector<2x128xf32>
    %46 = arith.negf %45 : vector<2x128xf32>
    %47 = math.exp %46 : vector<2x128xf32>
    %cst_14 = arith.constant 1.000000e+00 : f32
    %48 = vector.broadcast %cst_14 : f32 to vector<2x128xf32>
    %49 = arith.addf %48, %47 : vector<2x128xf32>
    %50 = arith.divf %48, %49 : vector<2x128xf32>
    %51 = vector.extract_strided_slice %41 {offsets = [0, 128], sizes = [2, 128], strides = [1, 1]} : vector<2x384xf32> to vector<2x128xf32>
    %52 = vector.extract_strided_slice %42 {offsets = [0, 128], sizes = [2, 128], strides = [1, 1]} : vector<2x384xf32> to vector<2x128xf32>
    %53 = arith.addf %51, %52 : vector<2x128xf32>
    %54 = arith.negf %53 : vector<2x128xf32>
    %55 = math.exp %54 : vector<2x128xf32>
    %cst_15 = arith.constant 1.000000e+00 : f32
    %56 = vector.broadcast %cst_15 : f32 to vector<2x128xf32>
    %57 = arith.addf %56, %55 : vector<2x128xf32>
    %58 = arith.divf %56, %57 : vector<2x128xf32>
    %59 = vector.extract_strided_slice %41 {offsets = [0, 256], sizes = [2, 128], strides = [1, 1]} : vector<2x384xf32> to vector<2x128xf32>
    %60 = vector.extract_strided_slice %42 {offsets = [0, 256], sizes = [2, 128], strides = [1, 1]} : vector<2x384xf32> to vector<2x128xf32>
    %61 = vector.broadcast %1 : vector<1x128xf32> to vector<2x128xf32>
    %62 = arith.addf %60, %61 : vector<2x128xf32>
    %63 = arith.mulf %50, %62 : vector<2x128xf32>
    %64 = arith.addf %59, %63 : vector<2x128xf32>
    %65 = math.tanh %64 : vector<2x128xf32>
    %cst_16 = arith.constant 1.000000e+00 : f32
    %66 = vector.broadcast %cst_16 : f32 to vector<2x128xf32>
    %67 = arith.subf %66, %58 : vector<2x128xf32>
    %68 = arith.mulf %67, %65 : vector<2x128xf32>
    %69 = arith.mulf %58, %34 : vector<2x128xf32>
    %70 = arith.addf %68, %69 : vector<2x128xf32>
    %71 = arith.index_cast %c1_i32 : i32 to index
    %c0_17 = arith.constant 0 : index
    %c0_18 = arith.constant 0 : index
    %72 = vector.load %arg3[%71, %c0_17, %c0_18] : memref<8x2x128xf32, #tpu.memory_space<vmem>>, vector<1x2x128xf32>
    %73 = vector.shape_cast %72 : vector<1x2x128xf32> to vector<2x128xf32>
    %74 = vector.shape_cast %70 : vector<2x128xf32> to vector<1x2x128xf32>
    tpu.vector_store %arg3[%71, %c0_17, %c0_18], %74 {strides = array<i32>} : memref<8x2x128xf32, #tpu.memory_space<vmem>>, vector<1x2x128xf32>,
    %c2_i32 = arith.constant 2 : i32
    %75 = arith.index_cast %c2_i32 : i32 to index
    %c0_19 = arith.constant 0 : index
    %c0_20 = arith.constant 0 : index
    %76 = vector.load %arg0[%75, %c0_19, %c0_20] : memref<8x2x384xf32, #tpu.memory_space<vmem>>, vector<1x2x384xf32>
    %77 = vector.shape_cast %76 : vector<1x2x384xf32> to vector<2x384xf32>
    %cst_21 = arith.constant dense<0.000000e+00> : vector<2x384xf32>
    %78 = tpu.matmul %70, %0, %cst_21 {dimension_numbers = #tpu.dot_dimension_numbers<[1], [0], [0], [1], [0, 0, 1, 1], [], []>} : vector<2x128xf32>, vector<128x384xf32>, vector<2x384xf32> -> vector<2x384xf32>
    %79 = vector.extract_strided_slice %77 {offsets = [0, 0], sizes = [2, 128], strides = [1, 1]} : vector<2x384xf32> to vector<2x128xf32>
    %80 = vector.extract_strided_slice %78 {offsets = [0, 0], sizes = [2, 128], strides = [1, 1]} : vector<2x384xf32> to vector<2x128xf32>
    %81 = arith.addf %79, %80 : vector<2x128xf32>
    %82 = arith.negf %81 : vector<2x128xf32>
    %83 = math.exp %82 : vector<2x128xf32>
    %cst_22 = arith.constant 1.000000e+00 : f32
    %84 = vector.broadcast %cst_22 : f32 to vector<2x128xf32>
    %85 = arith.addf %84, %83 : vector<2x128xf32>
    %86 = arith.divf %84, %85 : vector<2x128xf32>
    %87 = vector.extract_strided_slice %77 {offsets = [0, 128], sizes = [2, 128], strides = [1, 1]} : vector<2x384xf32> to vector<2x128xf32>
    %88 = vector.extract_strided_slice %78 {offsets = [0, 128], sizes = [2, 128], strides = [1, 1]} : vector<2x384xf32> to vector<2x128xf32>
    %89 = arith.addf %87, %88 : vector<2x128xf32>
    %90 = arith.negf %89 : vector<2x128xf32>
    %91 = math.exp %90 : vector<2x128xf32>
    %cst_23 = arith.constant 1.000000e+00 : f32
    %92 = vector.broadcast %cst_23 : f32 to vector<2x128xf32>
    %93 = arith.addf %92, %91 : vector<2x128xf32>
    %94 = arith.divf %92, %93 : vector<2x128xf32>
    %95 = vector.extract_strided_slice %77 {offsets = [0, 256], sizes = [2, 128], strides = [1, 1]} : vector<2x384xf32> to vector<2x128xf32>
    %96 = vector.extract_strided_slice %78 {offsets = [0, 256], sizes = [2, 128], strides = [1, 1]} : vector<2x384xf32> to vector<2x128xf32>
    %97 = vector.broadcast %1 : vector<1x128xf32> to vector<2x128xf32>
    %98 = arith.addf %96, %97 : vector<2x128xf32>
    %99 = arith.mulf %86, %98 : vector<2x128xf32>
    %100 = arith.addf %95, %99 : vector<2x128xf32>
    %101 = math.tanh %100 : vector<2x128xf32>
    %cst_24 = arith.constant 1.000000e+00 : f32
    %102 = vector.broadcast %cst_24 : f32 to vector<2x128xf32>
    %103 = arith.subf %102, %94 : vector<2x128xf32>
    %104 = arith.mulf %103, %101 : vector<2x128xf32>
    %105 = arith.mulf %94, %70 : vector<2x128xf32>
    %106 = arith.addf %104, %105 : vector<2x128xf32>
    %107 = arith.index_cast %c2_i32 : i32 to index
    %c0_25 = arith.constant 0 : index
    %c0_26 = arith.constant 0 : index
    %108 = vector.load %arg3[%107, %c0_25, %c0_26] : memref<8x2x128xf32, #tpu.memory_space<vmem>>, vector<1x2x128xf32>
    %109 = vector.shape_cast %108 : vector<1x2x128xf32> to vector<2x128xf32>
    %110 = vector.shape_cast %106 : vector<2x128xf32> to vector<1x2x128xf32>
    tpu.vector_store %arg3[%107, %c0_25, %c0_26], %110 {strides = array<i32>} : memref<8x2x128xf32, #tpu.memory_space<vmem>>, vector<1x2x128xf32>,
    %c3_i32 = arith.constant 3 : i32
    %111 = arith.index_cast %c3_i32 : i32 to index
    %c0_27 = arith.constant 0 : index
    %c0_28 = arith.constant 0 : index
    %112 = vector.load %arg0[%111, %c0_27, %c0_28] : memref<8x2x384xf32, #tpu.memory_space<vmem>>, vector<1x2x384xf32>
    %113 = vector.shape_cast %112 : vector<1x2x384xf32> to vector<2x384xf32>
    %cst_29 = arith.constant dense<0.000000e+00> : vector<2x384xf32>
    %114 = tpu.matmul %106, %0, %cst_29 {dimension_numbers = #tpu.dot_dimension_numbers<[1], [0], [0], [1], [0, 0, 1, 1], [], []>} : vector<2x128xf32>, vector<128x384xf32>, vector<2x384xf32> -> vector<2x384xf32>
    %115 = vector.extract_strided_slice %113 {offsets = [0, 0], sizes = [2, 128], strides = [1, 1]} : vector<2x384xf32> to vector<2x128xf32>
    %116 = vector.extract_strided_slice %114 {offsets = [0, 0], sizes = [2, 128], strides = [1, 1]} : vector<2x384xf32> to vector<2x128xf32>
    %117 = arith.addf %115, %116 : vector<2x128xf32>
    %118 = arith.negf %117 : vector<2x128xf32>
    %119 = math.exp %118 : vector<2x128xf32>
    %cst_30 = arith.constant 1.000000e+00 : f32
    %120 = vector.broadcast %cst_30 : f32 to vector<2x128xf32>
    %121 = arith.addf %120, %119 : vector<2x128xf32>
    %122 = arith.divf %120, %121 : vector<2x128xf32>
    %123 = vector.extract_strided_slice %113 {offsets = [0, 128], sizes = [2, 128], strides = [1, 1]} : vector<2x384xf32> to vector<2x128xf32>
    %124 = vector.extract_strided_slice %114 {offsets = [0, 128], sizes = [2, 128], strides = [1, 1]} : vector<2x384xf32> to vector<2x128xf32>
    %125 = arith.addf %123, %124 : vector<2x128xf32>
    %126 = arith.negf %125 : vector<2x128xf32>
    %127 = math.exp %126 : vector<2x128xf32>
    %cst_31 = arith.constant 1.000000e+00 : f32
    %128 = vector.broadcast %cst_31 : f32 to vector<2x128xf32>
    %129 = arith.addf %128, %127 : vector<2x128xf32>
    %130 = arith.divf %128, %129 : vector<2x128xf32>
    %131 = vector.extract_strided_slice %113 {offsets = [0, 256], sizes = [2, 128], strides = [1, 1]} : vector<2x384xf32> to vector<2x128xf32>
    %132 = vector.extract_strided_slice %114 {offsets = [0, 256], sizes = [2, 128], strides = [1, 1]} : vector<2x384xf32> to vector<2x128xf32>
    %133 = vector.broadcast %1 : vector<1x128xf32> to vector<2x128xf32>
    %134 = arith.addf %132, %133 : vector<2x128xf32>
    %135 = arith.mulf %122, %134 : vector<2x128xf32>
    %136 = arith.addf %131, %135 : vector<2x128xf32>
    %137 = math.tanh %136 : vector<2x128xf32>
    %cst_32 = arith.constant 1.000000e+00 : f32
    %138 = vector.broadcast %cst_32 : f32 to vector<2x128xf32>
    %139 = arith.subf %138, %130 : vector<2x128xf32>
    %140 = arith.mulf %139, %137 : vector<2x128xf32>
    %141 = arith.mulf %130, %106 : vector<2x128xf32>
    %142 = arith.addf %140, %141 : vector<2x128xf32>
    %143 = arith.index_cast %c3_i32 : i32 to index
    %c0_33 = arith.constant 0 : index
    %c0_34 = arith.constant 0 : index
    %144 = vector.load %arg3[%143, %c0_33, %c0_34] : memref<8x2x128xf32, #tpu.memory_space<vmem>>, vector<1x2x128xf32>
    %145 = vector.shape_cast %144 : vector<1x2x128xf32> to vector<2x128xf32>
    %146 = vector.shape_cast %142 : vector<2x128xf32> to vector<1x2x128xf32>
    tpu.vector_store %arg3[%143, %c0_33, %c0_34], %146 {strides = array<i32>} : memref<8x2x128xf32, #tpu.memory_space<vmem>>, vector<1x2x128xf32>,
    %c4_i32 = arith.constant 4 : i32
    %147 = arith.index_cast %c4_i32 : i32 to index
    %c0_35 = arith.constant 0 : index
    %c0_36 = arith.constant 0 : index
    %148 = vector.load %arg0[%147, %c0_35, %c0_36] : memref<8x2x384xf32, #tpu.memory_space<vmem>>, vector<1x2x384xf32>
    %149 = vector.shape_cast %148 : vector<1x2x384xf32> to vector<2x384xf32>
    %cst_37 = arith.constant dense<0.000000e+00> : vector<2x384xf32>
    %150 = tpu.matmul %142, %0, %cst_37 {dimension_numbers = #tpu.dot_dimension_numbers<[1], [0], [0], [1], [0, 0, 1, 1], [], []>} : vector<2x128xf32>, vector<128x384xf32>, vector<2x384xf32> -> vector<2x384xf32>
    %151 = vector.extract_strided_slice %149 {offsets = [0, 0], sizes = [2, 128], strides = [1, 1]} : vector<2x384xf32> to vector<2x128xf32>
    %152 = vector.extract_strided_slice %150 {offsets = [0, 0], sizes = [2, 128], strides = [1, 1]} : vector<2x384xf32> to vector<2x128xf32>
    %153 = arith.addf %151, %152 : vector<2x128xf32>
    %154 = arith.negf %153 : vector<2x128xf32>
    %155 = math.exp %154 : vector<2x128xf32>
    %cst_38 = arith.constant 1.000000e+00 : f32
    %156 = vector.broadcast %cst_38 : f32 to vector<2x128xf32>
    %157 = arith.addf %156, %155 : vector<2x128xf32>
    %158 = arith.divf %156, %157 : vector<2x128xf32>
    %159 = vector.extract_strided_slice %149 {offsets = [0, 128], sizes = [2, 128], strides = [1, 1]} : vector<2x384xf32> to vector<2x128xf32>
    %160 = vector.extract_strided_slice %150 {offsets = [0, 128], sizes = [2, 128], strides = [1, 1]} : vector<2x384xf32> to vector<2x128xf32>
    %161 = arith.addf %159, %160 : vector<2x128xf32>
    %162 = arith.negf %161 : vector<2x128xf32>
    %163 = math.exp %162 : vector<2x128xf32>
    %cst_39 = arith.constant 1.000000e+00 : f32
    %164 = vector.broadcast %cst_39 : f32 to vector<2x128xf32>
    %165 = arith.addf %164, %163 : vector<2x128xf32>
    %166 = arith.divf %164, %165 : vector<2x128xf32>
    %167 = vector.extract_strided_slice %149 {offsets = [0, 256], sizes = [2, 128], strides = [1, 1]} : vector<2x384xf32> to vector<2x128xf32>
    %168 = vector.extract_strided_slice %150 {offsets = [0, 256], sizes = [2, 128], strides = [1, 1]} : vector<2x384xf32> to vector<2x128xf32>
    %169 = vector.broadcast %1 : vector<1x128xf32> to vector<2x128xf32>
    %170 = arith.addf %168, %169 : vector<2x128xf32>
    %171 = arith.mulf %158, %170 : vector<2x128xf32>
    %172 = arith.addf %167, %171 : vector<2x128xf32>
    %173 = math.tanh %172 : vector<2x128xf32>
    %cst_40 = arith.constant 1.000000e+00 : f32
    %174 = vector.broadcast %cst_40 : f32 to vector<2x128xf32>
    %175 = arith.subf %174, %166 : vector<2x128xf32>
    %176 = arith.mulf %175, %173 : vector<2x128xf32>
    %177 = arith.mulf %166, %142 : vector<2x128xf32>
    %178 = arith.addf %176, %177 : vector<2x128xf32>
    %179 = arith.index_cast %c4_i32 : i32 to index
    %c0_41 = arith.constant 0 : index
    %c0_42 = arith.constant 0 : index
    %180 = vector.load %arg3[%179, %c0_41, %c0_42] : memref<8x2x128xf32, #tpu.memory_space<vmem>>, vector<1x2x128xf32>
    %181 = vector.shape_cast %180 : vector<1x2x128xf32> to vector<2x128xf32>
    %182 = vector.shape_cast %178 : vector<2x128xf32> to vector<1x2x128xf32>
    tpu.vector_store %arg3[%179, %c0_41, %c0_42], %182 {strides = array<i32>} : memref<8x2x128xf32, #tpu.memory_space<vmem>>, vector<1x2x128xf32>,
    %c5_i32 = arith.constant 5 : i32
    %183 = arith.index_cast %c5_i32 : i32 to index
    %c0_43 = arith.constant 0 : index
    %c0_44 = arith.constant 0 : index
    %184 = vector.load %arg0[%183, %c0_43, %c0_44] : memref<8x2x384xf32, #tpu.memory_space<vmem>>, vector<1x2x384xf32>
    %185 = vector.shape_cast %184 : vector<1x2x384xf32> to vector<2x384xf32>
    %cst_45 = arith.constant dense<0.000000e+00> : vector<2x384xf32>
    %186 = tpu.matmul %178, %0, %cst_45 {dimension_numbers = #tpu.dot_dimension_numbers<[1], [0], [0], [1], [0, 0, 1, 1], [], []>} : vector<2x128xf32>, vector<128x384xf32>, vector<2x384xf32> -> vector<2x384xf32>
    %187 = vector.extract_strided_slice %185 {offsets = [0, 0], sizes = [2, 128], strides = [1, 1]} : vector<2x384xf32> to vector<2x128xf32>
    %188 = vector.extract_strided_slice %186 {offsets = [0, 0], sizes = [2, 128], strides = [1, 1]} : vector<2x384xf32> to vector<2x128xf32>
    %189 = arith.addf %187, %188 : vector<2x128xf32>
    %190 = arith.negf %189 : vector<2x128xf32>
    %191 = math.exp %190 : vector<2x128xf32>
    %cst_46 = arith.constant 1.000000e+00 : f32
    %192 = vector.broadcast %cst_46 : f32 to vector<2x128xf32>
    %193 = arith.addf %192, %191 : vector<2x128xf32>
    %194 = arith.divf %192, %193 : vector<2x128xf32>
    %195 = vector.extract_strided_slice %185 {offsets = [0, 128], sizes = [2, 128], strides = [1, 1]} : vector<2x384xf32> to vector<2x128xf32>
    %196 = vector.extract_strided_slice %186 {offsets = [0, 128], sizes = [2, 128], strides = [1, 1]} : vector<2x384xf32> to vector<2x128xf32>
    %197 = arith.addf %195, %196 : vector<2x128xf32>
    %198 = arith.negf %197 : vector<2x128xf32>
    %199 = math.exp %198 : vector<2x128xf32>
    %cst_47 = arith.constant 1.000000e+00 : f32
    %200 = vector.broadcast %cst_47 : f32 to vector<2x128xf32>
    %201 = arith.addf %200, %199 : vector<2x128xf32>
    %202 = arith.divf %200, %201 : vector<2x128xf32>
    %203 = vector.extract_strided_slice %185 {offsets = [0, 256], sizes = [2, 128], strides = [1, 1]} : vector<2x384xf32> to vector<2x128xf32>
    %204 = vector.extract_strided_slice %186 {offsets = [0, 256], sizes = [2, 128], strides = [1, 1]} : vector<2x384xf32> to vector<2x128xf32>
    %205 = vector.broadcast %1 : vector<1x128xf32> to vector<2x128xf32>
    %206 = arith.addf %204, %205 : vector<2x128xf32>
    %207 = arith.mulf %194, %206 : vector<2x128xf32>
    %208 = arith.addf %203, %207 : vector<2x128xf32>
    %209 = math.tanh %208 : vector<2x128xf32>
    %cst_48 = arith.constant 1.000000e+00 : f32
    %210 = vector.broadcast %cst_48 : f32 to vector<2x128xf32>
    %211 = arith.subf %210, %202 : vector<2x128xf32>
    %212 = arith.mulf %211, %209 : vector<2x128xf32>
    %213 = arith.mulf %202, %178 : vector<2x128xf32>
    %214 = arith.addf %212, %213 : vector<2x128xf32>
    %215 = arith.index_cast %c5_i32 : i32 to index
    %c0_49 = arith.constant 0 : index
    %c0_50 = arith.constant 0 : index
    %216 = vector.load %arg3[%215, %c0_49, %c0_50] : memref<8x2x128xf32, #tpu.memory_space<vmem>>, vector<1x2x128xf32>
    %217 = vector.shape_cast %216 : vector<1x2x128xf32> to vector<2x128xf32>
    %218 = vector.shape_cast %214 : vector<2x128xf32> to vector<1x2x128xf32>
    tpu.vector_store %arg3[%215, %c0_49, %c0_50], %218 {strides = array<i32>} : memref<8x2x128xf32, #tpu.memory_space<vmem>>, vector<1x2x128xf32>,
    %c6_i32 = arith.constant 6 : i32
    %219 = arith.index_cast %c6_i32 : i32 to index
    %c0_51 = arith.constant 0 : index
    %c0_52 = arith.constant 0 : index
    %220 = vector.load %arg0[%219, %c0_51, %c0_52] : memref<8x2x384xf32, #tpu.memory_space<vmem>>, vector<1x2x384xf32>
    %221 = vector.shape_cast %220 : vector<1x2x384xf32> to vector<2x384xf32>
    %cst_53 = arith.constant dense<0.000000e+00> : vector<2x384xf32>
    %222 = tpu.matmul %214, %0, %cst_53 {dimension_numbers = #tpu.dot_dimension_numbers<[1], [0], [0], [1], [0, 0, 1, 1], [], []>} : vector<2x128xf32>, vector<128x384xf32>, vector<2x384xf32> -> vector<2x384xf32>
    %223 = vector.extract_strided_slice %221 {offsets = [0, 0], sizes = [2, 128], strides = [1, 1]} : vector<2x384xf32> to vector<2x128xf32>
    %224 = vector.extract_strided_slice %222 {offsets = [0, 0], sizes = [2, 128], strides = [1, 1]} : vector<2x384xf32> to vector<2x128xf32>
    %225 = arith.addf %223, %224 : vector<2x128xf32>
    %226 = arith.negf %225 : vector<2x128xf32>
    %227 = math.exp %226 : vector<2x128xf32>
    %cst_54 = arith.constant 1.000000e+00 : f32
    %228 = vector.broadcast %cst_54 : f32 to vector<2x128xf32>
    %229 = arith.addf %228, %227 : vector<2x128xf32>
    %230 = arith.divf %228, %229 : vector<2x128xf32>
    %231 = vector.extract_strided_slice %221 {offsets = [0, 128], sizes = [2, 128], strides = [1, 1]} : vector<2x384xf32> to vector<2x128xf32>
    %232 = vector.extract_strided_slice %222 {offsets = [0, 128], sizes = [2, 128], strides = [1, 1]} : vector<2x384xf32> to vector<2x128xf32>
    %233 = arith.addf %231, %232 : vector<2x128xf32>
    %234 = arith.negf %233 : vector<2x128xf32>
    %235 = math.exp %234 : vector<2x128xf32>
    %cst_55 = arith.constant 1.000000e+00 : f32
    %236 = vector.broadcast %cst_55 : f32 to vector<2x128xf32>
    %237 = arith.addf %236, %235 : vector<2x128xf32>
    %238 = arith.divf %236, %237 : vector<2x128xf32>
    %239 = vector.extract_strided_slice %221 {offsets = [0, 256], sizes = [2, 128], strides = [1, 1]} : vector<2x384xf32> to vector<2x128xf32>
    %240 = vector.extract_strided_slice %222 {offsets = [0, 256], sizes = [2, 128], strides = [1, 1]} : vector<2x384xf32> to vector<2x128xf32>
    %241 = vector.broadcast %1 : vector<1x128xf32> to vector<2x128xf32>
    %242 = arith.addf %240, %241 : vector<2x128xf32>
    %243 = arith.mulf %230, %242 : vector<2x128xf32>
    %244 = arith.addf %239, %243 : vector<2x128xf32>
    %245 = math.tanh %244 : vector<2x128xf32>
    %cst_56 = arith.constant 1.000000e+00 : f32
    %246 = vector.broadcast %cst_56 : f32 to vector<2x128xf32>
    %247 = arith.subf %246, %238 : vector<2x128xf32>
    %248 = arith.mulf %247, %245 : vector<2x128xf32>
    %249 = arith.mulf %238, %214 : vector<2x128xf32>
    %250 = arith.addf %248, %249 : vector<2x128xf32>
    %251 = arith.index_cast %c6_i32 : i32 to index
    %c0_57 = arith.constant 0 : index
    %c0_58 = arith.constant 0 : index
    %252 = vector.load %arg3[%251, %c0_57, %c0_58] : memref<8x2x128xf32, #tpu.memory_space<vmem>>, vector<1x2x128xf32>
    %253 = vector.shape_cast %252 : vector<1x2x128xf32> to vector<2x128xf32>
    %254 = vector.shape_cast %250 : vector<2x128xf32> to vector<1x2x128xf32>
    tpu.vector_store %arg3[%251, %c0_57, %c0_58], %254 {strides = array<i32>} : memref<8x2x128xf32, #tpu.memory_space<vmem>>, vector<1x2x128xf32>,
    %c7_i32 = arith.constant 7 : i32
    %255 = arith.index_cast %c7_i32 : i32 to index
    %c0_59 = arith.constant 0 : index
    %c0_60 = arith.constant 0 : index
    %256 = vector.load %arg0[%255, %c0_59, %c0_60] : memref<8x2x384xf32, #tpu.memory_space<vmem>>, vector<1x2x384xf32>
    %257 = vector.shape_cast %256 : vector<1x2x384xf32> to vector<2x384xf32>
    %cst_61 = arith.constant dense<0.000000e+00> : vector<2x384xf32>
    %258 = tpu.matmul %250, %0, %cst_61 {dimension_numbers = #tpu.dot_dimension_numbers<[1], [0], [0], [1], [0, 0, 1, 1], [], []>} : vector<2x128xf32>, vector<128x384xf32>, vector<2x384xf32> -> vector<2x384xf32>
    %259 = vector.extract_strided_slice %257 {offsets = [0, 0], sizes = [2, 128], strides = [1, 1]} : vector<2x384xf32> to vector<2x128xf32>
    %260 = vector.extract_strided_slice %258 {offsets = [0, 0], sizes = [2, 128], strides = [1, 1]} : vector<2x384xf32> to vector<2x128xf32>
    %261 = arith.addf %259, %260 : vector<2x128xf32>
    %262 = arith.negf %261 : vector<2x128xf32>
    %263 = math.exp %262 : vector<2x128xf32>
    %cst_62 = arith.constant 1.000000e+00 : f32
    %264 = vector.broadcast %cst_62 : f32 to vector<2x128xf32>
    %265 = arith.addf %264, %263 : vector<2x128xf32>
    %266 = arith.divf %264, %265 : vector<2x128xf32>
    %267 = vector.extract_strided_slice %257 {offsets = [0, 128], sizes = [2, 128], strides = [1, 1]} : vector<2x384xf32> to vector<2x128xf32>
    %268 = vector.extract_strided_slice %258 {offsets = [0, 128], sizes = [2, 128], strides = [1, 1]} : vector<2x384xf32> to vector<2x128xf32>
    %269 = arith.addf %267, %268 : vector<2x128xf32>
    %270 = arith.negf %269 : vector<2x128xf32>
    %271 = math.exp %270 : vector<2x128xf32>
    %cst_63 = arith.constant 1.000000e+00 : f32
    %272 = vector.broadcast %cst_63 : f32 to vector<2x128xf32>
    %273 = arith.addf %272, %271 : vector<2x128xf32>
    %274 = arith.divf %272, %273 : vector<2x128xf32>
    %275 = vector.extract_strided_slice %257 {offsets = [0, 256], sizes = [2, 128], strides = [1, 1]} : vector<2x384xf32> to vector<2x128xf32>
    %276 = vector.extract_strided_slice %258 {offsets = [0, 256], sizes = [2, 128], strides = [1, 1]} : vector<2x384xf32> to vector<2x128xf32>
    %277 = vector.broadcast %1 : vector<1x128xf32> to vector<2x128xf32>
    %278 = arith.addf %276, %277 : vector<2x128xf32>
    %279 = arith.mulf %266, %278 : vector<2x128xf32>
    %280 = arith.addf %275, %279 : vector<2x128xf32>
    %281 = math.tanh %280 : vector<2x128xf32>
    %cst_64 = arith.constant 1.000000e+00 : f32
    %282 = vector.broadcast %cst_64 : f32 to vector<2x128xf32>
    %283 = arith.subf %282, %274 : vector<2x128xf32>
    %284 = arith.mulf %283, %281 : vector<2x128xf32>
    %285 = arith.mulf %274, %250 : vector<2x128xf32>
    %286 = arith.addf %284, %285 : vector<2x128xf32>
    %287 = arith.index_cast %c7_i32 : i32 to index
    %c0_65 = arith.constant 0 : index
    %c0_66 = arith.constant 0 : index
    %288 = vector.load %arg3[%287, %c0_65, %c0_66] : memref<8x2x128xf32, #tpu.memory_space<vmem>>, vector<1x2x128xf32>
    %289 = vector.shape_cast %288 : vector<1x2x128xf32> to vector<2x128xf32>
    %290 = vector.shape_cast %286 : vector<2x128xf32> to vector<1x2x128xf32>
    tpu.vector_store %arg3[%287, %c0_65, %c0_66], %290 {strides = array<i32>} : memref<8x2x128xf32, #tpu.memory_space<vmem>>, vector<1x2x128xf32>,
    %c8_i32 = arith.constant 8 : i32
    return
  }
}

module attributes {stable_mosaic.version = 11 : i64} {
  func.func @_input_proj_kernel(%arg0: memref<16x16xf32, #tpu.memory_space<vmem>>, %arg1: memref<16x384xf32, #tpu.memory_space<vmem>>, %arg2: memref<1x384xf32, #tpu.memory_space<vmem>>, %arg3: memref<16x384xf32, #tpu.memory_space<vmem>>) attributes {dimension_semantics = [], scalar_prefetch = 0 : i64, scratch_operands = 0 : i64, tpu.core_type = #tpu.core_type<tc>} {
    %c0 = arith.constant 0 : index
    %c0_0 = arith.constant 0 : index
    %0 = vector.load %arg0[%c0, %c0_0] : memref<16x16xf32, #tpu.memory_space<vmem>>, vector<16x16xf32>
    %c0_1 = arith.constant 0 : index
    %c0_2 = arith.constant 0 : index
    %1 = vector.load %arg1[%c0_1, %c0_2] : memref<16x384xf32, #tpu.memory_space<vmem>>, vector<16x384xf32>
    %cst = arith.constant dense<0.000000e+00> : vector<16x384xf32>
    %2 = tpu.matmul %0, %1, %cst {dimension_numbers = #tpu.dot_dimension_numbers<[1], [0], [0], [1], [0, 0, 1, 1], [], []>} : vector<16x16xf32>, vector<16x384xf32>, vector<16x384xf32> -> vector<16x384xf32>
    %c0_3 = arith.constant 0 : index
    %c0_4 = arith.constant 0 : index
    %3 = vector.load %arg2[%c0_3, %c0_4] : memref<1x384xf32, #tpu.memory_space<vmem>>, vector<1x384xf32>
    %4 = vector.broadcast %3 : vector<1x384xf32> to vector<16x384xf32>
    %5 = arith.addf %2, %4 : vector<16x384xf32>
    %c0_5 = arith.constant 0 : index
    %c0_6 = arith.constant 0 : index
    %6 = vector.load %arg3[%c0_5, %c0_6] : memref<16x384xf32, #tpu.memory_space<vmem>>, vector<16x384xf32>
    tpu.vector_store %arg3[%c0_5, %c0_6], %5 {strides = array<i32>} : memref<16x384xf32, #tpu.memory_space<vmem>>, vector<16x384xf32>,
    return
  }
}

module attributes {stable_mosaic.version = 11 : i64} {
  func.func @_input_proj_kernel(%arg0: memref<16x128xf32, #tpu.memory_space<vmem>>, %arg1: memref<128x384xf32, #tpu.memory_space<vmem>>, %arg2: memref<1x384xf32, #tpu.memory_space<vmem>>, %arg3: memref<16x384xf32, #tpu.memory_space<vmem>>) attributes {dimension_semantics = [], scalar_prefetch = 0 : i64, scratch_operands = 0 : i64, tpu.core_type = #tpu.core_type<tc>} {
    %c0 = arith.constant 0 : index
    %c0_0 = arith.constant 0 : index
    %0 = vector.load %arg0[%c0, %c0_0] : memref<16x128xf32, #tpu.memory_space<vmem>>, vector<16x128xf32>
    %c0_1 = arith.constant 0 : index
    %c0_2 = arith.constant 0 : index
    %1 = vector.load %arg1[%c0_1, %c0_2] : memref<128x384xf32, #tpu.memory_space<vmem>>, vector<128x384xf32>
    %cst = arith.constant dense<0.000000e+00> : vector<16x384xf32>
    %2 = tpu.matmul %0, %1, %cst {dimension_numbers = #tpu.dot_dimension_numbers<[1], [0], [0], [1], [0, 0, 1, 1], [], []>} : vector<16x128xf32>, vector<128x384xf32>, vector<16x384xf32> -> vector<16x384xf32>
    %c0_3 = arith.constant 0 : index
    %c0_4 = arith.constant 0 : index
    %3 = vector.load %arg2[%c0_3, %c0_4] : memref<1x384xf32, #tpu.memory_space<vmem>>, vector<1x384xf32>
    %4 = vector.broadcast %3 : vector<1x384xf32> to vector<16x384xf32>
    %5 = arith.addf %2, %4 : vector<16x384xf32>
    %c0_5 = arith.constant 0 : index
    %c0_6 = arith.constant 0 : index
    %6 = vector.load %arg3[%c0_5, %c0_6] : memref<16x384xf32, #tpu.memory_space<vmem>>, vector<16x384xf32>
    tpu.vector_store %arg3[%c0_5, %c0_6], %5 {strides = array<i32>} : memref<16x384xf32, #tpu.memory_space<vmem>>, vector<16x384xf32>,
    return
  }
}

module attributes {stable_mosaic.version = 11 : i64} {
  func.func @_gru_last_layer_kernel(%arg0: memref<8x2x384xf32, #tpu.memory_space<vmem>>, %arg1: memref<128x384xf32, #tpu.memory_space<vmem>>, %arg2: memref<1x128xf32, #tpu.memory_space<vmem>>, %arg3: memref<128x8xf32, #tpu.memory_space<vmem>>, %arg4: memref<1x8xf32, #tpu.memory_space<vmem>>, %arg5: memref<2x8xf32, #tpu.memory_space<vmem>>) attributes {dimension_semantics = [], scalar_prefetch = 0 : i64, scratch_operands = 0 : i64, tpu.core_type = #tpu.core_type<tc>} {
    %c0 = arith.constant 0 : index
    %c0_0 = arith.constant 0 : index
    %0 = vector.load %arg1[%c0, %c0_0] : memref<128x384xf32, #tpu.memory_space<vmem>>, vector<128x384xf32>
    %c0_1 = arith.constant 0 : index
    %c0_2 = arith.constant 0 : index
    %1 = vector.load %arg2[%c0_1, %c0_2] : memref<1x128xf32, #tpu.memory_space<vmem>>, vector<1x128xf32>
    %cst = arith.constant 0.000000e+00 : f32
    %2 = vector.broadcast %cst : f32 to vector<2x128xf32>
    %c0_i32 = arith.constant 0 : i32
    %3 = arith.index_cast %c0_i32 : i32 to index
    %c0_3 = arith.constant 0 : index
    %c0_4 = arith.constant 0 : index
    %4 = vector.load %arg0[%3, %c0_3, %c0_4] : memref<8x2x384xf32, #tpu.memory_space<vmem>>, vector<1x2x384xf32>
    %5 = vector.shape_cast %4 : vector<1x2x384xf32> to vector<2x384xf32>
    %cst_5 = arith.constant dense<0.000000e+00> : vector<2x384xf32>
    %6 = tpu.matmul %2, %0, %cst_5 {dimension_numbers = #tpu.dot_dimension_numbers<[1], [0], [0], [1], [0, 0, 1, 1], [], []>} : vector<2x128xf32>, vector<128x384xf32>, vector<2x384xf32> -> vector<2x384xf32>
    %7 = vector.extract_strided_slice %5 {offsets = [0, 0], sizes = [2, 128], strides = [1, 1]} : vector<2x384xf32> to vector<2x128xf32>
    %8 = vector.extract_strided_slice %6 {offsets = [0, 0], sizes = [2, 128], strides = [1, 1]} : vector<2x384xf32> to vector<2x128xf32>
    %9 = arith.addf %7, %8 : vector<2x128xf32>
    %10 = arith.negf %9 : vector<2x128xf32>
    %11 = math.exp %10 : vector<2x128xf32>
    %cst_6 = arith.constant 1.000000e+00 : f32
    %12 = vector.broadcast %cst_6 : f32 to vector<2x128xf32>
    %13 = arith.addf %12, %11 : vector<2x128xf32>
    %14 = arith.divf %12, %13 : vector<2x128xf32>
    %15 = vector.extract_strided_slice %5 {offsets = [0, 128], sizes = [2, 128], strides = [1, 1]} : vector<2x384xf32> to vector<2x128xf32>
    %16 = vector.extract_strided_slice %6 {offsets = [0, 128], sizes = [2, 128], strides = [1, 1]} : vector<2x384xf32> to vector<2x128xf32>
    %17 = arith.addf %15, %16 : vector<2x128xf32>
    %18 = arith.negf %17 : vector<2x128xf32>
    %19 = math.exp %18 : vector<2x128xf32>
    %cst_7 = arith.constant 1.000000e+00 : f32
    %20 = vector.broadcast %cst_7 : f32 to vector<2x128xf32>
    %21 = arith.addf %20, %19 : vector<2x128xf32>
    %22 = arith.divf %20, %21 : vector<2x128xf32>
    %23 = vector.extract_strided_slice %5 {offsets = [0, 256], sizes = [2, 128], strides = [1, 1]} : vector<2x384xf32> to vector<2x128xf32>
    %24 = vector.extract_strided_slice %6 {offsets = [0, 256], sizes = [2, 128], strides = [1, 1]} : vector<2x384xf32> to vector<2x128xf32>
    %25 = vector.broadcast %1 : vector<1x128xf32> to vector<2x128xf32>
    %26 = arith.addf %24, %25 : vector<2x128xf32>
    %27 = arith.mulf %14, %26 : vector<2x128xf32>
    %28 = arith.addf %23, %27 : vector<2x128xf32>
    %29 = math.tanh %28 : vector<2x128xf32>
    %cst_8 = arith.constant 1.000000e+00 : f32
    %30 = vector.broadcast %cst_8 : f32 to vector<2x128xf32>
    %31 = arith.subf %30, %22 : vector<2x128xf32>
    %32 = arith.mulf %31, %29 : vector<2x128xf32>
    %33 = arith.mulf %22, %2 : vector<2x128xf32>
    %34 = arith.addf %32, %33 : vector<2x128xf32>
    %c1_i32 = arith.constant 1 : i32
    %35 = arith.index_cast %c1_i32 : i32 to index
    %c0_9 = arith.constant 0 : index
    %c0_10 = arith.constant 0 : index
    %36 = vector.load %arg0[%35, %c0_9, %c0_10] : memref<8x2x384xf32, #tpu.memory_space<vmem>>, vector<1x2x384xf32>
    %37 = vector.shape_cast %36 : vector<1x2x384xf32> to vector<2x384xf32>
    %cst_11 = arith.constant dense<0.000000e+00> : vector<2x384xf32>
    %38 = tpu.matmul %34, %0, %cst_11 {dimension_numbers = #tpu.dot_dimension_numbers<[1], [0], [0], [1], [0, 0, 1, 1], [], []>} : vector<2x128xf32>, vector<128x384xf32>, vector<2x384xf32> -> vector<2x384xf32>
    %39 = vector.extract_strided_slice %37 {offsets = [0, 0], sizes = [2, 128], strides = [1, 1]} : vector<2x384xf32> to vector<2x128xf32>
    %40 = vector.extract_strided_slice %38 {offsets = [0, 0], sizes = [2, 128], strides = [1, 1]} : vector<2x384xf32> to vector<2x128xf32>
    %41 = arith.addf %39, %40 : vector<2x128xf32>
    %42 = arith.negf %41 : vector<2x128xf32>
    %43 = math.exp %42 : vector<2x128xf32>
    %cst_12 = arith.constant 1.000000e+00 : f32
    %44 = vector.broadcast %cst_12 : f32 to vector<2x128xf32>
    %45 = arith.addf %44, %43 : vector<2x128xf32>
    %46 = arith.divf %44, %45 : vector<2x128xf32>
    %47 = vector.extract_strided_slice %37 {offsets = [0, 128], sizes = [2, 128], strides = [1, 1]} : vector<2x384xf32> to vector<2x128xf32>
    %48 = vector.extract_strided_slice %38 {offsets = [0, 128], sizes = [2, 128], strides = [1, 1]} : vector<2x384xf32> to vector<2x128xf32>
    %49 = arith.addf %47, %48 : vector<2x128xf32>
    %50 = arith.negf %49 : vector<2x128xf32>
    %51 = math.exp %50 : vector<2x128xf32>
    %cst_13 = arith.constant 1.000000e+00 : f32
    %52 = vector.broadcast %cst_13 : f32 to vector<2x128xf32>
    %53 = arith.addf %52, %51 : vector<2x128xf32>
    %54 = arith.divf %52, %53 : vector<2x128xf32>
    %55 = vector.extract_strided_slice %37 {offsets = [0, 256], sizes = [2, 128], strides = [1, 1]} : vector<2x384xf32> to vector<2x128xf32>
    %56 = vector.extract_strided_slice %38 {offsets = [0, 256], sizes = [2, 128], strides = [1, 1]} : vector<2x384xf32> to vector<2x128xf32>
    %57 = vector.broadcast %1 : vector<1x128xf32> to vector<2x128xf32>
    %58 = arith.addf %56, %57 : vector<2x128xf32>
    %59 = arith.mulf %46, %58 : vector<2x128xf32>
    %60 = arith.addf %55, %59 : vector<2x128xf32>
    %61 = math.tanh %60 : vector<2x128xf32>
    %cst_14 = arith.constant 1.000000e+00 : f32
    %62 = vector.broadcast %cst_14 : f32 to vector<2x128xf32>
    %63 = arith.subf %62, %54 : vector<2x128xf32>
    %64 = arith.mulf %63, %61 : vector<2x128xf32>
    %65 = arith.mulf %54, %34 : vector<2x128xf32>
    %66 = arith.addf %64, %65 : vector<2x128xf32>
    %c2_i32 = arith.constant 2 : i32
    %67 = arith.index_cast %c2_i32 : i32 to index
    %c0_15 = arith.constant 0 : index
    %c0_16 = arith.constant 0 : index
    %68 = vector.load %arg0[%67, %c0_15, %c0_16] : memref<8x2x384xf32, #tpu.memory_space<vmem>>, vector<1x2x384xf32>
    %69 = vector.shape_cast %68 : vector<1x2x384xf32> to vector<2x384xf32>
    %cst_17 = arith.constant dense<0.000000e+00> : vector<2x384xf32>
    %70 = tpu.matmul %66, %0, %cst_17 {dimension_numbers = #tpu.dot_dimension_numbers<[1], [0], [0], [1], [0, 0, 1, 1], [], []>} : vector<2x128xf32>, vector<128x384xf32>, vector<2x384xf32> -> vector<2x384xf32>
    %71 = vector.extract_strided_slice %69 {offsets = [0, 0], sizes = [2, 128], strides = [1, 1]} : vector<2x384xf32> to vector<2x128xf32>
    %72 = vector.extract_strided_slice %70 {offsets = [0, 0], sizes = [2, 128], strides = [1, 1]} : vector<2x384xf32> to vector<2x128xf32>
    %73 = arith.addf %71, %72 : vector<2x128xf32>
    %74 = arith.negf %73 : vector<2x128xf32>
    %75 = math.exp %74 : vector<2x128xf32>
    %cst_18 = arith.constant 1.000000e+00 : f32
    %76 = vector.broadcast %cst_18 : f32 to vector<2x128xf32>
    %77 = arith.addf %76, %75 : vector<2x128xf32>
    %78 = arith.divf %76, %77 : vector<2x128xf32>
    %79 = vector.extract_strided_slice %69 {offsets = [0, 128], sizes = [2, 128], strides = [1, 1]} : vector<2x384xf32> to vector<2x128xf32>
    %80 = vector.extract_strided_slice %70 {offsets = [0, 128], sizes = [2, 128], strides = [1, 1]} : vector<2x384xf32> to vector<2x128xf32>
    %81 = arith.addf %79, %80 : vector<2x128xf32>
    %82 = arith.negf %81 : vector<2x128xf32>
    %83 = math.exp %82 : vector<2x128xf32>
    %cst_19 = arith.constant 1.000000e+00 : f32
    %84 = vector.broadcast %cst_19 : f32 to vector<2x128xf32>
    %85 = arith.addf %84, %83 : vector<2x128xf32>
    %86 = arith.divf %84, %85 : vector<2x128xf32>
    %87 = vector.extract_strided_slice %69 {offsets = [0, 256], sizes = [2, 128], strides = [1, 1]} : vector<2x384xf32> to vector<2x128xf32>
    %88 = vector.extract_strided_slice %70 {offsets = [0, 256], sizes = [2, 128], strides = [1, 1]} : vector<2x384xf32> to vector<2x128xf32>
    %89 = vector.broadcast %1 : vector<1x128xf32> to vector<2x128xf32>
    %90 = arith.addf %88, %89 : vector<2x128xf32>
    %91 = arith.mulf %78, %90 : vector<2x128xf32>
    %92 = arith.addf %87, %91 : vector<2x128xf32>
    %93 = math.tanh %92 : vector<2x128xf32>
    %cst_20 = arith.constant 1.000000e+00 : f32
    %94 = vector.broadcast %cst_20 : f32 to vector<2x128xf32>
    %95 = arith.subf %94, %86 : vector<2x128xf32>
    %96 = arith.mulf %95, %93 : vector<2x128xf32>
    %97 = arith.mulf %86, %66 : vector<2x128xf32>
    %98 = arith.addf %96, %97 : vector<2x128xf32>
    %c3_i32 = arith.constant 3 : i32
    %99 = arith.index_cast %c3_i32 : i32 to index
    %c0_21 = arith.constant 0 : index
    %c0_22 = arith.constant 0 : index
    %100 = vector.load %arg0[%99, %c0_21, %c0_22] : memref<8x2x384xf32, #tpu.memory_space<vmem>>, vector<1x2x384xf32>
    %101 = vector.shape_cast %100 : vector<1x2x384xf32> to vector<2x384xf32>
    %cst_23 = arith.constant dense<0.000000e+00> : vector<2x384xf32>
    %102 = tpu.matmul %98, %0, %cst_23 {dimension_numbers = #tpu.dot_dimension_numbers<[1], [0], [0], [1], [0, 0, 1, 1], [], []>} : vector<2x128xf32>, vector<128x384xf32>, vector<2x384xf32> -> vector<2x384xf32>
    %103 = vector.extract_strided_slice %101 {offsets = [0, 0], sizes = [2, 128], strides = [1, 1]} : vector<2x384xf32> to vector<2x128xf32>
    %104 = vector.extract_strided_slice %102 {offsets = [0, 0], sizes = [2, 128], strides = [1, 1]} : vector<2x384xf32> to vector<2x128xf32>
    %105 = arith.addf %103, %104 : vector<2x128xf32>
    %106 = arith.negf %105 : vector<2x128xf32>
    %107 = math.exp %106 : vector<2x128xf32>
    %cst_24 = arith.constant 1.000000e+00 : f32
    %108 = vector.broadcast %cst_24 : f32 to vector<2x128xf32>
    %109 = arith.addf %108, %107 : vector<2x128xf32>
    %110 = arith.divf %108, %109 : vector<2x128xf32>
    %111 = vector.extract_strided_slice %101 {offsets = [0, 128], sizes = [2, 128], strides = [1, 1]} : vector<2x384xf32> to vector<2x128xf32>
    %112 = vector.extract_strided_slice %102 {offsets = [0, 128], sizes = [2, 128], strides = [1, 1]} : vector<2x384xf32> to vector<2x128xf32>
    %113 = arith.addf %111, %112 : vector<2x128xf32>
    %114 = arith.negf %113 : vector<2x128xf32>
    %115 = math.exp %114 : vector<2x128xf32>
    %cst_25 = arith.constant 1.000000e+00 : f32
    %116 = vector.broadcast %cst_25 : f32 to vector<2x128xf32>
    %117 = arith.addf %116, %115 : vector<2x128xf32>
    %118 = arith.divf %116, %117 : vector<2x128xf32>
    %119 = vector.extract_strided_slice %101 {offsets = [0, 256], sizes = [2, 128], strides = [1, 1]} : vector<2x384xf32> to vector<2x128xf32>
    %120 = vector.extract_strided_slice %102 {offsets = [0, 256], sizes = [2, 128], strides = [1, 1]} : vector<2x384xf32> to vector<2x128xf32>
    %121 = vector.broadcast %1 : vector<1x128xf32> to vector<2x128xf32>
    %122 = arith.addf %120, %121 : vector<2x128xf32>
    %123 = arith.mulf %110, %122 : vector<2x128xf32>
    %124 = arith.addf %119, %123 : vector<2x128xf32>
    %125 = math.tanh %124 : vector<2x128xf32>
    %cst_26 = arith.constant 1.000000e+00 : f32
    %126 = vector.broadcast %cst_26 : f32 to vector<2x128xf32>
    %127 = arith.subf %126, %118 : vector<2x128xf32>
    %128 = arith.mulf %127, %125 : vector<2x128xf32>
    %129 = arith.mulf %118, %98 : vector<2x128xf32>
    %130 = arith.addf %128, %129 : vector<2x128xf32>
    %c4_i32 = arith.constant 4 : i32
    %131 = arith.index_cast %c4_i32 : i32 to index
    %c0_27 = arith.constant 0 : index
    %c0_28 = arith.constant 0 : index
    %132 = vector.load %arg0[%131, %c0_27, %c0_28] : memref<8x2x384xf32, #tpu.memory_space<vmem>>, vector<1x2x384xf32>
    %133 = vector.shape_cast %132 : vector<1x2x384xf32> to vector<2x384xf32>
    %cst_29 = arith.constant dense<0.000000e+00> : vector<2x384xf32>
    %134 = tpu.matmul %130, %0, %cst_29 {dimension_numbers = #tpu.dot_dimension_numbers<[1], [0], [0], [1], [0, 0, 1, 1], [], []>} : vector<2x128xf32>, vector<128x384xf32>, vector<2x384xf32> -> vector<2x384xf32>
    %135 = vector.extract_strided_slice %133 {offsets = [0, 0], sizes = [2, 128], strides = [1, 1]} : vector<2x384xf32> to vector<2x128xf32>
    %136 = vector.extract_strided_slice %134 {offsets = [0, 0], sizes = [2, 128], strides = [1, 1]} : vector<2x384xf32> to vector<2x128xf32>
    %137 = arith.addf %135, %136 : vector<2x128xf32>
    %138 = arith.negf %137 : vector<2x128xf32>
    %139 = math.exp %138 : vector<2x128xf32>
    %cst_30 = arith.constant 1.000000e+00 : f32
    %140 = vector.broadcast %cst_30 : f32 to vector<2x128xf32>
    %141 = arith.addf %140, %139 : vector<2x128xf32>
    %142 = arith.divf %140, %141 : vector<2x128xf32>
    %143 = vector.extract_strided_slice %133 {offsets = [0, 128], sizes = [2, 128], strides = [1, 1]} : vector<2x384xf32> to vector<2x128xf32>
    %144 = vector.extract_strided_slice %134 {offsets = [0, 128], sizes = [2, 128], strides = [1, 1]} : vector<2x384xf32> to vector<2x128xf32>
    %145 = arith.addf %143, %144 : vector<2x128xf32>
    %146 = arith.negf %145 : vector<2x128xf32>
    %147 = math.exp %146 : vector<2x128xf32>
    %cst_31 = arith.constant 1.000000e+00 : f32
    %148 = vector.broadcast %cst_31 : f32 to vector<2x128xf32>
    %149 = arith.addf %148, %147 : vector<2x128xf32>
    %150 = arith.divf %148, %149 : vector<2x128xf32>
    %151 = vector.extract_strided_slice %133 {offsets = [0, 256], sizes = [2, 128], strides = [1, 1]} : vector<2x384xf32> to vector<2x128xf32>
    %152 = vector.extract_strided_slice %134 {offsets = [0, 256], sizes = [2, 128], strides = [1, 1]} : vector<2x384xf32> to vector<2x128xf32>
    %153 = vector.broadcast %1 : vector<1x128xf32> to vector<2x128xf32>
    %154 = arith.addf %152, %153 : vector<2x128xf32>
    %155 = arith.mulf %142, %154 : vector<2x128xf32>
    %156 = arith.addf %151, %155 : vector<2x128xf32>
    %157 = math.tanh %156 : vector<2x128xf32>
    %cst_32 = arith.constant 1.000000e+00 : f32
    %158 = vector.broadcast %cst_32 : f32 to vector<2x128xf32>
    %159 = arith.subf %158, %150 : vector<2x128xf32>
    %160 = arith.mulf %159, %157 : vector<2x128xf32>
    %161 = arith.mulf %150, %130 : vector<2x128xf32>
    %162 = arith.addf %160, %161 : vector<2x128xf32>
    %c5_i32 = arith.constant 5 : i32
    %163 = arith.index_cast %c5_i32 : i32 to index
    %c0_33 = arith.constant 0 : index
    %c0_34 = arith.constant 0 : index
    %164 = vector.load %arg0[%163, %c0_33, %c0_34] : memref<8x2x384xf32, #tpu.memory_space<vmem>>, vector<1x2x384xf32>
    %165 = vector.shape_cast %164 : vector<1x2x384xf32> to vector<2x384xf32>
    %cst_35 = arith.constant dense<0.000000e+00> : vector<2x384xf32>
    %166 = tpu.matmul %162, %0, %cst_35 {dimension_numbers = #tpu.dot_dimension_numbers<[1], [0], [0], [1], [0, 0, 1, 1], [], []>} : vector<2x128xf32>, vector<128x384xf32>, vector<2x384xf32> -> vector<2x384xf32>
    %167 = vector.extract_strided_slice %165 {offsets = [0, 0], sizes = [2, 128], strides = [1, 1]} : vector<2x384xf32> to vector<2x128xf32>
    %168 = vector.extract_strided_slice %166 {offsets = [0, 0], sizes = [2, 128], strides = [1, 1]} : vector<2x384xf32> to vector<2x128xf32>
    %169 = arith.addf %167, %168 : vector<2x128xf32>
    %170 = arith.negf %169 : vector<2x128xf32>
    %171 = math.exp %170 : vector<2x128xf32>
    %cst_36 = arith.constant 1.000000e+00 : f32
    %172 = vector.broadcast %cst_36 : f32 to vector<2x128xf32>
    %173 = arith.addf %172, %171 : vector<2x128xf32>
    %174 = arith.divf %172, %173 : vector<2x128xf32>
    %175 = vector.extract_strided_slice %165 {offsets = [0, 128], sizes = [2, 128], strides = [1, 1]} : vector<2x384xf32> to vector<2x128xf32>
    %176 = vector.extract_strided_slice %166 {offsets = [0, 128], sizes = [2, 128], strides = [1, 1]} : vector<2x384xf32> to vector<2x128xf32>
    %177 = arith.addf %175, %176 : vector<2x128xf32>
    %178 = arith.negf %177 : vector<2x128xf32>
    %179 = math.exp %178 : vector<2x128xf32>
    %cst_37 = arith.constant 1.000000e+00 : f32
    %180 = vector.broadcast %cst_37 : f32 to vector<2x128xf32>
    %181 = arith.addf %180, %179 : vector<2x128xf32>
    %182 = arith.divf %180, %181 : vector<2x128xf32>
    %183 = vector.extract_strided_slice %165 {offsets = [0, 256], sizes = [2, 128], strides = [1, 1]} : vector<2x384xf32> to vector<2x128xf32>
    %184 = vector.extract_strided_slice %166 {offsets = [0, 256], sizes = [2, 128], strides = [1, 1]} : vector<2x384xf32> to vector<2x128xf32>
    %185 = vector.broadcast %1 : vector<1x128xf32> to vector<2x128xf32>
    %186 = arith.addf %184, %185 : vector<2x128xf32>
    %187 = arith.mulf %174, %186 : vector<2x128xf32>
    %188 = arith.addf %183, %187 : vector<2x128xf32>
    %189 = math.tanh %188 : vector<2x128xf32>
    %cst_38 = arith.constant 1.000000e+00 : f32
    %190 = vector.broadcast %cst_38 : f32 to vector<2x128xf32>
    %191 = arith.subf %190, %182 : vector<2x128xf32>
    %192 = arith.mulf %191, %189 : vector<2x128xf32>
    %193 = arith.mulf %182, %162 : vector<2x128xf32>
    %194 = arith.addf %192, %193 : vector<2x128xf32>
    %c6_i32 = arith.constant 6 : i32
    %195 = arith.index_cast %c6_i32 : i32 to index
    %c0_39 = arith.constant 0 : index
    %c0_40 = arith.constant 0 : index
    %196 = vector.load %arg0[%195, %c0_39, %c0_40] : memref<8x2x384xf32, #tpu.memory_space<vmem>>, vector<1x2x384xf32>
    %197 = vector.shape_cast %196 : vector<1x2x384xf32> to vector<2x384xf32>
    %cst_41 = arith.constant dense<0.000000e+00> : vector<2x384xf32>
    %198 = tpu.matmul %194, %0, %cst_41 {dimension_numbers = #tpu.dot_dimension_numbers<[1], [0], [0], [1], [0, 0, 1, 1], [], []>} : vector<2x128xf32>, vector<128x384xf32>, vector<2x384xf32> -> vector<2x384xf32>
    %199 = vector.extract_strided_slice %197 {offsets = [0, 0], sizes = [2, 128], strides = [1, 1]} : vector<2x384xf32> to vector<2x128xf32>
    %200 = vector.extract_strided_slice %198 {offsets = [0, 0], sizes = [2, 128], strides = [1, 1]} : vector<2x384xf32> to vector<2x128xf32>
    %201 = arith.addf %199, %200 : vector<2x128xf32>
    %202 = arith.negf %201 : vector<2x128xf32>
    %203 = math.exp %202 : vector<2x128xf32>
    %cst_42 = arith.constant 1.000000e+00 : f32
    %204 = vector.broadcast %cst_42 : f32 to vector<2x128xf32>
    %205 = arith.addf %204, %203 : vector<2x128xf32>
    %206 = arith.divf %204, %205 : vector<2x128xf32>
    %207 = vector.extract_strided_slice %197 {offsets = [0, 128], sizes = [2, 128], strides = [1, 1]} : vector<2x384xf32> to vector<2x128xf32>
    %208 = vector.extract_strided_slice %198 {offsets = [0, 128], sizes = [2, 128], strides = [1, 1]} : vector<2x384xf32> to vector<2x128xf32>
    %209 = arith.addf %207, %208 : vector<2x128xf32>
    %210 = arith.negf %209 : vector<2x128xf32>
    %211 = math.exp %210 : vector<2x128xf32>
    %cst_43 = arith.constant 1.000000e+00 : f32
    %212 = vector.broadcast %cst_43 : f32 to vector<2x128xf32>
    %213 = arith.addf %212, %211 : vector<2x128xf32>
    %214 = arith.divf %212, %213 : vector<2x128xf32>
    %215 = vector.extract_strided_slice %197 {offsets = [0, 256], sizes = [2, 128], strides = [1, 1]} : vector<2x384xf32> to vector<2x128xf32>
    %216 = vector.extract_strided_slice %198 {offsets = [0, 256], sizes = [2, 128], strides = [1, 1]} : vector<2x384xf32> to vector<2x128xf32>
    %217 = vector.broadcast %1 : vector<1x128xf32> to vector<2x128xf32>
    %218 = arith.addf %216, %217 : vector<2x128xf32>
    %219 = arith.mulf %206, %218 : vector<2x128xf32>
    %220 = arith.addf %215, %219 : vector<2x128xf32>
    %221 = math.tanh %220 : vector<2x128xf32>
    %cst_44 = arith.constant 1.000000e+00 : f32
    %222 = vector.broadcast %cst_44 : f32 to vector<2x128xf32>
    %223 = arith.subf %222, %214 : vector<2x128xf32>
    %224 = arith.mulf %223, %221 : vector<2x128xf32>
    %225 = arith.mulf %214, %194 : vector<2x128xf32>
    %226 = arith.addf %224, %225 : vector<2x128xf32>
    %c7_i32 = arith.constant 7 : i32
    %227 = arith.index_cast %c7_i32 : i32 to index
    %c0_45 = arith.constant 0 : index
    %c0_46 = arith.constant 0 : index
    %228 = vector.load %arg0[%227, %c0_45, %c0_46] : memref<8x2x384xf32, #tpu.memory_space<vmem>>, vector<1x2x384xf32>
    %229 = vector.shape_cast %228 : vector<1x2x384xf32> to vector<2x384xf32>
    %cst_47 = arith.constant dense<0.000000e+00> : vector<2x384xf32>
    %230 = tpu.matmul %226, %0, %cst_47 {dimension_numbers = #tpu.dot_dimension_numbers<[1], [0], [0], [1], [0, 0, 1, 1], [], []>} : vector<2x128xf32>, vector<128x384xf32>, vector<2x384xf32> -> vector<2x384xf32>
    %231 = vector.extract_strided_slice %229 {offsets = [0, 0], sizes = [2, 128], strides = [1, 1]} : vector<2x384xf32> to vector<2x128xf32>
    %232 = vector.extract_strided_slice %230 {offsets = [0, 0], sizes = [2, 128], strides = [1, 1]} : vector<2x384xf32> to vector<2x128xf32>
    %233 = arith.addf %231, %232 : vector<2x128xf32>
    %234 = arith.negf %233 : vector<2x128xf32>
    %235 = math.exp %234 : vector<2x128xf32>
    %cst_48 = arith.constant 1.000000e+00 : f32
    %236 = vector.broadcast %cst_48 : f32 to vector<2x128xf32>
    %237 = arith.addf %236, %235 : vector<2x128xf32>
    %238 = arith.divf %236, %237 : vector<2x128xf32>
    %239 = vector.extract_strided_slice %229 {offsets = [0, 128], sizes = [2, 128], strides = [1, 1]} : vector<2x384xf32> to vector<2x128xf32>
    %240 = vector.extract_strided_slice %230 {offsets = [0, 128], sizes = [2, 128], strides = [1, 1]} : vector<2x384xf32> to vector<2x128xf32>
    %241 = arith.addf %239, %240 : vector<2x128xf32>
    %242 = arith.negf %241 : vector<2x128xf32>
    %243 = math.exp %242 : vector<2x128xf32>
    %cst_49 = arith.constant 1.000000e+00 : f32
    %244 = vector.broadcast %cst_49 : f32 to vector<2x128xf32>
    %245 = arith.addf %244, %243 : vector<2x128xf32>
    %246 = arith.divf %244, %245 : vector<2x128xf32>
    %247 = vector.extract_strided_slice %229 {offsets = [0, 256], sizes = [2, 128], strides = [1, 1]} : vector<2x384xf32> to vector<2x128xf32>
    %248 = vector.extract_strided_slice %230 {offsets = [0, 256], sizes = [2, 128], strides = [1, 1]} : vector<2x384xf32> to vector<2x128xf32>
    %249 = vector.broadcast %1 : vector<1x128xf32> to vector<2x128xf32>
    %250 = arith.addf %248, %249 : vector<2x128xf32>
    %251 = arith.mulf %238, %250 : vector<2x128xf32>
    %252 = arith.addf %247, %251 : vector<2x128xf32>
    %253 = math.tanh %252 : vector<2x128xf32>
    %cst_50 = arith.constant 1.000000e+00 : f32
    %254 = vector.broadcast %cst_50 : f32 to vector<2x128xf32>
    %255 = arith.subf %254, %246 : vector<2x128xf32>
    %256 = arith.mulf %255, %253 : vector<2x128xf32>
    %257 = arith.mulf %246, %226 : vector<2x128xf32>
    %258 = arith.addf %256, %257 : vector<2x128xf32>
    %c8_i32 = arith.constant 8 : i32
    %c0_51 = arith.constant 0 : index
    %c0_52 = arith.constant 0 : index
    %259 = vector.load %arg3[%c0_51, %c0_52] : memref<128x8xf32, #tpu.memory_space<vmem>>, vector<128x8xf32>
    %cst_53 = arith.constant dense<0.000000e+00> : vector<2x8xf32>
    %260 = tpu.matmul %258, %259, %cst_53 {dimension_numbers = #tpu.dot_dimension_numbers<[1], [0], [0], [1], [0, 0, 1, 1], [], []>} : vector<2x128xf32>, vector<128x8xf32>, vector<2x8xf32> -> vector<2x8xf32>
    %c0_54 = arith.constant 0 : index
    %c0_55 = arith.constant 0 : index
    %261 = vector.load %arg4[%c0_54, %c0_55] : memref<1x8xf32, #tpu.memory_space<vmem>>, vector<1x8xf32>
    %262 = vector.broadcast %261 : vector<1x8xf32> to vector<2x8xf32>
    %263 = arith.addf %260, %262 : vector<2x8xf32>
    %cst_56 = arith.constant 0.000000e+00 : f32
    %264 = vector.broadcast %cst_56 : f32 to vector<2x8xf32>
    %265 = arith.maximumf %263, %264 : vector<2x8xf32>
    %cst_57 = arith.constant dense<0xFF800000> : vector<2xf32>
    %266 = vector.multi_reduction <maximumf>, %265, %cst_57 [1] : vector<2x8xf32> to vector<2xf32>
    %267 = vector.shape_cast %266 : vector<2xf32> to vector<2x1xf32>
    %268 = vector.broadcast %267 : vector<2x1xf32> to vector<2x8xf32>
    %269 = arith.subf %265, %268 : vector<2x8xf32>
    %270 = math.exp %269 : vector<2x8xf32>
    %cst_58 = arith.constant dense<0.000000e+00> : vector<2xf32>
    %271 = vector.multi_reduction <add>, %270, %cst_58 [1] : vector<2x8xf32> to vector<2xf32>
    %272 = vector.shape_cast %271 : vector<2xf32> to vector<2x1xf32>
    %273 = tpu.reciprocal %272 {approx = true} : vector<2x1xf32> -> vector<2x1xf32>
    %274 = vector.broadcast %273 : vector<2x1xf32> to vector<2x8xf32>
    %275 = arith.mulf %270, %274 : vector<2x8xf32>
    %c0_59 = arith.constant 0 : index
    %c0_60 = arith.constant 0 : index
    %276 = vector.load %arg5[%c0_59, %c0_60] : memref<2x8xf32, #tpu.memory_space<vmem>>, vector<2x8xf32>
    tpu.vector_store %arg5[%c0_59, %c0_60], %275 {strides = array<i32>} : memref<2x8xf32, #tpu.memory_space<vmem>>, vector<2x8xf32>,
    return
  }
}

</mosaic_0001>

<llo_original>
// kernel: gru_forward.4
$region0: #{gru_forward.4}
  #allocation0 [shape = 'u32[]', space=smem, size = 0x4, offset = 0x4, fixed_abs, tag = 'smem constant byte address 0x4 - core index']
  #allocation1 [shape = 'u32[144,128]{1,0:T(1,128)}', space=vmem, size = 0x12000, scoped, tag = 'internal scratch']
  %s0 = inlined_call_operand.vmem [shape: f32[16,16], index: 0, kind: input, shape index: {}]
  %s1 = inlined_call_operand.hbm [shape: f32[16,384], index: 1, kind: input, shape index: {}]
  %s2 = inlined_call_operand.hbm [shape: f32[1,384], index: 2, kind: input, shape index: {}]
  %s3 = inlined_call_operand.vmem [shape: f32[16,384], index: 3, kind: output, shape index: {}]
  %s4 = sld [smem:[#allocation0]]
  $region30: #{gru_forward.4} parent=0
    _
  %s6 = ssub.s32 1, %s4
  %s7 = scalar_select 0, %s6, %s4
  $region1: #{gru_forward.4} parent=0
    #allocation2 [shape = 'u8[24576]{0}', space=vmem, size = 0x6000, scoped, tag = 'input window, operand 1, single buffered']
    #allocation3 [shape = 's32[1]{0}', space=sflag, size = 0x4, scoped, tag = 'scoped memory for gru_forward.4']
    #allocation4 [shape = 'u8[1536]{0}', space=vmem, size = 0x800, scoped, tag = 'input window, operand 2, single buffered']
    #allocation5 [shape = 's32[1]{0}', space=sflag, size = 0x4, scoped, tag = 'scoped memory for gru_forward.4']
    %8 = vsyncpa [#allocation3], 0
    %9 = vsyncpa [#allocation5], 0
    // Predicated region
    $region2: #{gru_forward.4} parent=1 // pred_check
      _
    $region3: #{gru_forward.4} parent=1 // pred_check_branch
      %11 = sbr.rel (0) target = $region5
    $region4: #{gru_forward.4} parent=1 // pred_region
      _
    $region5: #{gru_forward.4} parent=1 // pred_fallthru
      _
    // Predicated region
    $region6: #{gru_forward.4} parent=1 // pred_check
      _
    $region7: #{gru_forward.4} parent=1 // pred_check_branch
      %13 = sbr.rel (0) target = $region9
    $region8: #{gru_forward.4} parent=1 // pred_region
      %s15 = ssub.s32 768, 768
      %16 = vsyncadd [#allocation3], %s15
      %s17 = sshll.u32 [#allocation2], 4
      %s18 = int_to_ptr.vmem [resolvable:$true] %s17
      %23 = dma.hbm_to_vmem [thread:$0]  %s1, 768, %s18, [#allocation3], 384, 384, 24
    $region9: #{gru_forward.4} parent=1 // pred_fallthru
      _
    // Predicated region
    $region10: #{gru_forward.4} parent=1 // pred_check
      _
    $region11: #{gru_forward.4} parent=1 // pred_check_branch
      %25 = sbr.rel (0) target = $region13
    $region12: #{gru_forward.4} parent=1 // pred_region
      %s27 = ssub.s32 48, 48
      %28 = vsyncadd [#allocation5], %s27
      %s30 = sshll.u32 [#allocation4], 4
      %s31 = int_to_ptr.vmem [resolvable:$true] %s30
      %33 = dma.hbm_to_vmem [thread:$0]  %s2, 48, %s31, [#allocation5]
    $region13: #{gru_forward.4} parent=1 // pred_fallthru
      _
    // Predicated region
    $region14: #{gru_forward.4} parent=1 // pred_check
      _
    $region15: #{gru_forward.4} parent=1 // pred_check_branch
      %35 = sbr.rel (0) target = $region17
    $region16: #{gru_forward.4} parent=1 // pred_region
      %36 = dma.done [#allocation3], 768
    $region17: #{gru_forward.4} parent=1 // pred_fallthru
      _
    // Predicated region
    $region18: #{gru_forward.4} parent=1 // pred_check
      _
    $region19: #{gru_forward.4} parent=1 // pred_check_branch
      %38 = sbr.rel (0) target = $region21
    $region20: #{gru_forward.4} parent=1 // pred_region
      %39 = dma.done [#allocation5], 48
    $region21: #{gru_forward.4} parent=1 // pred_fallthru
      _
    %v40 = vld [vmem:[%s0] sm:$0xff]
    %v41 = vld [vmem:[%s0 + $0x8] sm:$0xff]
    %v42 = vld [vmem:[#allocation2] sm:$0xff]
    %v43 = vld [vmem:[#allocation2 + $0x8] sm:$0xff]
    %v44 = vld [vmem:[#allocation2 + $0x10] sm:$0xff]
    %v45 = vld [vmem:[#allocation2 + $0x18] sm:$0xff]
    %v46 = vld [vmem:[#allocation2 + $0x20] sm:$0xff]
    %v47 = vld [vmem:[#allocation2 + $0x28] sm:$0xff]
    %v48 = vld [vmem:[#allocation4] sm:$0x7]
    %v50 = vlaneseq
    %v51 = vshrl.u32 %v50, 7
    %v52 = vsub.s32 0, %v51
    %v53 = vrot.slane %v48, %v52
    %v54 = vlaneseq
    %v55 = vshrl.u32 %v54, 7
    %v56 = vsub.s32 1, %v55
    %v57 = vrot.slane %v48, %v56
    %v58 = vlaneseq
    %v59 = vshrl.u32 %v58, 7
    %v60 = vsub.s32 2, %v59
    %v61 = vrot.slane %v48, %v60
    %vm65 = vcmask 130048
    %v67 = vsel %vm65, %v40, 0
    %v70 = vsel %vm65, %v41, 0
    %72 = vmatprep.subr.mxu0 %v43
    %73 = vmatpush1.msra.mxu0 %v42
    %74 = vmatprep.subr.mxu0 %v46
    %75 = vmatpush1.msra.mxu0 %v45
    %76 = vmatprep.subr.mxu0 0.0
    %77 = vmatpush1.msra.mxu0 0.0
    %78 = vmatprep.subr.mxu0 0.0
    %79 = vmatpush1.msra.mxu0 0.0
    %80 = vmatprep.subr.mxu0 0.0
    %81 = vmatpush1.msra.mxu0 0.0
    %82 = vmatprep.subr.mxu0 0.0
    %83 = vmatpush1.msra.mxu0 0.0
    %84 = vmatprep.subr.mxu0 0.0
    %85 = vmatpush1.msra.mxu0 0.0
    %86 = vmatprep.subr.mxu0 0.0
    %87 = vmatpush1.msra.mxu0 0.0
    %88 = vmatprep.subr.mxu0 0.0
    %89 = vmatpush1.msra.mxu0 0.0
    %90 = vmatprep.subr.mxu0 0.0
    %91 = vmatpush1.msra.mxu0 0.0
    %92 = vmatprep.subr.mxu0 0.0
    %93 = vmatpush1.msra.mxu0 0.0
    %94 = vmatprep.subr.mxu0 0.0
    %95 = vmatpush1.msra.mxu0 0.0
    %96 = vmatprep.subr.mxu0 0.0
    %97 = vmatpush1.msra.mxu0 0.0
    %98 = vmatprep.subr.mxu0 0.0
    %99 = vmatpush1.msra.mxu0 0.0
    %100 = vmatprep.subr.mxu0 0.0
    %101 = vmatpush1.msra.mxu0 0.0
    %102 = vmatprep.subr.mxu0 0.0
    %103 = vmatpush1.msra.mxu0 0.0
    %104 = vmatprep.subr.mxu0 0.0
    %105 = vmatpush1.msra.mxu0 0.0
    %106 = vmatprep.subr.mxu0 0.0
    %107 = vmatpush1.msra.mxu0 0.0
    %108 = vmatprep.subr.mxu0 0.0
    %109 = vmatpush1.msra.mxu0 0.0
    %110 = vmatprep.subr.mxu0 0.0
    %111 = vmatpush1.msra.mxu0 0.0
    %112 = vmatprep.subr.mxu0 0.0
    %113 = vmatpush1.msra.mxu0 0.0
    %114 = vmatprep.subr.mxu0 0.0
    %115 = vmatpush1.msra.mxu0 0.0
    %116 = vmatprep.subr.mxu0 0.0
    %117 = vmatpush1.msra.mxu0 0.0
    %118 = vmatprep.subr.mxu0 0.0
    %119 = vmatpush1.msra.mxu0 0.0
    %120 = vmatprep.subr.mxu0 0.0
    %121 = vmatpush1.msra.mxu0 0.0
    %122 = vmatprep.subr.mxu0 0.0
    %123 = vmatpush1.msra.mxu0 0.0
    %124 = vmatprep.subr.mxu0 0.0
    %125 = vmatpush1.msra.mxu0 0.0
    %126 = vmatprep.subr.mxu0 0.0
    %127 = vmatpush1.msra.mxu0 0.0
    %128 = vmatprep.subr.mxu0 0.0
    %129 = vmatpush1.msra.mxu0 0.0
    %130 = vmatprep.subr.mxu0 0.0
    %131 = vmatpush1.msra.mxu0 0.0
    %132 = vmatprep.subr.mxu0 0.0
    %133 = vmatpush1.msra.mxu0 0.0
    %134 = vmatprep.subr.mxu0 0.0
    %135 = vmatpush1.msra.mxu0 0.0
    %136 = vmatprep.mubr.f32.mxu0 0.0
    %137 = vmatmul.mubr.f32.gmra.mrb[0].mxu0 %v67
    %v138 = vpop.f32.mrb[0].mxu0
    %v139 = vadd.f32 %v53, %v138
    %v140 = vpop.f32.mrb[0].mxu0
    %v141 = vadd.f32 %v57, %v140
    %142 = vmatprep.mubr.f32.mxu0 0.0
    %143 = vmatmul.mubr.f32.gmra.mrb[0].mxu0 %v70
    %v144 = vpop.f32.mrb[0].mxu0
    %v145 = vadd.f32 %v53, %v144
    %v146 = vpop.f32.mrb[0].mxu0
    %v147 = vadd.f32 %v57, %v146
    %148 = vdwg.mxu0
    %149 = vmatprep.subr.mxu0 0.0
    %150 = vmatpush1.msra.mxu0 %v44
    %151 = vmatprep.subr.mxu0 0.0
    %152 = vmatpush1.msra.mxu0 %v47
    %153 = vmatprep.subr.mxu0 0.0
    %154 = vmatpush1.msra.mxu0 0.0
    %155 = vmatprep.subr.mxu0 0.0
    %156 = vmatpush1.msra.mxu0 0.0
    %157 = vmatprep.subr.mxu0 0.0
    %158 = vmatpush1.msra.mxu0 0.0
    %159 = vmatprep.subr.mxu0 0.0
    %160 = vmatpush1.msra.mxu0 0.0
    %161 = vmatprep.subr.mxu0 0.0
    %162 = vmatpush1.msra.mxu0 0.0
    %163 = vmatprep.subr.mxu0 0.0
    %164 = vmatpush1.msra.mxu0 0.0
    %165 = vmatprep.subr.mxu0 0.0
    %166 = vmatpush1.msra.mxu0 0.0
    %167 = vmatprep.subr.mxu0 0.0
    %168 = vmatpush1.msra.mxu0 0.0
    %169 = vmatprep.subr.mxu0 0.0
    %170 = vmatpush1.msra.mxu0 0.0
    %171 = vmatprep.subr.mxu0 0.0
    %172 = vmatpush1.msra.mxu0 0.0
    %173 = vmatprep.subr.mxu0 0.0
    %174 = vmatpush1.msra.mxu0 0.0
    %175 = vmatprep.subr.mxu0 0.0
    %176 = vmatpush1.msra.mxu0 0.0
    %177 = vmatprep.subr.mxu0 0.0
    %178 = vmatpush1.msra.mxu0 0.0
    %179 = vmatprep.subr.mxu0 0.0
    %180 = vmatpush1.msra.mxu0 0.0
    %181 = vmatprep.subr.mxu0 0.0
    %182 = vmatpush1.msra.mxu0 0.0
    %183 = vmatprep.subr.mxu0 0.0
    %184 = vmatpush1.msra.mxu0 0.0
    %185 = vmatprep.subr.mxu0 0.0
    %186 = vmatpush1.msra.mxu0 0.0
    %187 = vmatprep.subr.mxu0 0.0
    %188 = vmatpush1.msra.mxu0 0.0
    %189 = vmatprep.subr.mxu0 0.0
    %190 = vmatpush1.msra.mxu0 0.0
    %191 = vmatprep.subr.mxu0 0.0
    %192 = vmatpush1.msra.mxu0 0.0
    %193 = vmatprep.subr.mxu0 0.0
    %194 = vmatpush1.msra.mxu0 0.0
    %195 = vmatprep.subr.mxu0 0.0
    %196 = vmatpush1.msra.mxu0 0.0
    %197 = vmatprep.subr.mxu0 0.0
    %198 = vmatpush1.msra.mxu0 0.0
    %199 = vmatprep.subr.mxu0 0.0
    %200 = vmatpush1.msra.mxu0 0.0
    %201 = vmatprep.subr.mxu0 0.0
    %202 = vmatpush1.msra.mxu0 0.0
    %203 = vmatprep.subr.mxu0 0.0
    %204 = vmatpush1.msra.mxu0 0.0
    %205 = vmatprep.subr.mxu0 0.0
    %206 = vmatpush1.msra.mxu0 0.0
    %207 = vmatprep.subr.mxu0 0.0
    %208 = vmatpush1.msra.mxu0 0.0
    %209 = vmatprep.subr.mxu0 0.0
    %210 = vmatpush1.msra.mxu0 0.0
    %211 = vmatprep.subr.mxu0 0.0
    %212 = vmatpush1.msra.mxu0 0.0
    %213 = vmatprep.mubr.f32.mxu0 0.0
    %214 = vmatmul.mubr.f32.gmra.mrb[0].mxu0 %v67
    %v215 = vpop.f32.mrb[0].mxu0
    %v216 = vadd.f32 %v61, %v215
    %v217 = vpop.f32.mrb[0].mxu0
    %218 = vmatprep.mubr.f32.mxu0 0.0
    %219 = vmatmul.mubr.f32.gmra.mrb[0].mxu0 %v70
    %v220 = vpop.f32.mrb[0].mxu0
    %v221 = vadd.f32 %v61, %v220
    %v222 = vpop.f32.mrb[0].mxu0
    %223 = vdwg.mxu0
    %224 = vst [vmem:[%s3] sm:$0xff] %v139
    %225 = vst [vmem:[%s3 + $0x8] sm:$0xff] %v141
    %226 = vst [vmem:[%s3 + $0x10] sm:$0xff] %v216
    %227 = vst [vmem:[%s3 + $0x18] sm:$0xff] %v145
    %228 = vst [vmem:[%s3 + $0x20] sm:$0xff] %v147
    %229 = vst [vmem:[%s3 + $0x28] sm:$0xff] %v221
    // Predicated region
    $region22: #{gru_forward.4} parent=1 // pred_check
      _
    $region23: #{gru_forward.4} parent=1 // pred_check_branch
      %231 = sbr.rel (0) target = $region25
    $region24: #{gru_forward.4} parent=1 // pred_region
      _
    $region25: #{gru_forward.4} parent=1 // pred_fallthru
      _
    // Predicated region
    $region26: #{gru_forward.4} parent=1 // pred_check
      _
    $region27: #{gru_forward.4} parent=1 // pred_check_branch
      %233 = sbr.rel (0) target = $region29
    $region28: #{gru_forward.4} parent=1 // pred_region
      _
    $region29: #{gru_forward.4} parent=1 // pred_fallthru
      _
    %234 = vsyncpa [#allocation3], 1
    %235 = vsyncpa [#allocation5], 1

// kernel: gru_forward.6
$region0: #{gru_forward.6}
  #allocation0 [shape = 'u32[]', space=smem, size = 0x4, offset = 0x4, fixed_abs, tag = 'smem constant byte address 0x4 - core index']
  #allocation1 [shape = 'u32[144,128]{1,0:T(1,128)}', space=vmem, size = 0x12000, scoped, tag = 'internal scratch']
  %s0 = inlined_call_operand.vmem [shape: f32[16,128], index: 0, kind: input, shape index: {}]
  %s1 = inlined_call_operand.vmem [shape: f32[128,384], index: 1, kind: input, shape index: {}]
  %s2 = inlined_call_operand.vmem [shape: f32[1,384], index: 2, kind: input, shape index: {}]
  %s3 = inlined_call_operand.vmem [shape: f32[16,384], index: 3, kind: output, shape index: {}]
  %s4 = sld [smem:[#allocation0]]
  $region22: #{gru_forward.6} parent=0
    _
  %s6 = ssub.s32 1, %s4
  %s7 = scalar_select 0, %s6, %s4
  // Predicated region
  $region2: #{gru_forward.6} parent=0 // pred_check
    _
  $region3: #{gru_forward.6} parent=0 // pred_check_branch
    %9 = sbr.rel (0) target = $region5
  $region4: #{gru_forward.6} parent=0 // pred_region
    _
  $region5: #{gru_forward.6} parent=0 // pred_fallthru
    _
  // Predicated region
  $region6: #{gru_forward.6} parent=0 // pred_check
    _
  $region7: #{gru_forward.6} parent=0 // pred_check_branch
    %11 = sbr.rel (0) target = $region9
  $region8: #{gru_forward.6} parent=0 // pred_region
    _
  $region9: #{gru_forward.6} parent=0 // pred_fallthru
    _
  // Predicated region
  $region10: #{gru_forward.6} parent=0 // pred_check
    _
  $region11: #{gru_forward.6} parent=0 // pred_check_branch
    %13 = sbr.rel (0) target = $region13
  $region12: #{gru_forward.6} parent=0 // pred_region
    _
  $region13: #{gru_forward.6} parent=0 // pred_fallthru
    _
  %v14 = vld [vmem:[%s0] sm:$0xff]
  %v15 = vld [vmem:[%s0 + $0x8] sm:$0xff]
  %v16 = vld [vmem:[%s1] sm:$0xff]
  %v17 = vld [vmem:[%s1 + $0x8] sm:$0xff]
  %v18 = vld [vmem:[%s1 + $0x10] sm:$0xff]
  %v19 = vld [vmem:[%s1 + $0x18] sm:$0xff]
  %v20 = vld [vmem:[%s1 + $0x20] sm:$0xff]
  %v21 = vld [vmem:[%s1 + $0x28] sm:$0xff]
  %v22 = vld [vmem:[%s1 + $0x30] sm:$0xff]
  %v23 = vld [vmem:[%s1 + $0x38] sm:$0xff]
  %v24 = vld [vmem:[%s1 + $0x40] sm:$0xff]
  %v25 = vld [vmem:[%s1 + $0x48] sm:$0xff]
  %v26 = vld [vmem:[%s1 + $0x50] sm:$0xff]
  %v27 = vld [vmem:[%s1 + $0x58] sm:$0xff]
  %v28 = vld [vmem:[%s1 + $0x60] sm:$0xff]
  %v29 = vld [vmem:[%s1 + $0x68] sm:$0xff]
  %v30 = vld [vmem:[%s1 + $0x70] sm:$0xff]
  %v31 = vld [vmem:[%s1 + $0x78] sm:$0xff]
  %v32 = vld [vmem:[%s1 + $0x80] sm:$0xff]
  %v33 = vld [vmem:[%s1 + $0x88] sm:$0xff]
  %v34 = vld [vmem:[%s1 + $0x90] sm:$0xff]
  %v35 = vld [vmem:[%s1 + $0x98] sm:$0xff]
  %v36 = vld [vmem:[%s1 + $0xa0] sm:$0xff]
  %v37 = vld [vmem:[%s1 + $0xa8] sm:$0xff]
  %v38 = vld [vmem:[%s1 + $0xb0] sm:$0xff]
  %v39 = vld [vmem:[%s1 + $0xb8] sm:$0xff]
  %v40 = vld [vmem:[%s1 + $0xc0] sm:$0xff]
  %v41 = vld [vmem:[%s1 + $0xc8] sm:$0xff]
  %v42 = vld [vmem:[%s1 + $0xd0] sm:$0xff]
  %v43 = vld [vmem:[%s1 + $0xd8] sm:$0xff]
  %v44 = vld [vmem:[%s1 + $0xe0] sm:$0xff]
  %v45 = vld [vmem:[%s1 + $0xe8] sm:$0xff]
  %v46 = vld [vmem:[%s1 + $0xf0] sm:$0xff]
  %v47 = vld [vmem:[%s1 + $0xf8] sm:$0xff]
  %v48 = vld [vmem:[%s1 + $0x100] sm:$0xff]
  %v49 = vld [vmem:[%s1 + $0x108] sm:$0xff]
  %v50 = vld [vmem:[%s1 + $0x110] sm:$0xff]
  %v51 = vld [vmem:[%s1 + $0x118] sm:$0xff]
  %v52 = vld [vmem:[%s1 + $0x120] sm:$0xff]
  %v53 = vld [vmem:[%s1 + $0x128] sm:$0xff]
  %v54 = vld [vmem:[%s1 + $0x130] sm:$0xff]
  %v55 = vld [vmem:[%s1 + $0x138] sm:$0xff]
  %v56 = vld [vmem:[%s1 + $0x140] sm:$0xff]
  %v57 = vld [vmem:[%s1 + $0x148] sm:$0xff]
  %v58 = vld [vmem:[%s1 + $0x150] sm:$0xff]
  %v59 = vld [vmem:[%s1 + $0x158] sm:$0xff]
  %v60 = vld [vmem:[%s1 + $0x160] sm:$0xff]
  %v61 = vld [vmem:[%s1 + $0x168] sm:$0xff]
  %v62 = vld [vmem:[%s1 + $0x170] sm:$0xff]
  %v63 = vld [vmem:[%s1 + $0x178] sm:$0xff]
  %v64 = vld [vmem:[%s2] sm:$0x7]
  %v66 = vlaneseq
  %v67 = vshrl.u32 %v66, 7
  %v68 = vsub.s32 0, %v67
  %v69 = vrot.slane %v64, %v68
  %v70 = vlaneseq
  %v71 = vshrl.u32 %v70, 7
  %v72 = vsub.s32 1, %v71
  %v73 = vrot.slane %v64, %v72
  %v74 = vlaneseq
  %v75 = vshrl.u32 %v74, 7
  %v76 = vsub.s32 2, %v75
  %v77 = vrot.slane %v64, %v76
  %81 = vmatprep.subr.mxu0 %v17
  %82 = vmatpush1.msra.mxu0 %v16
  %83 = vmatprep.subr.mxu0 %v20
  %84 = vmatpush1.msra.mxu0 %v19
  %85 = vmatprep.subr.mxu0 %v23
  %86 = vmatpush1.msra.mxu0 %v22
  %87 = vmatprep.subr.mxu0 %v26
  %88 = vmatpush1.msra.mxu0 %v25
  %89 = vmatprep.subr.mxu0 %v29
  %90 = vmatpush1.msra.mxu0 %v28
  %91 = vmatprep.subr.mxu0 %v32
  %92 = vmatpush1.msra.mxu0 %v31
  %93 = vmatprep.subr.mxu0 %v35
  %94 = vmatpush1.msra.mxu0 %v34
  %95 = vmatprep.subr.mxu0 %v38
  %96 = vmatpush1.msra.mxu0 %v37
  %97 = vmatprep.subr.mxu0 %v41
  %98 = vmatpush1.msra.mxu0 %v40
  %99 = vmatprep.subr.mxu0 %v44
  %100 = vmatpush1.msra.mxu0 %v43
  %101 = vmatprep.subr.mxu0 %v47
  %102 = vmatpush1.msra.mxu0 %v46
  %103 = vmatprep.subr.mxu0 %v50
  %104 = vmatpush1.msra.mxu0 %v49
  %105 = vmatprep.subr.mxu0 %v53
  %106 = vmatpush1.msra.mxu0 %v52
  %107 = vmatprep.subr.mxu0 %v56
  %108 = vmatpush1.msra.mxu0 %v55
  %109 = vmatprep.subr.mxu0 %v59
  %110 = vmatpush1.msra.mxu0 %v58
  %111 = vmatprep.subr.mxu0 %v62
  %112 = vmatpush1.msra.mxu0 %v61
  %113 = vmatprep.subr.mxu0 0.0
  %114 = vmatpush1.msra.mxu0 0.0
  %115 = vmatprep.subr.mxu0 0.0
  %116 = vmatpush1.msra.mxu0 0.0
  %117 = vmatprep.subr.mxu0 0.0
  %118 = vmatpush1.msra.mxu0 0.0
  %119 = vmatprep.subr.mxu0 0.0
  %120 = vmatpush1.msra.mxu0 0.0
  %121 = vmatprep.subr.mxu0 0.0
  %122 = vmatpush1.msra.mxu0 0.0
  %123 = vmatprep.subr.mxu0 0.0
  %124 = vmatpush1.msra.mxu0 0.0
  %125 = vmatprep.subr.mxu0 0.0
  %126 = vmatpush1.msra.mxu0 0.0
  %127 = vmatprep.subr.mxu0 0.0
  %128 = vmatpush1.msra.mxu0 0.0
  %129 = vmatprep.subr.mxu0 0.0
  %130 = vmatpush1.msra.mxu0 0.0
  %131 = vmatprep.subr.mxu0 0.0
  %132 = vmatpush1.msra.mxu0 0.0
  %133 = vmatprep.subr.mxu0 0.0
  %134 = vmatpush1.msra.mxu0 0.0
  %135 = vmatprep.subr.mxu0 0.0
  %136 = vmatpush1.msra.mxu0 0.0
  %137 = vmatprep.subr.mxu0 0.0
  %138 = vmatpush1.msra.mxu0 0.0
  %139 = vmatprep.subr.mxu0 0.0
  %140 = vmatpush1.msra.mxu0 0.0
  %141 = vmatprep.subr.mxu0 0.0
  %142 = vmatpush1.msra.mxu0 0.0
  %143 = vmatprep.subr.mxu0 0.0
  %144 = vmatpush1.msra.mxu0 0.0
  %145 = vmatprep.mubr.f32.mxu0 0.0
  %146 = vmatmul.mubr.f32.gmra.mrb[0].mxu0 %v14
  %v147 = vpop.f32.mrb[0].mxu0
  %v148 = vadd.f32 %v69, %v147
  %v149 = vpop.f32.mrb[0].mxu0
  %v150 = vadd.f32 %v73, %v149
  %151 = vmatprep.mubr.f32.mxu0 0.0
  %152 = vmatmul.mubr.f32.gmra.mrb[0].mxu0 %v15
  %v153 = vpop.f32.mrb[0].mxu0
  %v154 = vadd.f32 %v69, %v153
  %v155 = vpop.f32.mrb[0].mxu0
  %v156 = vadd.f32 %v73, %v155
  %157 = vdwg.mxu0
  %158 = vmatprep.subr.mxu0 0.0
  %159 = vmatpush1.msra.mxu0 %v18
  %160 = vmatprep.subr.mxu0 0.0
  %161 = vmatpush1.msra.mxu0 %v21
  %162 = vmatprep.subr.mxu0 0.0
  %163 = vmatpush1.msra.mxu0 %v24
  %164 = vmatprep.subr.mxu0 0.0
  %165 = vmatpush1.msra.mxu0 %v27
  %166 = vmatprep.subr.mxu0 0.0
  %167 = vmatpush1.msra.mxu0 %v30
  %168 = vmatprep.subr.mxu0 0.0
  %169 = vmatpush1.msra.mxu0 %v33
  %170 = vmatprep.subr.mxu0 0.0
  %171 = vmatpush1.msra.mxu0 %v36
  %172 = vmatprep.subr.mxu0 0.0
  %173 = vmatpush1.msra.mxu0 %v39
  %174 = vmatprep.subr.mxu0 0.0
  %175 = vmatpush1.msra.mxu0 %v42
  %176 = vmatprep.subr.mxu0 0.0
  %177 = vmatpush1.msra.mxu0 %v45
  %178 = vmatprep.subr.mxu0 0.0
  %179 = vmatpush1.msra.mxu0 %v48
  %180 = vmatprep.subr.mxu0 0.0
  %181 = vmatpush1.msra.mxu0 %v51
  %182 = vmatprep.subr.mxu0 0.0
  %183 = vmatpush1.msra.mxu0 %v54
  %184 = vmatprep.subr.mxu0 0.0
  %185 = vmatpush1.msra.mxu0 %v57
  %186 = vmatprep.subr.mxu0 0.0
  %187 = vmatpush1.msra.mxu0 %v60
  %188 = vmatprep.subr.mxu0 0.0
  %189 = vmatpush1.msra.mxu0 %v63
  %190 = vmatprep.subr.mxu0 0.0
  %191 = vmatpush1.msra.mxu0 0.0
  %192 = vmatprep.subr.mxu0 0.0
  %193 = vmatpush1.msra.mxu0 0.0
  %194 = vmatprep.subr.mxu0 0.0
  %195 = vmatpush1.msra.mxu0 0.0
  %196 = vmatprep.subr.mxu0 0.0
  %197 = vmatpush1.msra.mxu0 0.0
  %198 = vmatprep.subr.mxu0 0.0
  %199 = vmatpush1.msra.mxu0 0.0
  %200 = vmatprep.subr.mxu0 0.0
  %201 = vmatpush1.msra.mxu0 0.0
  %202 = vmatprep.subr.mxu0 0.0
  %203 = vmatpush1.msra.mxu0 0.0
  %204 = vmatprep.subr.mxu0 0.0
  %205 = vmatpush1.msra.mxu0 0.0
  %206 = vmatprep.subr.mxu0 0.0
  %207 = vmatpush1.msra.mxu0 0.0
  %208 = vmatprep.subr.mxu0 0.0
  %209 = vmatpush1.msra.mxu0 0.0
  %210 = vmatprep.subr.mxu0 0.0
  %211 = vmatpush1.msra.mxu0 0.0
  %212 = vmatprep.subr.mxu0 0.0
  %213 = vmatpush1.msra.mxu0 0.0
  %214 = vmatprep.subr.mxu0 0.0
  %215 = vmatpush1.msra.mxu0 0.0
  %216 = vmatprep.subr.mxu0 0.0
  %217 = vmatpush1.msra.mxu0 0.0
  %218 = vmatprep.subr.mxu0 0.0
  %219 = vmatpush1.msra.mxu0 0.0
  %220 = vmatprep.subr.mxu0 0.0
  %221 = vmatpush1.msra.mxu0 0.0
  %222 = vmatprep.mubr.f32.mxu0 0.0
  %223 = vmatmul.mubr.f32.gmra.mrb[0].mxu0 %v14
  %v224 = vpop.f32.mrb[0].mxu0
  %v225 = vadd.f32 %v77, %v224
  %v226 = vpop.f32.mrb[0].mxu0
  %227 = vmatprep.mubr.f32.mxu0 0.0
  %228 = vmatmul.mubr.f32.gmra.mrb[0].mxu0 %v15
  %v229 = vpop.f32.mrb[0].mxu0
  %v230 = vadd.f32 %v77, %v229
  %v231 = vpop.f32.mrb[0].mxu0
  %232 = vdwg.mxu0
  %233 = vst [vmem:[%s3] sm:$0xff] %v148
  %234 = vst [vmem:[%s3 + $0x8] sm:$0xff] %v150
  %235 = vst [vmem:[%s3 + $0x10] sm:$0xff] %v225
  %236 = vst [vmem:[%s3 + $0x18] sm:$0xff] %v154
  %237 = vst [vmem:[%s3 + $0x20] sm:$0xff] %v156
  %238 = vst [vmem:[%s3 + $0x28] sm:$0xff] %v230
  // Predicated region
  $region14: #{gru_forward.6} parent=0 // pred_check
    _
  $region15: #{gru_forward.6} parent=0 // pred_check_branch
    %240 = sbr.rel (0) target = $region17
  $region16: #{gru_forward.6} parent=0 // pred_region
    _
  $region17: #{gru_forward.6} parent=0 // pred_fallthru
    _
  // Predicated region
  $region18: #{gru_forward.6} parent=0 // pred_check
    _
  $region19: #{gru_forward.6} parent=0 // pred_check_branch
    %242 = sbr.rel (0) target = $region21
  $region20: #{gru_forward.6} parent=0 // pred_region
    _
  $region21: #{gru_forward.6} parent=0 // pred_fallthru
    _

// kernel: gru_forward.5
$region0: #{gru_forward.5}
  #allocation0 [shape = 'u32[]', space=smem, size = 0x4, offset = 0x4, fixed_abs, tag = 'smem constant byte address 0x4 - core index']
  #allocation1 [shape = 'u32[144,128]{1,0:T(1,128)}', space=vmem, size = 0x12000, scoped, tag = 'internal scratch']
  %s0 = inlined_call_operand.vmem [shape: f32[8,2,384], index: 0, kind: input, shape index: {}]
  %s1 = inlined_call_operand.hbm [shape: f32[128,384], index: 1, kind: input, shape index: {}]
  %s2 = inlined_call_operand.hbm [shape: f32[1,128], index: 2, kind: input, shape index: {}]
  %s3 = inlined_call_operand.vmem [shape: f32[8,2,128], index: 3, kind: output, shape index: {}]
  %s4 = sld [smem:[#allocation0]]
  $region30: #{gru_forward.5} parent=0
    _
  %s6 = ssub.s32 1, %s4
  %s7 = scalar_select 0, %s6, %s4
  $region1: #{gru_forward.5} parent=0
    #allocation2 [shape = 'u8[196608]{0}', space=vmem, size = 0x30000, scoped, tag = 'input window, operand 1, single buffered']
    #allocation3 [shape = 's32[1]{0}', space=sflag, size = 0x4, scoped, tag = 'scoped memory for gru_forward.5']
    #allocation4 [shape = 'u8[512]{0}', space=vmem, size = 0x400, scoped, tag = 'input window, operand 2, single buffered']
    #allocation5 [shape = 's32[1]{0}', space=sflag, size = 0x4, scoped, tag = 'scoped memory for gru_forward.5']
    %8 = vsyncpa [#allocation3], 0
    %9 = vsyncpa [#allocation5], 0
    // Predicated region
    $region2: #{gru_forward.5} parent=1 // pred_check
      _
    $region3: #{gru_forward.5} parent=1 // pred_check_branch
      %11 = sbr.rel (0) target = $region5
    $region4: #{gru_forward.5} parent=1 // pred_region
      _
    $region5: #{gru_forward.5} parent=1 // pred_fallthru
      _
    // Predicated region
    $region6: #{gru_forward.5} parent=1 // pred_check
      _
    $region7: #{gru_forward.5} parent=1 // pred_check_branch
      %13 = sbr.rel (0) target = $region9
    $region8: #{gru_forward.5} parent=1 // pred_region
      %s15 = ssub.s32 6144, 6144
      %16 = vsyncadd [#allocation3], %s15
      %s17 = sshll.u32 [#allocation2], 4
      %s18 = int_to_ptr.vmem [resolvable:$true] %s17
      %23 = dma.hbm_to_vmem [thread:$0]  %s1, 6144, %s18, [#allocation3], 384, 384, 24
    $region9: #{gru_forward.5} parent=1 // pred_fallthru
      _
    // Predicated region
    $region10: #{gru_forward.5} parent=1 // pred_check
      _
    $region11: #{gru_forward.5} parent=1 // pred_check_branch
      %25 = sbr.rel (0) target = $region13
    $region12: #{gru_forward.5} parent=1 // pred_region
      %s27 = ssub.s32 16, 16
      %28 = vsyncadd [#allocation5], %s27
      %s30 = sshll.u32 [#allocation4], 4
      %s31 = int_to_ptr.vmem [resolvable:$true] %s30
      %33 = dma.hbm_to_vmem [thread:$0]  %s2, 16, %s31, [#allocation5]
    $region13: #{gru_forward.5} parent=1 // pred_fallthru
      _
    // Predicated region
    $region14: #{gru_forward.5} parent=1 // pred_check
      _
    $region15: #{gru_forward.5} parent=1 // pred_check_branch
      %35 = sbr.rel (0) target = $region17
    $region16: #{gru_forward.5} parent=1 // pred_region
      %36 = dma.done [#allocation3], 6144
    $region17: #{gru_forward.5} parent=1 // pred_fallthru
      _
    // Predicated region
    $region18: #{gru_forward.5} parent=1 // pred_check
      _
    $region19: #{gru_forward.5} parent=1 // pred_check_branch
      %38 = sbr.rel (0) target = $region21
    $region20: #{gru_forward.5} parent=1 // pred_region
      %39 = dma.done [#allocation5], 16
    $region21: #{gru_forward.5} parent=1 // pred_fallthru
      _
    %v40 = vld [vmem:[#allocation2] sm:$0xff]
    %v41 = vld [vmem:[#allocation2 + $0x8] sm:$0xff]
    %v42 = vld [vmem:[#allocation2 + $0x10] sm:$0xff]
    %v43 = vld [vmem:[#allocation2 + $0x18] sm:$0xff]
    %v44 = vld [vmem:[#allocation2 + $0x20] sm:$0xff]
    %v45 = vld [vmem:[#allocation2 + $0x28] sm:$0xff]
    %v46 = vld [vmem:[#allocation2 + $0x30] sm:$0xff]
    %v47 = vld [vmem:[#allocation2 + $0x38] sm:$0xff]
    %v48 = vld [vmem:[#allocation2 + $0x40] sm:$0xff]
    %v49 = vld [vmem:[#allocation2 + $0x48] sm:$0xff]
    %v50 = vld [vmem:[#allocation2 + $0x50] sm:$0xff]
    %v51 = vld [vmem:[#allocation2 + $0x58] sm:$0xff]
    %v52 = vld [vmem:[#allocation2 + $0x60] sm:$0xff]
    %v53 = vld [vmem:[#allocation2 + $0x68] sm:$0xff]
    %v54 = vld [vmem:[#allocation2 + $0x70] sm:$0xff]
    %v55 = vld [vmem:[#allocation2 + $0x78] sm:$0xff]
    %v56 = vld [vmem:[#allocation2 + $0x80] sm:$0xff]
    %v57 = vld [vmem:[#allocation2 + $0x88] sm:$0xff]
    %v58 = vld [vmem:[#allocation2 + $0x90] sm:$0xff]
    %v59 = vld [vmem:[#allocation2 + $0x98] sm:$0xff]
    %v60 = vld [vmem:[#allocation2 + $0xa0] sm:$0xff]
    %v61 = vld [vmem:[#allocation2 + $0xa8] sm:$0xff]
    %v62 = vld [vmem:[#allocation2 + $0xb0] sm:$0xff]
    %v63 = vld [vmem:[#allocation2 + $0xb8] sm:$0xff]
    %v64 = vld [vmem:[#allocation2 + $0xc0] sm:$0xff]
    %v65 = vld [vmem:[#allocation2 + $0xc8] sm:$0xff]
    %v66 = vld [vmem:[#allocation2 + $0xd0] sm:$0xff]
    %v67 = vld [vmem:[#allocation2 + $0xd8] sm:$0xff]
    %v68 = vld [vmem:[#allocation2 + $0xe0] sm:$0xff]
    %v69 = vld [vmem:[#allocation2 + $0xe8] sm:$0xff]
    %v70 = vld [vmem:[#allocation2 + $0xf0] sm:$0xff]
    %v71 = vld [vmem:[#allocation2 + $0xf8] sm:$0xff]
    %v72 = vld [vmem:[#allocation2 + $0x100] sm:$0xff]
    %v73 = vld [vmem:[#allocation2 + $0x108] sm:$0xff]
    %v74 = vld [vmem:[#allocation2 + $0x110] sm:$0xff]
    %v75 = vld [vmem:[#allocation2 + $0x118] sm:$0xff]
    %v76 = vld [vmem:[#allocation2 + $0x120] sm:$0xff]
    %v77 = vld [vmem:[#allocation2 + $0x128] sm:$0xff]
    %v78 = vld [vmem:[#allocation2 + $0x130] sm:$0xff]
    %v79 = vld [vmem:[#allocation2 + $0x138] sm:$0xff]
    %v80 = vld [vmem:[#allocation2 + $0x140] sm:$0xff]
    %v81 = vld [vmem:[#allocation2 + $0x148] sm:$0xff]
    %v82 = vld [vmem:[#allocation2 + $0x150] sm:$0xff]
    %v83 = vld [vmem:[#allocation2 + $0x158] sm:$0xff]
    %v84 = vld [vmem:[#allocation2 + $0x160] sm:$0xff]
    %v85 = vld [vmem:[#allocation2 + $0x168] sm:$0xff]
    %v86 = vld [vmem:[#allocation2 + $0x170] sm:$0xff]
    %v87 = vld [vmem:[#allocation2 + $0x178] sm:$0xff]
    %v88 = vld [vmem:[#allocation4] sm:$0x1]
    %v89 = vld [vmem:[%s0] sm:$0x3f]
    %90 = vmatprep.subr.mxu0 %v41
    %91 = vmatpush1.msra.mxu0 %v40
    %92 = vmatprep.subr.mxu0 %v44
    %93 = vmatpush1.msra.mxu0 %v43
    %94 = vmatprep.subr.mxu0 %v47
    %95 = vmatpush1.msra.mxu0 %v46
    %96 = vmatprep.subr.mxu0 %v50
    %97 = vmatpush1.msra.mxu0 %v49
    %98 = vmatprep.subr.mxu0 %v53
    %99 = vmatpush1.msra.mxu0 %v52
    %100 = vmatprep.subr.mxu0 %v56
    %101 = vmatpush1.msra.mxu0 %v55
    %102 = vmatprep.subr.mxu0 %v59
    %103 = vmatpush1.msra.mxu0 %v58
    %104 = vmatprep.subr.mxu0 %v62
    %105 = vmatpush1.msra.mxu0 %v61
    %106 = vmatprep.subr.mxu0 %v65
    %107 = vmatpush1.msra.mxu0 %v64
    %108 = vmatprep.subr.mxu0 %v68
    %109 = vmatpush1.msra.mxu0 %v67
    %110 = vmatprep.subr.mxu0 %v71
    %111 = vmatpush1.msra.mxu0 %v70
    %112 = vmatprep.subr.mxu0 %v74
    %113 = vmatpush1.msra.mxu0 %v73
    %114 = vmatprep.subr.mxu0 %v77
    %115 = vmatpush1.msra.mxu0 %v76
    %116 = vmatprep.subr.mxu0 %v80
    %117 = vmatpush1.msra.mxu0 %v79
    %118 = vmatprep.subr.mxu0 %v83
    %119 = vmatpush1.msra.mxu0 %v82
    %120 = vmatprep.subr.mxu0 %v86
    %121 = vmatpush1.msra.mxu0 %v85
    %122 = vmatprep.subr.mxu0 0.0
    %123 = vmatpush1.msra.mxu0 0.0
    %124 = vmatprep.subr.mxu0 0.0
    %125 = vmatpush1.msra.mxu0 0.0
    %126 = vmatprep.subr.mxu0 0.0
    %127 = vmatpush1.msra.mxu0 0.0
    %128 = vmatprep.subr.mxu0 0.0
    %129 = vmatpush1.msra.mxu0 0.0
    %130 = vmatprep.subr.mxu0 0.0
    %131 = vmatpush1.msra.mxu0 0.0
    %132 = vmatprep.subr.mxu0 0.0
    %133 = vmatpush1.msra.mxu0 0.0
    %134 = vmatprep.subr.mxu0 0.0
    %135 = vmatpush1.msra.mxu0 0.0
    %136 = vmatprep.subr.mxu0 0.0
    %137 = vmatpush1.msra.mxu0 0.0
    %138 = vmatprep.subr.mxu0 0.0
    %139 = vmatpush1.msra.mxu0 0.0
    %140 = vmatprep.subr.mxu0 0.0
    %141 = vmatpush1.msra.mxu0 0.0
    %142 = vmatprep.subr.mxu0 0.0
    %143 = vmatpush1.msra.mxu0 0.0
    %144 = vmatprep.subr.mxu0 0.0
    %145 = vmatpush1.msra.mxu0 0.0
    %146 = vmatprep.subr.mxu0 0.0
    %147 = vmatpush1.msra.mxu0 0.0
    %148 = vmatprep.subr.mxu0 0.0
    %149 = vmatpush1.msra.mxu0 0.0
    %150 = vmatprep.subr.mxu0 0.0
    %151 = vmatpush1.msra.mxu0 0.0
    %152 = vmatprep.subr.mxu0 0.0
    %153 = vmatpush1.msra.mxu0 0.0
    %154 = vmatprep.mubr.f32.mxu0 0.0
    %155 = vmatmul.mubr.f32.gmra.mrb[0].mxu0 0.0
    %v156 = vpop.f32.mrb[0].mxu0
    %v157 = vadd.f32 0.0, %v156
    %v158 = vpop.f32.mrb[0].mxu0
    %v159 = vadd.f32 0.0, %v158
    %160 = vdwg.mxu0
    %161 = vmatprep.subr.mxu0 0.0
    %162 = vmatpush1.msra.mxu0 %v42
    %163 = vmatprep.subr.mxu0 0.0
    %164 = vmatpush1.msra.mxu0 %v45
    %165 = vmatprep.subr.mxu0 0.0
    %166 = vmatpush1.msra.mxu0 %v48
    %167 = vmatprep.subr.mxu0 0.0
    %168 = vmatpush1.msra.mxu0 %v51
    %169 = vmatprep.subr.mxu0 0.0
    %170 = vmatpush1.msra.mxu0 %v54
    %171 = vmatprep.subr.mxu0 0.0
    %172 = vmatpush1.msra.mxu0 %v57
    %173 = vmatprep.subr.mxu0 0.0
    %174 = vmatpush1.msra.mxu0 %v60
    %175 = vmatprep.subr.mxu0 0.0
    %176 = vmatpush1.msra.mxu0 %v63
    %177 = vmatprep.subr.mxu0 0.0
    %178 = vmatpush1.msra.mxu0 %v66
    %179 = vmatprep.subr.mxu0 0.0
    %180 = vmatpush1.msra.mxu0 %v69
    %181 = vmatprep.subr.mxu0 0.0
    %182 = vmatpush1.msra.mxu0 %v72
    %183 = vmatprep.subr.mxu0 0.0
    %184 = vmatpush1.msra.mxu0 %v75
    %185 = vmatprep.subr.mxu0 0.0
    %186 = vmatpush1.msra.mxu0 %v78
    %187 = vmatprep.subr.mxu0 0.0
    %188 = vmatpush1.msra.mxu0 %v81
    %189 = vmatprep.subr.mxu0 0.0
    %190 = vmatpush1.msra.mxu0 %v84
    %191 = vmatprep.subr.mxu0 0.0
    %192 = vmatpush1.msra.mxu0 %v87
    %193 = vmatprep.subr.mxu0 0.0
    %194 = vmatpush1.msra.mxu0 0.0
    %195 = vmatprep.subr.mxu0 0.0
    %196 = vmatpush1.msra.mxu0 0.0
    %197 = vmatprep.subr.mxu0 0.0
    %198 = vmatpush1.msra.mxu0 0.0
    %199 = vmatprep.subr.mxu0 0.0
    %200 = vmatpush1.msra.mxu0 0.0
    %201 = vmatprep.subr.mxu0 0.0
    %202 = vmatpush1.msra.mxu0 0.0
    %203 = vmatprep.subr.mxu0 0.0
    %204 = vmatpush1.msra.mxu0 0.0
    %205 = vmatprep.subr.mxu0 0.0
    %206 = vmatpush1.msra.mxu0 0.0
    %207 = vmatprep.subr.mxu0 0.0
    %208 = vmatpush1.msra.mxu0 0.0
    %209 = vmatprep.subr.mxu0 0.0
    %210 = vmatpush1.msra.mxu0 0.0
    %211 = vmatprep.subr.mxu0 0.0
    %212 = vmatpush1.msra.mxu0 0.0
    %213 = vmatprep.subr.mxu0 0.0
    %214 = vmatpush1.msra.mxu0 0.0
    %215 = vmatprep.subr.mxu0 0.0
    %216 = vmatpush1.msra.mxu0 0.0
    %217 = vmatprep.subr.mxu0 0.0
    %218 = vmatpush1.msra.mxu0 0.0
    %219 = vmatprep.subr.mxu0 0.0
    %220 = vmatpush1.msra.mxu0 0.0
    %221 = vmatprep.subr.mxu0 0.0
    %222 = vmatpush1.msra.mxu0 0.0
    %223 = vmatprep.subr.mxu0 0.0
    %224 = vmatpush1.msra.mxu0 0.0
    %225 = vmatprep.mubr.f32.mxu0 0.0
    %226 = vmatmul.mubr.f32.gmra.mrb[0].mxu0 0.0
    %v227 = vpop.f32.mrb[0].mxu0
    %v228 = vadd.f32 0.0, %v227
    %v229 = vpop.f32.mrb[0].mxu0
    %230 = vdwg.mxu0
    %v231 = vadd.f32 %v89, %v157
    %v232 = vxor.u32 %v231, 2147483648
    %v233 = vmul.f32 %v232, 1.442695
    %v234 = vpow.pop %v233
    %v235 = vadd.f32 %v234, 1.0
    %v236 = vrcp.pop %v235
    %v237 = vmul.f32 1.0, %v236
    %v239 = vrot.slane %v89, 2
    %v241 = vadd.f32 %v239, %v159
    %v242 = vxor.u32 %v241, 2147483648
    %v243 = vmul.f32 %v242, 1.442695
    %v244 = vpow.pop %v243
    %v245 = vadd.f32 %v244, 1.0
    %v246 = vrcp.pop %v245
    %v247 = vmul.f32 1.0, %v246
    %v249 = vlaneseq
    %v250 = vshrl.u32 %v249, 7
    %v251 = vsub.s32 0, %v250
    %v252 = vrot.slane %v88, %v251
    %v254 = vadd.f32 %v228, %v252
    %v255 = vmul.f32 %v237, %v254
    %v256 = vrot.slane %v89, 4
    %v258 = vadd.f32 %v256, %v255
    %v259 = vtanh.pop %v258
    %v260 = vsub.f32 1.0, %v247
    %v261 = vmul.f32 %v260, %v259
    %v262 = vmul.f32 %v247, 0.0
    %v263 = vadd.f32 %v261, %v262
    %264 = vst [vmem:[%s3] sm:$0x3] %v263
    %s265 = scalar_lea.vmem %s0, 6
    %v266 = vld [vmem:[%s265] sm:$0x3f]
    %267 = vmatprep.subr.mxu0 %v41
    %268 = vmatpush1.msra.mxu0 %v40
    %269 = vmatprep.subr.mxu0 %v44
    %270 = vmatpush1.msra.mxu0 %v43
    %271 = vmatprep.subr.mxu0 %v47
    %272 = vmatpush1.msra.mxu0 %v46
    %273 = vmatprep.subr.mxu0 %v50
    %274 = vmatpush1.msra.mxu0 %v49
    %275 = vmatprep.subr.mxu0 %v53
    %276 = vmatpush1.msra.mxu0 %v52
    %277 = vmatprep.subr.mxu0 %v56
    %278 = vmatpush1.msra.mxu0 %v55
    %279 = vmatprep.subr.mxu0 %v59
    %280 = vmatpush1.msra.mxu0 %v58
    %281 = vmatprep.subr.mxu0 %v62
    %282 = vmatpush1.msra.mxu0 %v61
    %283 = vmatprep.subr.mxu0 %v65
    %284 = vmatpush1.msra.mxu0 %v64
    %285 = vmatprep.subr.mxu0 %v68
    %286 = vmatpush1.msra.mxu0 %v67
    %287 = vmatprep.subr.mxu0 %v71
    %288 = vmatpush1.msra.mxu0 %v70
    %289 = vmatprep.subr.mxu0 %v74
    %290 = vmatpush1.msra.mxu0 %v73
    %291 = vmatprep.subr.mxu0 %v77
    %292 = vmatpush1.msra.mxu0 %v76
    %293 = vmatprep.subr.mxu0 %v80
    %294 = vmatpush1.msra.mxu0 %v79
    %295 = vmatprep.subr.mxu0 %v83
    %296 = vmatpush1.msra.mxu0 %v82
    %297 = vmatprep.subr.mxu0 %v86
    %298 = vmatpush1.msra.mxu0 %v85
    %299 = vmatprep.subr.mxu0 0.0
    %300 = vmatpush1.msra.mxu0 0.0
    %301 = vmatprep.subr.mxu0 0.0
    %302 = vmatpush1.msra.mxu0 0.0
    %303 = vmatprep.subr.mxu0 0.0
    %304 = vmatpush1.msra.mxu0 0.0
    %305 = vmatprep.subr.mxu0 0.0
    %306 = vmatpush1.msra.mxu0 0.0
    %307 = vmatprep.subr.mxu0 0.0
    %308 = vmatpush1.msra.mxu0 0.0
    %309 = vmatprep.subr.mxu0 0.0
    %310 = vmatpush1.msra.mxu0 0.0
    %311 = vmatprep.subr.mxu0 0.0
    %312 = vmatpush1.msra.mxu0 0.0
    %313 = vmatprep.subr.mxu0 0.0
    %314 = vmatpush1.msra.mxu0 0.0
    %315 = vmatprep.subr.mxu0 0.0
    %316 = vmatpush1.msra.mxu0 0.0
    %317 = vmatprep.subr.mxu0 0.0
    %318 = vmatpush1.msra.mxu0 0.0
    %319 = vmatprep.subr.mxu0 0.0
    %320 = vmatpush1.msra.mxu0 0.0
    %321 = vmatprep.subr.mxu0 0.0
    %322 = vmatpush1.msra.mxu0 0.0
    %323 = vmatprep.subr.mxu0 0.0
    %324 = vmatpush1.msra.mxu0 0.0
    %325 = vmatprep.subr.mxu0 0.0
    %326 = vmatpush1.msra.mxu0 0.0
    %327 = vmatprep.subr.mxu0 0.0
    %328 = vmatpush1.msra.mxu0 0.0
    %329 = vmatprep.subr.mxu0 0.0
    %330 = vmatpush1.msra.mxu0 0.0
    %331 = vmatprep.mubr.f32.mxu0 0.0
    %332 = vmatmul.mubr.f32.gmra.mrb[0].mxu0 %v263
    %v333 = vpop.f32.mrb[0].mxu0
    %v334 = vadd.f32 0.0, %v333
    %v335 = vpop.f32.mrb[0].mxu0
    %v336 = vadd.f32 0.0, %v335
    %337 = vdwg.mxu0
    %338 = vmatprep.subr.mxu0 0.0
    %339 = vmatpush1.msra.mxu0 %v42
    %340 = vmatprep.subr.mxu0 0.0
    %341 = vmatpush1.msra.mxu0 %v45
    %342 = vmatprep.subr.mxu0 0.0
    %343 = vmatpush1.msra.mxu0 %v48
    %344 = vmatprep.subr.mxu0 0.0
    %345 = vmatpush1.msra.mxu0 %v51
    %346 = vmatprep.subr.mxu0 0.0
    %347 = vmatpush1.msra.mxu0 %v54
    %348 = vmatprep.subr.mxu0 0.0
    %349 = vmatpush1.msra.mxu0 %v57
    %350 = vmatprep.subr.mxu0 0.0
    %351 = vmatpush1.msra.mxu0 %v60
    %352 = vmatprep.subr.mxu0 0.0
    %353 = vmatpush1.msra.mxu0 %v63
    %354 = vmatprep.subr.mxu0 0.0
    %355 = vmatpush1.msra.mxu0 %v66
    %356 = vmatprep.subr.mxu0 0.0
    %357 = vmatpush1.msra.mxu0 %v69
    %358 = vmatprep.subr.mxu0 0.0
    %359 = vmatpush1.msra.mxu0 %v72
    %360 = vmatprep.subr.mxu0 0.0
    %361 = vmatpush1.msra.mxu0 %v75
    %362 = vmatprep.subr.mxu0 0.0
    %363 = vmatpush1.msra.mxu0 %v78
    %364 = vmatprep.subr.mxu0 0.0
    %365 = vmatpush1.msra.mxu0 %v81
    %366 = vmatprep.subr.mxu0 0.0
    %367 = vmatpush1.msra.mxu0 %v84
    %368 = vmatprep.subr.mxu0 0.0
    %369 = vmatpush1.msra.mxu0 %v87
    %370 = vmatprep.subr.mxu0 0.0
    %371 = vmatpush1.msra.mxu0 0.0
    %372 = vmatprep.subr.mxu0 0.0
    %373 = vmatpush1.msra.mxu0 0.0
    %374 = vmatprep.subr.mxu0 0.0
    %375 = vmatpush1.msra.mxu0 0.0
    %376 = vmatprep.subr.mxu0 0.0
    %377 = vmatpush1.msra.mxu0 0.0
    %378 = vmatprep.subr.mxu0 0.0
    %379 = vmatpush1.msra.mxu0 0.0
    %380 = vmatprep.subr.mxu0 0.0
    %381 = vmatpush1.msra.mxu0 0.0
    %382 = vmatprep.subr.mxu0 0.0
    %383 = vmatpush1.msra.mxu0 0.0
    %384 = vmatprep.subr.mxu0 0.0
    %385 = vmatpush1.msra.mxu0 0.0
    %386 = vmatprep.subr.mxu0 0.0
    %387 = vmatpush1.msra.mxu0 0.0
    %388 = vmatprep.subr.mxu0 0.0
    %389 = vmatpush1.msra.mxu0 0.0
    %390 = vmatprep.subr.mxu0 0.0
    %391 = vmatpush1.msra.mxu0 0.0
    %392 = vmatprep.subr.mxu0 0.0
    %393 = vmatpush1.msra.mxu0 0.0
    %394 = vmatprep.subr.mxu0 0.0
    %395 = vmatpush1.msra.mxu0 0.0
    %396 = vmatprep.subr.mxu0 0.0
    %397 = vmatpush1.msra.mxu0 0.0
    %398 = vmatprep.subr.mxu0 0.0
    %399 = vmatpush1.msra.mxu0 0.0
    %400 = vmatprep.subr.mxu0 0.0
    %401 = vmatpush1.msra.mxu0 0.0
    %402 = vmatprep.mubr.f32.mxu0 0.0
    %403 = vmatmul.mubr.f32.gmra.mrb[0].mxu0 %v263
    %v404 = vpop.f32.mrb[0].mxu0
    %v405 = vadd.f32 0.0, %v404
    %v406 = vpop.f32.mrb[0].mxu0
    %407 = vdwg.mxu0
    %v408 = vadd.f32 %v266, %v334
    %v409 = vxor.u32 %v408, 2147483648
    %v410 = vmul.f32 %v409, 1.442695
    %v411 = vpow.pop %v410
    %v412 = vadd.f32 %v411, 1.0
    %v413 = vrcp.pop %v412
    %v414 = vmul.f32 1.0, %v413
    %v416 = vrot.slane %v266, 2
    %v418 = vadd.f32 %v416, %v336
    %v419 = vxor.u32 %v418, 2147483648
    %v420 = vmul.f32 %v419, 1.442695
    %v421 = vpow.pop %v420
    %v422 = vadd.f32 %v421, 1.0
    %v423 = vrcp.pop %v422
    %v424 = vmul.f32 1.0, %v423
    %v425 = vadd.f32 %v405, %v252
    %v426 = vmul.f32 %v414, %v425
    %v427 = vrot.slane %v266, 4
    %v429 = vadd.f32 %v427, %v426
    %v430 = vtanh.pop %v429
    %v431 = vsub.f32 1.0, %v424
    %v432 = vmul.f32 %v431, %v430
    %v433 = vmul.f32 %v424, %v263
    %v434 = vadd.f32 %v432, %v433
    %s435 = scalar_lea.vmem %s3, 2
    %436 = vst [vmem:[%s435] sm:$0x3] %v434
    %s437 = scalar_lea.vmem %s0, 12
    %v438 = vld [vmem:[%s437] sm:$0x3f]
    %439 = vmatprep.subr.mxu0 %v41
    %440 = vmatpush1.msra.mxu0 %v40
    %441 = vmatprep.subr.mxu0 %v44
    %442 = vmatpush1.msra.mxu0 %v43
    %443 = vmatprep.subr.mxu0 %v47
    %444 = vmatpush1.msra.mxu0 %v46
    %445 = vmatprep.subr.mxu0 %v50
    %446 = vmatpush1.msra.mxu0 %v49
    %447 = vmatprep.subr.mxu0 %v53
    %448 = vmatpush1.msra.mxu0 %v52
    %449 = vmatprep.subr.mxu0 %v56
    %450 = vmatpush1.msra.mxu0 %v55
    %451 = vmatprep.subr.mxu0 %v59
    %452 = vmatpush1.msra.mxu0 %v58
    %453 = vmatprep.subr.mxu0 %v62
    %454 = vmatpush1.msra.mxu0 %v61
    %455 = vmatprep.subr.mxu0 %v65
    %456 = vmatpush1.msra.mxu0 %v64
    %457 = vmatprep.subr.mxu0 %v68
    %458 = vmatpush1.msra.mxu0 %v67
    %459 = vmatprep.subr.mxu0 %v71
    %460 = vmatpush1.msra.mxu0 %v70
    %461 = vmatprep.subr.mxu0 %v74
    %462 = vmatpush1.msra.mxu0 %v73
    %463 = vmatprep.subr.mxu0 %v77
    %464 = vmatpush1.msra.mxu0 %v76
    %465 = vmatprep.subr.mxu0 %v80
    %466 = vmatpush1.msra.mxu0 %v79
    %467 = vmatprep.subr.mxu0 %v83
    %468 = vmatpush1.msra.mxu0 %v82
    %469 = vmatprep.subr.mxu0 %v86
    %470 = vmatpush1.msra.mxu0 %v85
    %471 = vmatprep.subr.mxu0 0.0
    %472 = vmatpush1.msra.mxu0 0.0
    %473 = vmatprep.subr.mxu0 0.0
    %474 = vmatpush1.msra.mxu0 0.0
    %475 = vmatprep.subr.mxu0 0.0
    %476 = vmatpush1.msra.mxu0 0.0
    %477 = vmatprep.subr.mxu0 0.0
    %478 = vmatpush1.msra.mxu0 0.0
    %479 = vmatprep.subr.mxu0 0.0
    %480 = vmatpush1.msra.mxu0 0.0
    %481 = vmatprep.subr.mxu0 0.0
    %482 = vmatpush1.msra.mxu0 0.0
    %483 = vmatprep.subr.mxu0 0.0
    %484 = vmatpush1.msra.mxu0 0.0
    %485 = vmatprep.subr.mxu0 0.0
    %486 = vmatpush1.msra.mxu0 0.0
    %487 = vmatprep.subr.mxu0 0.0
    %488 = vmatpush1.msra.mxu0 0.0
    %489 = vmatprep.subr.mxu0 0.0
    %490 = vmatpush1.msra.mxu0 0.0
    %491 = vmatprep.subr.mxu0 0.0
    %492 = vmatpush1.msra.mxu0 0.0
    %493 = vmatprep.subr.mxu0 0.0
    %494 = vmatpush1.msra.mxu0 0.0
    %495 = vmatprep.subr.mxu0 0.0
    %496 = vmatpush1.msra.mxu0 0.0
    %497 = vmatprep.subr.mxu0 0.0
    %498 = vmatpush1.msra.mxu0 0.0
    %499 = vmatprep.subr.mxu0 0.0
    %500 = vmatpush1.msra.mxu0 0.0
    %501 = vmatprep.subr.mxu0 0.0
    %502 = vmatpush1.msra.mxu0 0.0
    %503 = vmatprep.mubr.f32.mxu0 0.0
    %504 = vmatmul.mubr.f32.gmra.mrb[0].mxu0 %v434
    %v505 = vpop.f32.mrb[0].mxu0
    %v506 = vadd.f32 0.0, %v505
    %v507 = vpop.f32.mrb[0].mxu0
    %v508 = vadd.f32 0.0, %v507
    %509 = vdwg.mxu0
    %510 = vmatprep.subr.mxu0 0.0
    %511 = vmatpush1.msra.mxu0 %v42
    %512 = vmatprep.subr.mxu0 0.0
    %513 = vmatpush1.msra.mxu0 %v45
    %514 = vmatprep.subr.mxu0 0.0
    %515 = vmatpush1.msra.mxu0 %v48
    %516 = vmatprep.subr.mxu0 0.0
    %517 = vmatpush1.msra.mxu0 %v51
    %518 = vmatprep.subr.mxu0 0.0
    %519 = vmatpush1.msra.mxu0 %v54
    %520 = vmatprep.subr.mxu0 0.0
    %521 = vmatpush1.msra.mxu0 %v57
    %522 = vmatprep.subr.mxu0 0.0
    %523 = vmatpush1.msra.mxu0 %v60
    %524 = vmatprep.subr.mxu0 0.0
    %525 = vmatpush1.msra.mxu0 %v63
    %526 = vmatprep.subr.mxu0 0.0
    %527 = vmatpush1.msra.mxu0 %v66
    %528 = vmatprep.subr.mxu0 0.0
    %529 = vmatpush1.msra.mxu0 %v69
    %530 = vmatprep.subr.mxu0 0.0
    %531 = vmatpush1.msra.mxu0 %v72
    %532 = vmatprep.subr.mxu0 0.0
    %533 = vmatpush1.msra.mxu0 %v75
    %534 = vmatprep.subr.mxu0 0.0
    %535 = vmatpush1.msra.mxu0 %v78
    %536 = vmatprep.subr.mxu0 0.0
    %537 = vmatpush1.msra.mxu0 %v81
    %538 = vmatprep.subr.mxu0 0.0
    %539 = vmatpush1.msra.mxu0 %v84
    %540 = vmatprep.subr.mxu0 0.0
    %541 = vmatpush1.msra.mxu0 %v87
    %542 = vmatprep.subr.mxu0 0.0
    %543 = vmatpush1.msra.mxu0 0.0
    %544 = vmatprep.subr.mxu0 0.0
    %545 = vmatpush1.msra.mxu0 0.0
    %546 = vmatprep.subr.mxu0 0.0
    %547 = vmatpush1.msra.mxu0 0.0
    %548 = vmatprep.subr.mxu0 0.0
    %549 = vmatpush1.msra.mxu0 0.0
    %550 = vmatprep.subr.mxu0 0.0
    %551 = vmatpush1.msra.mxu0 0.0
    %552 = vmatprep.subr.mxu0 0.0
    %553 = vmatpush1.msra.mxu0 0.0
    %554 = vmatprep.subr.mxu0 0.0
    %555 = vmatpush1.msra.mxu0 0.0
    %556 = vmatprep.subr.mxu0 0.0
    %557 = vmatpush1.msra.mxu0 0.0
    %558 = vmatprep.subr.mxu0 0.0
    %559 = vmatpush1.msra.mxu0 0.0
    %560 = vmatprep.subr.mxu0 0.0
    %561 = vmatpush1.msra.mxu0 0.0
    %562 = vmatprep.subr.mxu0 0.0
    %563 = vmatpush1.msra.mxu0 0.0
    %564 = vmatprep.subr.mxu0 0.0
    %565 = vmatpush1.msra.mxu0 0.0
    %566 = vmatprep.subr.mxu0 0.0
    %567 = vmatpush1.msra.mxu0 0.0
    %568 = vmatprep.subr.mxu0 0.0
    %569 = vmatpush1.msra.mxu0 0.0
    %570 = vmatprep.subr.mxu0 0.0
    %571 = vmatpush1.msra.mxu0 0.0
    %572 = vmatprep.subr.mxu0 0.0
    %573 = vmatpush1.msra.mxu0 0.0
    %574 = vmatprep.mubr.f32.mxu0 0.0
    %575 = vmatmul.mubr.f32.gmra.mrb[0].mxu0 %v434
    %v576 = vpop.f32.mrb[0].mxu0
    %v577 = vadd.f32 0.0, %v576
    %v578 = vpop.f32.mrb[0].mxu0
    %579 = vdwg.mxu0
    %v580 = vadd.f32 %v438, %v506
    %v581 = vxor.u32 %v580, 2147483648
    %v582 = vmul.f32 %v581, 1.442695
    %v583 = vpow.pop %v582
    %v584 = vadd.f32 %v583, 1.0
    %v585 = vrcp.pop %v584
    %v586 = vmul.f32 1.0, %v585
    %v588 = vrot.slane %v438, 2
    %v590 = vadd.f32 %v588, %v508
    %v591 = vxor.u32 %v590, 2147483648
    %v592 = vmul.f32 %v591, 1.442695
    %v593 = vpow.pop %v592
    %v594 = vadd.f32 %v593, 1.0
    %v595 = vrcp.pop %v594
    %v596 = vmul.f32 1.0, %v595
    %v597 = vadd.f32 %v577, %v252
    %v598 = vmul.f32 %v586, %v597
    %v599 = vrot.slane %v438, 4
    %v601 = vadd.f32 %v599, %v598
    %v602 = vtanh.pop %v601
    %v603 = vsub.f32 1.0, %v596
    %v604 = vmul.f32 %v603, %v602
    %v605 = vmul.f32 %v596, %v434
    %v606 = vadd.f32 %v604, %v605
    %s607 = scalar_lea.vmem %s3, 4
    %608 = vst [vmem:[%s607] sm:$0x3] %v606
    %s609 = scalar_lea.vmem %s0, 18
    %v610 = vld [vmem:[%s609] sm:$0x3f]
    %611 = vmatprep.subr.mxu0 %v41
    %612 = vmatpush1.msra.mxu0 %v40
    %613 = vmatprep.subr.mxu0 %v44
    %614 = vmatpush1.msra.mxu0 %v43
    %615 = vmatprep.subr.mxu0 %v47
    %616 = vmatpush1.msra.mxu0 %v46
    %617 = vmatprep.subr.mxu0 %v50
    %618 = vmatpush1.msra.mxu0 %v49
    %619 = vmatprep.subr.mxu0 %v53
    %620 = vmatpush1.msra.mxu0 %v52
    %621 = vmatprep.subr.mxu0 %v56
    %622 = vmatpush1.msra.mxu0 %v55
    %623 = vmatprep.subr.mxu0 %v59
    %624 = vmatpush1.msra.mxu0 %v58
    %625 = vmatprep.subr.mxu0 %v62
    %626 = vmatpush1.msra.mxu0 %v61
    %627 = vmatprep.subr.mxu0 %v65
    %628 = vmatpush1.msra.mxu0 %v64
    %629 = vmatprep.subr.mxu0 %v68
    %630 = vmatpush1.msra.mxu0 %v67
    %631 = vmatprep.subr.mxu0 %v71
    %632 = vmatpush1.msra.mxu0 %v70
    %633 = vmatprep.subr.mxu0 %v74
    %634 = vmatpush1.msra.mxu0 %v73
    %635 = vmatprep.subr.mxu0 %v77
    %636 = vmatpush1.msra.mxu0 %v76
    %637 = vmatprep.subr.mxu0 %v80
    %638 = vmatpush1.msra.mxu0 %v79
    %639 = vmatprep.subr.mxu0 %v83
    %640 = vmatpush1.msra.mxu0 %v82
    %641 = vmatprep.subr.mxu0 %v86
    %642 = vmatpush1.msra.mxu0 %v85
    %643 = vmatprep.subr.mxu0 0.0
    %644 = vmatpush1.msra.mxu0 0.0
    %645 = vmatprep.subr.mxu0 0.0
    %646 = vmatpush1.msra.mxu0 0.0
    %647 = vmatprep.subr.mxu0 0.0
    %648 = vmatpush1.msra.mxu0 0.0
    %649 = vmatprep.subr.mxu0 0.0
    %650 = vmatpush1.msra.mxu0 0.0
    %651 = vmatprep.subr.mxu0 0.0
    %652 = vmatpush1.msra.mxu0 0.0
    %653 = vmatprep.subr.mxu0 0.0
    %654 = vmatpush1.msra.mxu0 0.0
    %655 = vmatprep.subr.mxu0 0.0
    %656 = vmatpush1.msra.mxu0 0.0
    %657 = vmatprep.subr.mxu0 0.0
    %658 = vmatpush1.msra.mxu0 0.0
    %659 = vmatprep.subr.mxu0 0.0
    %660 = vmatpush1.msra.mxu0 0.0
    %661 = vmatprep.subr.mxu0 0.0
    %662 = vmatpush1.msra.mxu0 0.0
    %663 = vmatprep.subr.mxu0 0.0
    %664 = vmatpush1.msra.mxu0 0.0
    %665 = vmatprep.subr.mxu0 0.0
    %666 = vmatpush1.msra.mxu0 0.0
    %667 = vmatprep.subr.mxu0 0.0
    %668 = vmatpush1.msra.mxu0 0.0
    %669 = vmatprep.subr.mxu0 0.0
    %670 = vmatpush1.msra.mxu0 0.0
    %671 = vmatprep.subr.mxu0 0.0
    %672 = vmatpush1.msra.mxu0 0.0
    %673 = vmatprep.subr.mxu0 0.0
    %674 = vmatpush1.msra.mxu0 0.0
    %675 = vmatprep.mubr.f32.mxu0 0.0
    %676 = vmatmul.mubr.f32.gmra.mrb[0].mxu0 %v606
    %v677 = vpop.f32.mrb[0].mxu0
    %v678 = vadd.f32 0.0, %v677
    %v679 = vpop.f32.mrb[0].mxu0
    %v680 = vadd.f32 0.0, %v679
    %681 = vdwg.mxu0
    %682 = vmatprep.subr.mxu0 0.0
    %683 = vmatpush1.msra.mxu0 %v42
    %684 = vmatprep.subr.mxu0 0.0
    %685 = vmatpush1.msra.mxu0 %v45
    %686 = vmatprep.subr.mxu0 0.0
    %687 = vmatpush1.msra.mxu0 %v48
    %688 = vmatprep.subr.mxu0 0.0
    %689 = vmatpush1.msra.mxu0 %v51
    %690 = vmatprep.subr.mxu0 0.0
    %691 = vmatpush1.msra.mxu0 %v54
    %692 = vmatprep.subr.mxu0 0.0
    %693 = vmatpush1.msra.mxu0 %v57
    %694 = vmatprep.subr.mxu0 0.0
    %695 = vmatpush1.msra.mxu0 %v60
    %696 = vmatprep.subr.mxu0 0.0
    %697 = vmatpush1.msra.mxu0 %v63
    %698 = vmatprep.subr.mxu0 0.0
    %699 = vmatpush1.msra.mxu0 %v66
    %700 = vmatprep.subr.mxu0 0.0
    %701 = vmatpush1.msra.mxu0 %v69
    %702 = vmatprep.subr.mxu0 0.0
    %703 = vmatpush1.msra.mxu0 %v72
    %704 = vmatprep.subr.mxu0 0.0
    %705 = vmatpush1.msra.mxu0 %v75
    %706 = vmatprep.subr.mxu0 0.0
    %707 = vmatpush1.msra.mxu0 %v78
    %708 = vmatprep.subr.mxu0 0.0
    %709 = vmatpush1.msra.mxu0 %v81
    %710 = vmatprep.subr.mxu0 0.0
    %711 = vmatpush1.msra.mxu0 %v84
    %712 = vmatprep.subr.mxu0 0.0
    %713 = vmatpush1.msra.mxu0 %v87
    %714 = vmatprep.subr.mxu0 0.0
    %715 = vmatpush1.msra.mxu0 0.0
    %716 = vmatprep.subr.mxu0 0.0
    %717 = vmatpush1.msra.mxu0 0.0
    %718 = vmatprep.subr.mxu0 0.0
    %719 = vmatpush1.msra.mxu0 0.0
    %720 = vmatprep.subr.mxu0 0.0
    %721 = vmatpush1.msra.mxu0 0.0
    %722 = vmatprep.subr.mxu0 0.0
    %723 = vmatpush1.msra.mxu0 0.0
    %724 = vmatprep.subr.mxu0 0.0
    %725 = vmatpush1.msra.mxu0 0.0
    %726 = vmatprep.subr.mxu0 0.0
    %727 = vmatpush1.msra.mxu0 0.0
    %728 = vmatprep.subr.mxu0 0.0
    %729 = vmatpush1.msra.mxu0 0.0
    %730 = vmatprep.subr.mxu0 0.0
    %731 = vmatpush1.msra.mxu0 0.0
    %732 = vmatprep.subr.mxu0 0.0
    %733 = vmatpush1.msra.mxu0 0.0
    %734 = vmatprep.subr.mxu0 0.0
    %735 = vmatpush1.msra.mxu0 0.0
    %736 = vmatprep.subr.mxu0 0.0
    %737 = vmatpush1.msra.mxu0 0.0
    %738 = vmatprep.subr.mxu0 0.0
    %739 = vmatpush1.msra.mxu0 0.0
    %740 = vmatprep.subr.mxu0 0.0
    %741 = vmatpush1.msra.mxu0 0.0
    %742 = vmatprep.subr.mxu0 0.0
    %743 = vmatpush1.msra.mxu0 0.0
    %744 = vmatprep.subr.mxu0 0.0
    %745 = vmatpush1.msra.mxu0 0.0
    %746 = vmatprep.mubr.f32.mxu0 0.0
    %747 = vmatmul.mubr.f32.gmra.mrb[0].mxu0 %v606
    %v748 = vpop.f32.mrb[0].mxu0
    %v749 = vadd.f32 0.0, %v748
    %v750 = vpop.f32.mrb[0].mxu0
    %751 = vdwg.mxu0
    %v752 = vadd.f32 %v610, %v678
    %v753 = vxor.u32 %v752, 2147483648
    %v754 = vmul.f32 %v753, 1.442695
    %v755 = vpow.pop %v754
    %v756 = vadd.f32 %v755, 1.0
    %v757 = vrcp.pop %v756
    %v758 = vmul.f32 1.0, %v757
    %v760 = vrot.slane %v610, 2
    %v762 = vadd.f32 %v760, %v680
    %v763 = vxor.u32 %v762, 2147483648
    %v764 = vmul.f32 %v763, 1.442695
    %v765 = vpow.pop %v764
    %v766 = vadd.f32 %v765, 1.0
    %v767 = vrcp.pop %v766
    %v768 = vmul.f32 1.0, %v767
    %v769 = vadd.f32 %v749, %v252
    %v770 = vmul.f32 %v758, %v769
    %v771 = vrot.slane %v610, 4
    %v773 = vadd.f32 %v771, %v770
    %v774 = vtanh.pop %v773
    %v775 = vsub.f32 1.0, %v768
    %v776 = vmul.f32 %v775, %v774
    %v777 = vmul.f32 %v768, %v606
    %v778 = vadd.f32 %v776, %v777
    %s779 = scalar_lea.vmem %s3, 6
    %780 = vst [vmem:[%s779] sm:$0x3] %v778
    %s781 = scalar_lea.vmem %s0, 24
    %v782 = vld [vmem:[%s781] sm:$0x3f]
    %783 = vmatprep.subr.mxu0 %v41
    %784 = vmatpush1.msra.mxu0 %v40
    %785 = vmatprep.subr.mxu0 %v44
    %786 = vmatpush1.msra.mxu0 %v43
    %787 = vmatprep.subr.mxu0 %v47
    %788 = vmatpush1.msra.mxu0 %v46
    %789 = vmatprep.subr.mxu0 %v50
    %790 = vmatpush1.msra.mxu0 %v49
    %791 = vmatprep.subr.mxu0 %v53
    %792 = vmatpush1.msra.mxu0 %v52
    %793 = vmatprep.subr.mxu0 %v56
    %794 = vmatpush1.msra.mxu0 %v55
    %795 = vmatprep.subr.mxu0 %v59
    %796 = vmatpush1.msra.mxu0 %v58
    %797 = vmatprep.subr.mxu0 %v62
    %798 = vmatpush1.msra.mxu0 %v61
    %799 = vmatprep.subr.mxu0 %v65
    %800 = vmatpush1.msra.mxu0 %v64
    %801 = vmatprep.subr.mxu0 %v68
    %802 = vmatpush1.msra.mxu0 %v67
    %803 = vmatprep.subr.mxu0 %v71
    %804 = vmatpush1.msra.mxu0 %v70
    %805 = vmatprep.subr.mxu0 %v74
    %806 = vmatpush1.msra.mxu0 %v73
    %807 = vmatprep.subr.mxu0 %v77
    %808 = vmatpush1.msra.mxu0 %v76
    %809 = vmatprep.subr.mxu0 %v80
    %810 = vmatpush1.msra.mxu0 %v79
    %811 = vmatprep.subr.mxu0 %v83
    %812 = vmatpush1.msra.mxu0 %v82
    %813 = vmatprep.subr.mxu0 %v86
    %814 = vmatpush1.msra.mxu0 %v85
    %815 = vmatprep.subr.mxu0 0.0
    %816 = vmatpush1.msra.mxu0 0.0
    %817 = vmatprep.subr.mxu0 0.0
    %818 = vmatpush1.msra.mxu0 0.0
    %819 = vmatprep.subr.mxu0 0.0
    %820 = vmatpush1.msra.mxu0 0.0
    %821 = vmatprep.subr.mxu0 0.0
    %822 = vmatpush1.msra.mxu0 0.0
    %823 = vmatprep.subr.mxu0 0.0
    %824 = vmatpush1.msra.mxu0 0.0
    %825 = vmatprep.subr.mxu0 0.0
    %826 = vmatpush1.msra.mxu0 0.0
    %827 = vmatprep.subr.mxu0 0.0
    %828 = vmatpush1.msra.mxu0 0.0
    %829 = vmatprep.subr.mxu0 0.0
    %830 = vmatpush1.msra.mxu0 0.0
    %831 = vmatprep.subr.mxu0 0.0
    %832 = vmatpush1.msra.mxu0 0.0
    %833 = vmatprep.subr.mxu0 0.0
    %834 = vmatpush1.msra.mxu0 0.0
    %835 = vmatprep.subr.mxu0 0.0
    %836 = vmatpush1.msra.mxu0 0.0
    %837 = vmatprep.subr.mxu0 0.0
    %838 = vmatpush1.msra.mxu0 0.0
    %839 = vmatprep.subr.mxu0 0.0
    %840 = vmatpush1.msra.mxu0 0.0
    %841 = vmatprep.subr.mxu0 0.0
    %842 = vmatpush1.msra.mxu0 0.0
    %843 = vmatprep.subr.mxu0 0.0
    %844 = vmatpush1.msra.mxu0 0.0
    %845 = vmatprep.subr.mxu0 0.0
    %846 = vmatpush1.msra.mxu0 0.0
    %847 = vmatprep.mubr.f32.mxu0 0.0
    %848 = vmatmul.mubr.f32.gmra.mrb[0].mxu0 %v778
    %v849 = vpop.f32.mrb[0].mxu0
    %v850 = vadd.f32 0.0, %v849
    %v851 = vpop.f32.mrb[0].mxu0
    %v852 = vadd.f32 0.0, %v851
    %853 = vdwg.mxu0
    %854 = vmatprep.subr.mxu0 0.0
    %855 = vmatpush1.msra.mxu0 %v42
    %856 = vmatprep.subr.mxu0 0.0
    %857 = vmatpush1.msra.mxu0 %v45
    %858 = vmatprep.subr.mxu0 0.0
    %859 = vmatpush1.msra.mxu0 %v48
    %860 = vmatprep.subr.mxu0 0.0
    %861 = vmatpush1.msra.mxu0 %v51
    %862 = vmatprep.subr.mxu0 0.0
    %863 = vmatpush1.msra.mxu0 %v54
    %864 = vmatprep.subr.mxu0 0.0
    %865 = vmatpush1.msra.mxu0 %v57
    %866 = vmatprep.subr.mxu0 0.0
    %867 = vmatpush1.msra.mxu0 %v60
    %868 = vmatprep.subr.mxu0 0.0
    %869 = vmatpush1.msra.mxu0 %v63
    %870 = vmatprep.subr.mxu0 0.0
    %871 = vmatpush1.msra.mxu0 %v66
    %872 = vmatprep.subr.mxu0 0.0
    %873 = vmatpush1.msra.mxu0 %v69
    %874 = vmatprep.subr.mxu0 0.0
    %875 = vmatpush1.msra.mxu0 %v72
    %876 = vmatprep.subr.mxu0 0.0
    %877 = vmatpush1.msra.mxu0 %v75
    %878 = vmatprep.subr.mxu0 0.0
    %879 = vmatpush1.msra.mxu0 %v78
    %880 = vmatprep.subr.mxu0 0.0
    %881 = vmatpush1.msra.mxu0 %v81
    %882 = vmatprep.subr.mxu0 0.0
    %883 = vmatpush1.msra.mxu0 %v84
    %884 = vmatprep.subr.mxu0 0.0
    %885 = vmatpush1.msra.mxu0 %v87
    %886 = vmatprep.subr.mxu0 0.0
    %887 = vmatpush1.msra.mxu0 0.0
    %888 = vmatprep.subr.mxu0 0.0
    %889 = vmatpush1.msra.mxu0 0.0
    %890 = vmatprep.subr.mxu0 0.0
    %891 = vmatpush1.msra.mxu0 0.0
    %892 = vmatprep.subr.mxu0 0.0
    %893 = vmatpush1.msra.mxu0 0.0
    %894 = vmatprep.subr.mxu0 0.0
    %895 = vmatpush1.msra.mxu0 0.0
    %896 = vmatprep.subr.mxu0 0.0
    %897 = vmatpush1.msra.mxu0 0.0
    %898 = vmatprep.subr.mxu0 0.0
    %899 = vmatpush1.msra.mxu0 0.0
    %900 = vmatprep.subr.mxu0 0.0
    %901 = vmatpush1.msra.mxu0 0.0
    %902 = vmatprep.subr.mxu0 0.0
    %903 = vmatpush1.msra.mxu0 0.0
    %904 = vmatprep.subr.mxu0 0.0
    %905 = vmatpush1.msra.mxu0 0.0
    %906 = vmatprep.subr.mxu0 0.0
    %907 = vmatpush1.msra.mxu0 0.0
    %908 = vmatprep.subr.mxu0 0.0
    %909 = vmatpush1.msra.mxu0 0.0
    %910 = vmatprep.subr.mxu0 0.0
    %911 = vmatpush1.msra.mxu0 0.0
    %912 = vmatprep.subr.mxu0 0.0
    %913 = vmatpush1.msra.mxu0 0.0
    %914 = vmatprep.subr.mxu0 0.0
    %915 = vmatpush1.msra.mxu0 0.0
    %916 = vmatprep.subr.mxu0 0.0
    %917 = vmatpush1.msra.mxu0 0.0
    %918 = vmatprep.mubr.f32.mxu0 0.0
    %919 = vmatmul.mubr.f32.gmra.mrb[0].mxu0 %v778
    %v920 = vpop.f32.mrb[0].mxu0
    %v921 = vadd.f32 0.0, %v920
    %v922 = vpop.f32.mrb[0].mxu0
    %923 = vdwg.mxu0
    %v924 = vadd.f32 %v782, %v850
    %v925 = vxor.u32 %v924, 2147483648
    %v926 = vmul.f32 %v925, 1.442695
    %v927 = vpow.pop %v926
    %v928 = vadd.f32 %v927, 1.0
    %v929 = vrcp.pop %v928
    %v930 = vmul.f32 1.0, %v929
    %v932 = vrot.slane %v782, 2
    %v934 = vadd.f32 %v932, %v852
    %v935 = vxor.u32 %v934, 2147483648
    %v936 = vmul.f32 %v935, 1.442695
    %v937 = vpow.pop %v936
    %v938 = vadd.f32 %v937, 1.0
    %v939 = vrcp.pop %v938
    %v940 = vmul.f32 1.0, %v939
    %v941 = vadd.f32 %v921, %v252
    %v942 = vmul.f32 %v930, %v941
    %v943 = vrot.slane %v782, 4
    %v945 = vadd.f32 %v943, %v942
    %v946 = vtanh.pop %v945
    %v947 = vsub.f32 1.0, %v940
    %v948 = vmul.f32 %v947, %v946
    %v949 = vmul.f32 %v940, %v778
    %v950 = vadd.f32 %v948, %v949
    %s951 = scalar_lea.vmem %s3, 8
    %952 = vst [vmem:[%s951] sm:$0x3] %v950
    %s953 = scalar_lea.vmem %s0, 30
    %v954 = vld [vmem:[%s953] sm:$0x3f]
    %955 = vmatprep.subr.mxu0 %v41
    %956 = vmatpush1.msra.mxu0 %v40
    %957 = vmatprep.subr.mxu0 %v44
    %958 = vmatpush1.msra.mxu0 %v43
    %959 = vmatprep.subr.mxu0 %v47
    %960 = vmatpush1.msra.mxu0 %v46
    %961 = vmatprep.subr.mxu0 %v50
    %962 = vmatpush1.msra.mxu0 %v49
    %963 = vmatprep.subr.mxu0 %v53
    %964 = vmatpush1.msra.mxu0 %v52
    %965 = vmatprep.subr.mxu0 %v56
    %966 = vmatpush1.msra.mxu0 %v55
    %967 = vmatprep.subr.mxu0 %v59
    %968 = vmatpush1.msra.mxu0 %v58
    %969 = vmatprep.subr.mxu0 %v62
    %970 = vmatpush1.msra.mxu0 %v61
    %971 = vmatprep.subr.mxu0 %v65
    %972 = vmatpush1.msra.mxu0 %v64
    %973 = vmatprep.subr.mxu0 %v68
    %974 = vmatpush1.msra.mxu0 %v67
    %975 = vmatprep.subr.mxu0 %v71
    %976 = vmatpush1.msra.mxu0 %v70
    %977 = vmatprep.subr.mxu0 %v74
    %978 = vmatpush1.msra.mxu0 %v73
    %979 = vmatprep.subr.mxu0 %v77
    %980 = vmatpush1.msra.mxu0 %v76
    %981 = vmatprep.subr.mxu0 %v80
    %982 = vmatpush1.msra.mxu0 %v79
    %983 = vmatprep.subr.mxu0 %v83
    %984 = vmatpush1.msra.mxu0 %v82
    %985 = vmatprep.subr.mxu0 %v86
    %986 = vmatpush1.msra.mxu0 %v85
    %987 = vmatprep.subr.mxu0 0.0
    %988 = vmatpush1.msra.mxu0 0.0
    %989 = vmatprep.subr.mxu0 0.0
    %990 = vmatpush1.msra.mxu0 0.0
    %991 = vmatprep.subr.mxu0 0.0
    %992 = vmatpush1.msra.mxu0 0.0
    %993 = vmatprep.subr.mxu0 0.0
    %994 = vmatpush1.msra.mxu0 0.0
    %995 = vmatprep.subr.mxu0 0.0
    %996 = vmatpush1.msra.mxu0 0.0
    %997 = vmatprep.subr.mxu0 0.0
    %998 = vmatpush1.msra.mxu0 0.0
    %999 = vmatprep.subr.mxu0 0.0
    %1000 = vmatpush1.msra.mxu0 0.0
    %1001 = vmatprep.subr.mxu0 0.0
    %1002 = vmatpush1.msra.mxu0 0.0
    %1003 = vmatprep.subr.mxu0 0.0
    %1004 = vmatpush1.msra.mxu0 0.0
    %1005 = vmatprep.subr.mxu0 0.0
    %1006 = vmatpush1.msra.mxu0 0.0
    %1007 = vmatprep.subr.mxu0 0.0
    %1008 = vmatpush1.msra.mxu0 0.0
    %1009 = vmatprep.subr.mxu0 0.0
    %1010 = vmatpush1.msra.mxu0 0.0
    %1011 = vmatprep.subr.mxu0 0.0
    %1012 = vmatpush1.msra.mxu0 0.0
    %1013 = vmatprep.subr.mxu0 0.0
    %1014 = vmatpush1.msra.mxu0 0.0
    %1015 = vmatprep.subr.mxu0 0.0
    %1016 = vmatpush1.msra.mxu0 0.0
    %1017 = vmatprep.subr.mxu0 0.0
    %1018 = vmatpush1.msra.mxu0 0.0
    %1019 = vmatprep.mubr.f32.mxu0 0.0
    %1020 = vmatmul.mubr.f32.gmra.mrb[0].mxu0 %v950
    %v1021 = vpop.f32.mrb[0].mxu0
    %v1022 = vadd.f32 0.0, %v1021
    %v1023 = vpop.f32.mrb[0].mxu0
    %v1024 = vadd.f32 0.0, %v1023
    %1025 = vdwg.mxu0
    %1026 = vmatprep.subr.mxu0 0.0
    %1027 = vmatpush1.msra.mxu0 %v42
    %1028 = vmatprep.subr.mxu0 0.0
    %1029 = vmatpush1.msra.mxu0 %v45
    %1030 = vmatprep.subr.mxu0 0.0
    %1031 = vmatpush1.msra.mxu0 %v48
    %1032 = vmatprep.subr.mxu0 0.0
    %1033 = vmatpush1.msra.mxu0 %v51
    %1034 = vmatprep.subr.mxu0 0.0
    %1035 = vmatpush1.msra.mxu0 %v54
    %1036 = vmatprep.subr.mxu0 0.0
    %1037 = vmatpush1.msra.mxu0 %v57
    %1038 = vmatprep.subr.mxu0 0.0
    %1039 = vmatpush1.msra.mxu0 %v60
    %1040 = vmatprep.subr.mxu0 0.0
    %1041 = vmatpush1.msra.mxu0 %v63
    %1042 = vmatprep.subr.mxu0 0.0
    %1043 = vmatpush1.msra.mxu0 %v66
    %1044 = vmatprep.subr.mxu0 0.0
    %1045 = vmatpush1.msra.mxu0 %v69
    %1046 = vmatprep.subr.mxu0 0.0
    %1047 = vmatpush1.msra.mxu0 %v72
    %1048 = vmatprep.subr.mxu0 0.0
    %1049 = vmatpush1.msra.mxu0 %v75
    %1050 = vmatprep.subr.mxu0 0.0
    %1051 = vmatpush1.msra.mxu0 %v78
    %1052 = vmatprep.subr.mxu0 0.0
    %1053 = vmatpush1.msra.mxu0 %v81
    %1054 = vmatprep.subr.mxu0 0.0
    %1055 = vmatpush1.msra.mxu0 %v84
    %1056 = vmatprep.subr.mxu0 0.0
    %1057 = vmatpush1.msra.mxu0 %v87
    %1058 = vmatprep.subr.mxu0 0.0
    %1059 = vmatpush1.msra.mxu0 0.0
    %1060 = vmatprep.subr.mxu0 0.0
    %1061 = vmatpush1.msra.mxu0 0.0
    %1062 = vmatprep.subr.mxu0 0.0
    %1063 = vmatpush1.msra.mxu0 0.0
    %1064 = vmatprep.subr.mxu0 0.0
    %1065 = vmatpush1.msra.mxu0 0.0
    %1066 = vmatprep.subr.mxu0 0.0
    %1067 = vmatpush1.msra.mxu0 0.0
    %1068 = vmatprep.subr.mxu0 0.0
    %1069 = vmatpush1.msra.mxu0 0.0
    %1070 = vmatprep.subr.mxu0 0.0
    %1071 = vmatpush1.msra.mxu0 0.0
    %1072 = vmatprep.subr.mxu0 0.0
    %1073 = vmatpush1.msra.mxu0 0.0
    %1074 = vmatprep.subr.mxu0 0.0
    %1075 = vmatpush1.msra.mxu0 0.0
    %1076 = vmatprep.subr.mxu0 0.0
    %1077 = vmatpush1.msra.mxu0 0.0
    %1078 = vmatprep.subr.mxu0 0.0
    %1079 = vmatpush1.msra.mxu0 0.0
    %1080 = vmatprep.subr.mxu0 0.0
    %1081 = vmatpush1.msra.mxu0 0.0
    %1082 = vmatprep.subr.mxu0 0.0
    %1083 = vmatpush1.msra.mxu0 0.0
    %1084 = vmatprep.subr.mxu0 0.0
    %1085 = vmatpush1.msra.mxu0 0.0
    %1086 = vmatprep.subr.mxu0 0.0
    %1087 = vmatpush1.msra.mxu0 0.0
    %1088 = vmatprep.subr.mxu0 0.0
    %1089 = vmatpush1.msra.mxu0 0.0
    %1090 = vmatprep.mubr.f32.mxu0 0.0
    %1091 = vmatmul.mubr.f32.gmra.mrb[0].mxu0 %v950
    %v1092 = vpop.f32.mrb[0].mxu0
    %v1093 = vadd.f32 0.0, %v1092
    %v1094 = vpop.f32.mrb[0].mxu0
    %1095 = vdwg.mxu0
    %v1096 = vadd.f32 %v954, %v1022
    %v1097 = vxor.u32 %v1096, 2147483648
    %v1098 = vmul.f32 %v1097, 1.442695
    %v1099 = vpow.pop %v1098
    %v1100 = vadd.f32 %v1099, 1.0
    %v1101 = vrcp.pop %v1100
    %v1102 = vmul.f32 1.0, %v1101
    %v1104 = vrot.slane %v954, 2
    %v1106 = vadd.f32 %v1104, %v1024
    %v1107 = vxor.u32 %v1106, 2147483648
    %v1108 = vmul.f32 %v1107, 1.442695
    %v1109 = vpow.pop %v1108
    %v1110 = vadd.f32 %v1109, 1.0
    %v1111 = vrcp.pop %v1110
    %v1112 = vmul.f32 1.0, %v1111
    %v1113 = vadd.f32 %v1093, %v252
    %v1114 = vmul.f32 %v1102, %v1113
    %v1115 = vrot.slane %v954, 4
    %v1117 = vadd.f32 %v1115, %v1114
    %v1118 = vtanh.pop %v1117
    %v1119 = vsub.f32 1.0, %v1112
    %v1120 = vmul.f32 %v1119, %v1118
    %v1121 = vmul.f32 %v1112, %v950
    %v1122 = vadd.f32 %v1120, %v1121
    %s1123 = scalar_lea.vmem %s3, 10
    %1124 = vst [vmem:[%s1123] sm:$0x3] %v1122
    %s1125 = scalar_lea.vmem %s0, 36
    %v1126 = vld [vmem:[%s1125] sm:$0x3f]
    %1127 = vmatprep.subr.mxu0 %v41
    %1128 = vmatpush1.msra.mxu0 %v40
    %1129 = vmatprep.subr.mxu0 %v44
    %1130 = vmatpush1.msra.mxu0 %v43
    %1131 = vmatprep.subr.mxu0 %v47
    %1132 = vmatpush1.msra.mxu0 %v46
    %1133 = vmatprep.subr.mxu0 %v50
    %1134 = vmatpush1.msra.mxu0 %v49
    %1135 = vmatprep.subr.mxu0 %v53
    %1136 = vmatpush1.msra.mxu0 %v52
    %1137 = vmatprep.subr.mxu0 %v56
    %1138 = vmatpush1.msra.mxu0 %v55
    %1139 = vmatprep.subr.mxu0 %v59
    %1140 = vmatpush1.msra.mxu0 %v58
    %1141 = vmatprep.subr.mxu0 %v62
    %1142 = vmatpush1.msra.mxu0 %v61
    %1143 = vmatprep.subr.mxu0 %v65
    %1144 = vmatpush1.msra.mxu0 %v64
    %1145 = vmatprep.subr.mxu0 %v68
    %1146 = vmatpush1.msra.mxu0 %v67
    %1147 = vmatprep.subr.mxu0 %v71
    %1148 = vmatpush1.msra.mxu0 %v70
    %1149 = vmatprep.subr.mxu0 %v74
    %1150 = vmatpush1.msra.mxu0 %v73
    %1151 = vmatprep.subr.mxu0 %v77
    %1152 = vmatpush1.msra.mxu0 %v76
    %1153 = vmatprep.subr.mxu0 %v80
    %1154 = vmatpush1.msra.mxu0 %v79
    %1155 = vmatprep.subr.mxu0 %v83
    %1156 = vmatpush1.msra.mxu0 %v82
    %1157 = vmatprep.subr.mxu0 %v86
    %1158 = vmatpush1.msra.mxu0 %v85
    %1159 = vmatprep.subr.mxu0 0.0
    %1160 = vmatpush1.msra.mxu0 0.0
    %1161 = vmatprep.subr.mxu0 0.0
    %1162 = vmatpush1.msra.mxu0 0.0
    %1163 = vmatprep.subr.mxu0 0.0
    %1164 = vmatpush1.msra.mxu0 0.0
    %1165 = vmatprep.subr.mxu0 0.0
    %1166 = vmatpush1.msra.mxu0 0.0
    %1167 = vmatprep.subr.mxu0 0.0
    %1168 = vmatpush1.msra.mxu0 0.0
    %1169 = vmatprep.subr.mxu0 0.0
    %1170 = vmatpush1.msra.mxu0 0.0
    %1171 = vmatprep.subr.mxu0 0.0
    %1172 = vmatpush1.msra.mxu0 0.0
    %1173 = vmatprep.subr.mxu0 0.0
    %1174 = vmatpush1.msra.mxu0 0.0
    %1175 = vmatprep.subr.mxu0 0.0
    %1176 = vmatpush1.msra.mxu0 0.0
    %1177 = vmatprep.subr.mxu0 0.0
    %1178 = vmatpush1.msra.mxu0 0.0
    %1179 = vmatprep.subr.mxu0 0.0
    %1180 = vmatpush1.msra.mxu0 0.0
    %1181 = vmatprep.subr.mxu0 0.0
    %1182 = vmatpush1.msra.mxu0 0.0
    %1183 = vmatprep.subr.mxu0 0.0
    %1184 = vmatpush1.msra.mxu0 0.0
    %1185 = vmatprep.subr.mxu0 0.0
    %1186 = vmatpush1.msra.mxu0 0.0
    %1187 = vmatprep.subr.mxu0 0.0
    %1188 = vmatpush1.msra.mxu0 0.0
    %1189 = vmatprep.subr.mxu0 0.0
    %1190 = vmatpush1.msra.mxu0 0.0
    %1191 = vmatprep.mubr.f32.mxu0 0.0
    %1192 = vmatmul.mubr.f32.gmra.mrb[0].mxu0 %v1122
    %v1193 = vpop.f32.mrb[0].mxu0
    %v1194 = vadd.f32 0.0, %v1193
    %v1195 = vpop.f32.mrb[0].mxu0
    %v1196 = vadd.f32 0.0, %v1195
    %1197 = vdwg.mxu0
    %1198 = vmatprep.subr.mxu0 0.0
    %1199 = vmatpush1.msra.mxu0 %v42
    %1200 = vmatprep.subr.mxu0 0.0
    %1201 = vmatpush1.msra.mxu0 %v45
    %1202 = vmatprep.subr.mxu0 0.0
    %1203 = vmatpush1.msra.mxu0 %v48
    %1204 = vmatprep.subr.mxu0 0.0
    %1205 = vmatpush1.msra.mxu0 %v51
    %1206 = vmatprep.subr.mxu0 0.0
    %1207 = vmatpush1.msra.mxu0 %v54
    %1208 = vmatprep.subr.mxu0 0.0
    %1209 = vmatpush1.msra.mxu0 %v57
    %1210 = vmatprep.subr.mxu0 0.0
    %1211 = vmatpush1.msra.mxu0 %v60
    %1212 = vmatprep.subr.mxu0 0.0
    %1213 = vmatpush1.msra.mxu0 %v63
    %1214 = vmatprep.subr.mxu0 0.0
    %1215 = vmatpush1.msra.mxu0 %v66
    %1216 = vmatprep.subr.mxu0 0.0
    %1217 = vmatpush1.msra.mxu0 %v69
    %1218 = vmatprep.subr.mxu0 0.0
    %1219 = vmatpush1.msra.mxu0 %v72
    %1220 = vmatprep.subr.mxu0 0.0
    %1221 = vmatpush1.msra.mxu0 %v75
    %1222 = vmatprep.subr.mxu0 0.0
    %1223 = vmatpush1.msra.mxu0 %v78
    %1224 = vmatprep.subr.mxu0 0.0
    %1225 = vmatpush1.msra.mxu0 %v81
    %1226 = vmatprep.subr.mxu0 0.0
    %1227 = vmatpush1.msra.mxu0 %v84
    %1228 = vmatprep.subr.mxu0 0.0
    %1229 = vmatpush1.msra.mxu0 %v87
    %1230 = vmatprep.subr.mxu0 0.0
    %1231 = vmatpush1.msra.mxu0 0.0
    %1232 = vmatprep.subr.mxu0 0.0
    %1233 = vmatpush1.msra.mxu0 0.0
    %1234 = vmatprep.subr.mxu0 0.0
    %1235 = vmatpush1.msra.mxu0 0.0
    %1236 = vmatprep.subr.mxu0 0.0
    %1237 = vmatpush1.msra.mxu0 0.0
    %1238 = vmatprep.subr.mxu0 0.0
    %1239 = vmatpush1.msra.mxu0 0.0
    %1240 = vmatprep.subr.mxu0 0.0
    %1241 = vmatpush1.msra.mxu0 0.0
    %1242 = vmatprep.subr.mxu0 0.0
    %1243 = vmatpush1.msra.mxu0 0.0
    %1244 = vmatprep.subr.mxu0 0.0
    %1245 = vmatpush1.msra.mxu0 0.0
    %1246 = vmatprep.subr.mxu0 0.0
    %1247 = vmatpush1.msra.mxu0 0.0
    %1248 = vmatprep.subr.mxu0 0.0
    %1249 = vmatpush1.msra.mxu0 0.0
    %1250 = vmatprep.subr.mxu0 0.0
    %1251 = vmatpush1.msra.mxu0 0.0
    %1252 = vmatprep.subr.mxu0 0.0
    %1253 = vmatpush1.msra.mxu0 0.0
    %1254 = vmatprep.subr.mxu0 0.0
    %1255 = vmatpush1.msra.mxu0 0.0
    %1256 = vmatprep.subr.mxu0 0.0
    %1257 = vmatpush1.msra.mxu0 0.0
    %1258 = vmatprep.subr.mxu0 0.0
    %1259 = vmatpush1.msra.mxu0 0.0
    %1260 = vmatprep.subr.mxu0 0.0
    %1261 = vmatpush1.msra.mxu0 0.0
    %1262 = vmatprep.mubr.f32.mxu0 0.0
    %1263 = vmatmul.mubr.f32.gmra.mrb[0].mxu0 %v1122
    %v1264 = vpop.f32.mrb[0].mxu0
    %v1265 = vadd.f32 0.0, %v1264
    %v1266 = vpop.f32.mrb[0].mxu0
    %1267 = vdwg.mxu0
    %v1268 = vadd.f32 %v1126, %v1194
    %v1269 = vxor.u32 %v1268, 2147483648
    %v1270 = vmul.f32 %v1269, 1.442695
    %v1271 = vpow.pop %v1270
    %v1272 = vadd.f32 %v1271, 1.0
    %v1273 = vrcp.pop %v1272
    %v1274 = vmul.f32 1.0, %v1273
    %v1276 = vrot.slane %v1126, 2
    %v1278 = vadd.f32 %v1276, %v1196
    %v1279 = vxor.u32 %v1278, 2147483648
    %v1280 = vmul.f32 %v1279, 1.442695
    %v1281 = vpow.pop %v1280
    %v1282 = vadd.f32 %v1281, 1.0
    %v1283 = vrcp.pop %v1282
    %v1284 = vmul.f32 1.0, %v1283
    %v1285 = vadd.f32 %v1265, %v252
    %v1286 = vmul.f32 %v1274, %v1285
    %v1287 = vrot.slane %v1126, 4
    %v1289 = vadd.f32 %v1287, %v1286
    %v1290 = vtanh.pop %v1289
    %v1291 = vsub.f32 1.0, %v1284
    %v1292 = vmul.f32 %v1291, %v1290
    %v1293 = vmul.f32 %v1284, %v1122
    %v1294 = vadd.f32 %v1292, %v1293
    %s1295 = scalar_lea.vmem %s3, 12
    %1296 = vst [vmem:[%s1295] sm:$0x3] %v1294
    %s1297 = scalar_lea.vmem %s0, 42
    %v1298 = vld [vmem:[%s1297] sm:$0x3f]
    %1299 = vmatprep.subr.mxu0 %v41
    %1300 = vmatpush1.msra.mxu0 %v40
    %1301 = vmatprep.subr.mxu0 %v44
    %1302 = vmatpush1.msra.mxu0 %v43
    %1303 = vmatprep.subr.mxu0 %v47
    %1304 = vmatpush1.msra.mxu0 %v46
    %1305 = vmatprep.subr.mxu0 %v50
    %1306 = vmatpush1.msra.mxu0 %v49
    %1307 = vmatprep.subr.mxu0 %v53
    %1308 = vmatpush1.msra.mxu0 %v52
    %1309 = vmatprep.subr.mxu0 %v56
    %1310 = vmatpush1.msra.mxu0 %v55
    %1311 = vmatprep.subr.mxu0 %v59
    %1312 = vmatpush1.msra.mxu0 %v58
    %1313 = vmatprep.subr.mxu0 %v62
    %1314 = vmatpush1.msra.mxu0 %v61
    %1315 = vmatprep.subr.mxu0 %v65
    %1316 = vmatpush1.msra.mxu0 %v64
    %1317 = vmatprep.subr.mxu0 %v68
    %1318 = vmatpush1.msra.mxu0 %v67
    %1319 = vmatprep.subr.mxu0 %v71
    %1320 = vmatpush1.msra.mxu0 %v70
    %1321 = vmatprep.subr.mxu0 %v74
    %1322 = vmatpush1.msra.mxu0 %v73
    %1323 = vmatprep.subr.mxu0 %v77
    %1324 = vmatpush1.msra.mxu0 %v76
    %1325 = vmatprep.subr.mxu0 %v80
    %1326 = vmatpush1.msra.mxu0 %v79
    %1327 = vmatprep.subr.mxu0 %v83
    %1328 = vmatpush1.msra.mxu0 %v82
    %1329 = vmatprep.subr.mxu0 %v86
    %1330 = vmatpush1.msra.mxu0 %v85
    %1331 = vmatprep.subr.mxu0 0.0
    %1332 = vmatpush1.msra.mxu0 0.0
    %1333 = vmatprep.subr.mxu0 0.0
    %1334 = vmatpush1.msra.mxu0 0.0
    %1335 = vmatprep.subr.mxu0 0.0
    %1336 = vmatpush1.msra.mxu0 0.0
    %1337 = vmatprep.subr.mxu0 0.0
    %1338 = vmatpush1.msra.mxu0 0.0
    %1339 = vmatprep.subr.mxu0 0.0
    %1340 = vmatpush1.msra.mxu0 0.0
    %1341 = vmatprep.subr.mxu0 0.0
    %1342 = vmatpush1.msra.mxu0 0.0
    %1343 = vmatprep.subr.mxu0 0.0
    %1344 = vmatpush1.msra.mxu0 0.0
    %1345 = vmatprep.subr.mxu0 0.0
    %1346 = vmatpush1.msra.mxu0 0.0
    %1347 = vmatprep.subr.mxu0 0.0
    %1348 = vmatpush1.msra.mxu0 0.0
    %1349 = vmatprep.subr.mxu0 0.0
    %1350 = vmatpush1.msra.mxu0 0.0
    %1351 = vmatprep.subr.mxu0 0.0
    %1352 = vmatpush1.msra.mxu0 0.0
    %1353 = vmatprep.subr.mxu0 0.0
    %1354 = vmatpush1.msra.mxu0 0.0
    %1355 = vmatprep.subr.mxu0 0.0
    %1356 = vmatpush1.msra.mxu0 0.0
    %1357 = vmatprep.subr.mxu0 0.0
    %1358 = vmatpush1.msra.mxu0 0.0
    %1359 = vmatprep.subr.mxu0 0.0
    %1360 = vmatpush1.msra.mxu0 0.0
    %1361 = vmatprep.subr.mxu0 0.0
    %1362 = vmatpush1.msra.mxu0 0.0
    %1363 = vmatprep.mubr.f32.mxu0 0.0
    %1364 = vmatmul.mubr.f32.gmra.mrb[0].mxu0 %v1294
    %v1365 = vpop.f32.mrb[0].mxu0
    %v1366 = vadd.f32 0.0, %v1365
    %v1367 = vpop.f32.mrb[0].mxu0
    %v1368 = vadd.f32 0.0, %v1367
    %1369 = vdwg.mxu0
    %1370 = vmatprep.subr.mxu0 0.0
    %1371 = vmatpush1.msra.mxu0 %v42
    %1372 = vmatprep.subr.mxu0 0.0
    %1373 = vmatpush1.msra.mxu0 %v45
    %1374 = vmatprep.subr.mxu0 0.0
    %1375 = vmatpush1.msra.mxu0 %v48
    %1376 = vmatprep.subr.mxu0 0.0
    %1377 = vmatpush1.msra.mxu0 %v51
    %1378 = vmatprep.subr.mxu0 0.0
    %1379 = vmatpush1.msra.mxu0 %v54
    %1380 = vmatprep.subr.mxu0 0.0
    %1381 = vmatpush1.msra.mxu0 %v57
    %1382 = vmatprep.subr.mxu0 0.0
    %1383 = vmatpush1.msra.mxu0 %v60
    %1384 = vmatprep.subr.mxu0 0.0
    %1385 = vmatpush1.msra.mxu0 %v63
    %1386 = vmatprep.subr.mxu0 0.0
    %1387 = vmatpush1.msra.mxu0 %v66
    %1388 = vmatprep.subr.mxu0 0.0
    %1389 = vmatpush1.msra.mxu0 %v69
    %1390 = vmatprep.subr.mxu0 0.0
    %1391 = vmatpush1.msra.mxu0 %v72
    %1392 = vmatprep.subr.mxu0 0.0
    %1393 = vmatpush1.msra.mxu0 %v75
    %1394 = vmatprep.subr.mxu0 0.0
    %1395 = vmatpush1.msra.mxu0 %v78
    %1396 = vmatprep.subr.mxu0 0.0
    %1397 = vmatpush1.msra.mxu0 %v81
    %1398 = vmatprep.subr.mxu0 0.0
    %1399 = vmatpush1.msra.mxu0 %v84
    %1400 = vmatprep.subr.mxu0 0.0
    %1401 = vmatpush1.msra.mxu0 %v87
    %1402 = vmatprep.subr.mxu0 0.0
    %1403 = vmatpush1.msra.mxu0 0.0
    %1404 = vmatprep.subr.mxu0 0.0
    %1405 = vmatpush1.msra.mxu0 0.0
    %1406 = vmatprep.subr.mxu0 0.0
    %1407 = vmatpush1.msra.mxu0 0.0
    %1408 = vmatprep.subr.mxu0 0.0
    %1409 = vmatpush1.msra.mxu0 0.0
    %1410 = vmatprep.subr.mxu0 0.0
    %1411 = vmatpush1.msra.mxu0 0.0
    %1412 = vmatprep.subr.mxu0 0.0
    %1413 = vmatpush1.msra.mxu0 0.0
    %1414 = vmatprep.subr.mxu0 0.0
    %1415 = vmatpush1.msra.mxu0 0.0
    %1416 = vmatprep.subr.mxu0 0.0
    %1417 = vmatpush1.msra.mxu0 0.0
    %1418 = vmatprep.subr.mxu0 0.0
    %1419 = vmatpush1.msra.mxu0 0.0
    %1420 = vmatprep.subr.mxu0 0.0
    %1421 = vmatpush1.msra.mxu0 0.0
    %1422 = vmatprep.subr.mxu0 0.0
    %1423 = vmatpush1.msra.mxu0 0.0
    %1424 = vmatprep.subr.mxu0 0.0
    %1425 = vmatpush1.msra.mxu0 0.0
    %1426 = vmatprep.subr.mxu0 0.0
    %1427 = vmatpush1.msra.mxu0 0.0
    %1428 = vmatprep.subr.mxu0 0.0
    %1429 = vmatpush1.msra.mxu0 0.0
    %1430 = vmatprep.subr.mxu0 0.0
    %1431 = vmatpush1.msra.mxu0 0.0
    %1432 = vmatprep.subr.mxu0 0.0
    %1433 = vmatpush1.msra.mxu0 0.0
    %1434 = vmatprep.mubr.f32.mxu0 0.0
    %1435 = vmatmul.mubr.f32.gmra.mrb[0].mxu0 %v1294
    %v1436 = vpop.f32.mrb[0].mxu0
    %v1437 = vadd.f32 0.0, %v1436
    %v1438 = vpop.f32.mrb[0].mxu0
    %1439 = vdwg.mxu0
    %v1440 = vadd.f32 %v1298, %v1366
    %v1441 = vxor.u32 %v1440, 2147483648
    %v1442 = vmul.f32 %v1441, 1.442695
    %v1443 = vpow.pop %v1442
    %v1444 = vadd.f32 %v1443, 1.0
    %v1445 = vrcp.pop %v1444
    %v1446 = vmul.f32 1.0, %v1445
    %v1448 = vrot.slane %v1298, 2
    %v1450 = vadd.f32 %v1448, %v1368
    %v1451 = vxor.u32 %v1450, 2147483648
    %v1452 = vmul.f32 %v1451, 1.442695
    %v1453 = vpow.pop %v1452
    %v1454 = vadd.f32 %v1453, 1.0
    %v1455 = vrcp.pop %v1454
    %v1456 = vmul.f32 1.0, %v1455
    %v1457 = vadd.f32 %v1437, %v252
    %v1458 = vmul.f32 %v1446, %v1457
    %v1459 = vrot.slane %v1298, 4
    %v1461 = vadd.f32 %v1459, %v1458
    %v1462 = vtanh.pop %v1461
    %v1463 = vsub.f32 1.0, %v1456
    %v1464 = vmul.f32 %v1463, %v1462
    %v1465 = vmul.f32 %v1456, %v1294
    %v1466 = vadd.f32 %v1464, %v1465
    %s1467 = scalar_lea.vmem %s3, 14
    %1468 = vst [vmem:[%s1467] sm:$0x3] %v1466
    // Predicated region
    $region22: #{gru_forward.5} parent=1 // pred_check
      _
    $region23: #{gru_forward.5} parent=1 // pred_check_branch
      %1470 = sbr.rel (0) target = $region25
    $region24: #{gru_forward.5} parent=1 // pred_region
      _
    $region25: #{gru_forward.5} parent=1 // pred_fallthru
      _
    // Predicated region
    $region26: #{gru_forward.5} parent=1 // pred_check
      _
    $region27: #{gru_forward.5} parent=1 // pred_check_branch
      %1472 = sbr.rel (0) target = $region29
    $region28: #{gru_forward.5} parent=1 // pred_region
      _
    $region29: #{gru_forward.5} parent=1 // pred_fallthru
      _
    %1473 = vsyncpa [#allocation3], 1
    %1474 = vsyncpa [#allocation5], 1

// kernel: gru_forward.7
$region0: #{gru_forward.7}
  #allocation0 [shape = 'u32[]', space=smem, size = 0x4, offset = 0x4, fixed_abs, tag = 'smem constant byte address 0x4 - core index']
  #allocation1 [shape = 'u32[144,128]{1,0:T(1,128)}', space=vmem, size = 0x12000, scoped, tag = 'internal scratch']
  %s0 = inlined_call_operand.vmem [shape: f32[8,2,384], index: 0, kind: input, shape index: {}]
  %s1 = inlined_call_operand.vmem [shape: f32[128,384], index: 1, kind: input, shape index: {}]
  %s2 = inlined_call_operand.vmem [shape: f32[1,128], index: 2, kind: input, shape index: {}]
  %s3 = inlined_call_operand.vmem [shape: f32[128,8], index: 3, kind: input, shape index: {}]
  %s4 = inlined_call_operand.vmem [shape: f32[1,8], index: 4, kind: input, shape index: {}]
  %s5 = inlined_call_operand.hbm [shape: f32[2,8], index: 5, kind: output, shape index: {}]
  %s6 = sld [smem:[#allocation0]]
  $region30: #{gru_forward.7} parent=0
    _
  %s8 = ssub.s32 1, %s6
  %s9 = scalar_select 0, %s8, %s6
  $region1: #{gru_forward.7} parent=0
    #allocation2 [shape = 'u8[1024]{0}', space=vmem, size = 0x400, scoped, tag = 'output window, operand 0, single buffered']
    #allocation3 [shape = 's32[1]{0}', space=sflag, size = 0x4, scoped, tag = 'scoped memory for gru_forward.7']
    %10 = vsyncpa [#allocation3], 0
    // Predicated region
    $region2: #{gru_forward.7} parent=1 // pred_check
      _
    $region3: #{gru_forward.7} parent=1 // pred_check_branch
      %12 = sbr.rel (0) target = $region5
    $region4: #{gru_forward.7} parent=1 // pred_region
      _
    $region5: #{gru_forward.7} parent=1 // pred_fallthru
      _
    // Predicated region
    $region6: #{gru_forward.7} parent=1 // pred_check
      _
    $region7: #{gru_forward.7} parent=1 // pred_check_branch
      %14 = sbr.rel (0) target = $region9
    $region8: #{gru_forward.7} parent=1 // pred_region
      _
    $region9: #{gru_forward.7} parent=1 // pred_fallthru
      _
    // Predicated region
    $region10: #{gru_forward.7} parent=1 // pred_check
      _
    $region11: #{gru_forward.7} parent=1 // pred_check_branch
      %16 = sbr.rel (0) target = $region13
    $region12: #{gru_forward.7} parent=1 // pred_region
      _
    $region13: #{gru_forward.7} parent=1 // pred_fallthru
      _
    // Predicated region
    $region14: #{gru_forward.7} parent=1 // pred_check
      _
    $region15: #{gru_forward.7} parent=1 // pred_check_branch
      %18 = sbr.rel (0) target = $region17
    $region16: #{gru_forward.7} parent=1 // pred_region
      _
    $region17: #{gru_forward.7} parent=1 // pred_fallthru
      _
    // Predicated region
    $region18: #{gru_forward.7} parent=1 // pred_check
      _
    $region19: #{gru_forward.7} parent=1 // pred_check_branch
      %20 = sbr.rel (0) target = $region21
    $region20: #{gru_forward.7} parent=1 // pred_region
      _
    $region21: #{gru_forward.7} parent=1 // pred_fallthru
      _
    %v21 = vld [vmem:[%s1] sm:$0xff]
    %v22 = vld [vmem:[%s1 + $0x8] sm:$0xff]
    %v23 = vld [vmem:[%s1 + $0x10] sm:$0xff]
    %v24 = vld [vmem:[%s1 + $0x18] sm:$0xff]
    %v25 = vld [vmem:[%s1 + $0x20] sm:$0xff]
    %v26 = vld [vmem:[%s1 + $0x28] sm:$0xff]
    %v27 = vld [vmem:[%s1 + $0x30] sm:$0xff]
    %v28 = vld [vmem:[%s1 + $0x38] sm:$0xff]
    %v29 = vld [vmem:[%s1 + $0x40] sm:$0xff]
    %v30 = vld [vmem:[%s1 + $0x48] sm:$0xff]
    %v31 = vld [vmem:[%s1 + $0x50] sm:$0xff]
    %v32 = vld [vmem:[%s1 + $0x58] sm:$0xff]
    %v33 = vld [vmem:[%s1 + $0x60] sm:$0xff]
    %v34 = vld [vmem:[%s1 + $0x68] sm:$0xff]
    %v35 = vld [vmem:[%s1 + $0x70] sm:$0xff]
    %v36 = vld [vmem:[%s1 + $0x78] sm:$0xff]
    %v37 = vld [vmem:[%s1 + $0x80] sm:$0xff]
    %v38 = vld [vmem:[%s1 + $0x88] sm:$0xff]
    %v39 = vld [vmem:[%s1 + $0x90] sm:$0xff]
    %v40 = vld [vmem:[%s1 + $0x98] sm:$0xff]
    %v41 = vld [vmem:[%s1 + $0xa0] sm:$0xff]
    %v42 = vld [vmem:[%s1 + $0xa8] sm:$0xff]
    %v43 = vld [vmem:[%s1 + $0xb0] sm:$0xff]
    %v44 = vld [vmem:[%s1 + $0xb8] sm:$0xff]
    %v45 = vld [vmem:[%s1 + $0xc0] sm:$0xff]
    %v46 = vld [vmem:[%s1 + $0xc8] sm:$0xff]
    %v47 = vld [vmem:[%s1 + $0xd0] sm:$0xff]
    %v48 = vld [vmem:[%s1 + $0xd8] sm:$0xff]
    %v49 = vld [vmem:[%s1 + $0xe0] sm:$0xff]
    %v50 = vld [vmem:[%s1 + $0xe8] sm:$0xff]
    %v51 = vld [vmem:[%s1 + $0xf0] sm:$0xff]
    %v52 = vld [vmem:[%s1 + $0xf8] sm:$0xff]
    %v53 = vld [vmem:[%s1 + $0x100] sm:$0xff]
    %v54 = vld [vmem:[%s1 + $0x108] sm:$0xff]
    %v55 = vld [vmem:[%s1 + $0x110] sm:$0xff]
    %v56 = vld [vmem:[%s1 + $0x118] sm:$0xff]
    %v57 = vld [vmem:[%s1 + $0x120] sm:$0xff]
    %v58 = vld [vmem:[%s1 + $0x128] sm:$0xff]
    %v59 = vld [vmem:[%s1 + $0x130] sm:$0xff]
    %v60 = vld [vmem:[%s1 + $0x138] sm:$0xff]
    %v61 = vld [vmem:[%s1 + $0x140] sm:$0xff]
    %v62 = vld [vmem:[%s1 + $0x148] sm:$0xff]
    %v63 = vld [vmem:[%s1 + $0x150] sm:$0xff]
    %v64 = vld [vmem:[%s1 + $0x158] sm:$0xff]
    %v65 = vld [vmem:[%s1 + $0x160] sm:$0xff]
    %v66 = vld [vmem:[%s1 + $0x168] sm:$0xff]
    %v67 = vld [vmem:[%s1 + $0x170] sm:$0xff]
    %v68 = vld [vmem:[%s1 + $0x178] sm:$0xff]
    %v69 = vld [vmem:[%s2] sm:$0x1]
    %v70 = vld [vmem:[%s0] sm:$0x3f]
    %71 = vmatprep.subr.mxu0 %v22
    %72 = vmatpush1.msra.mxu0 %v21
    %73 = vmatprep.subr.mxu0 %v25
    %74 = vmatpush1.msra.mxu0 %v24
    %75 = vmatprep.subr.mxu0 %v28
    %76 = vmatpush1.msra.mxu0 %v27
    %77 = vmatprep.subr.mxu0 %v31
    %78 = vmatpush1.msra.mxu0 %v30
    %79 = vmatprep.subr.mxu0 %v34
    %80 = vmatpush1.msra.mxu0 %v33
    %81 = vmatprep.subr.mxu0 %v37
    %82 = vmatpush1.msra.mxu0 %v36
    %83 = vmatprep.subr.mxu0 %v40
    %84 = vmatpush1.msra.mxu0 %v39
    %85 = vmatprep.subr.mxu0 %v43
    %86 = vmatpush1.msra.mxu0 %v42
    %87 = vmatprep.subr.mxu0 %v46
    %88 = vmatpush1.msra.mxu0 %v45
    %89 = vmatprep.subr.mxu0 %v49
    %90 = vmatpush1.msra.mxu0 %v48
    %91 = vmatprep.subr.mxu0 %v52
    %92 = vmatpush1.msra.mxu0 %v51
    %93 = vmatprep.subr.mxu0 %v55
    %94 = vmatpush1.msra.mxu0 %v54
    %95 = vmatprep.subr.mxu0 %v58
    %96 = vmatpush1.msra.mxu0 %v57
    %97 = vmatprep.subr.mxu0 %v61
    %98 = vmatpush1.msra.mxu0 %v60
    %99 = vmatprep.subr.mxu0 %v64
    %100 = vmatpush1.msra.mxu0 %v63
    %101 = vmatprep.subr.mxu0 %v67
    %102 = vmatpush1.msra.mxu0 %v66
    %103 = vmatprep.subr.mxu0 0.0
    %104 = vmatpush1.msra.mxu0 0.0
    %105 = vmatprep.subr.mxu0 0.0
    %106 = vmatpush1.msra.mxu0 0.0
    %107 = vmatprep.subr.mxu0 0.0
    %108 = vmatpush1.msra.mxu0 0.0
    %109 = vmatprep.subr.mxu0 0.0
    %110 = vmatpush1.msra.mxu0 0.0
    %111 = vmatprep.subr.mxu0 0.0
    %112 = vmatpush1.msra.mxu0 0.0
    %113 = vmatprep.subr.mxu0 0.0
    %114 = vmatpush1.msra.mxu0 0.0
    %115 = vmatprep.subr.mxu0 0.0
    %116 = vmatpush1.msra.mxu0 0.0
    %117 = vmatprep.subr.mxu0 0.0
    %118 = vmatpush1.msra.mxu0 0.0
    %119 = vmatprep.subr.mxu0 0.0
    %120 = vmatpush1.msra.mxu0 0.0
    %121 = vmatprep.subr.mxu0 0.0
    %122 = vmatpush1.msra.mxu0 0.0
    %123 = vmatprep.subr.mxu0 0.0
    %124 = vmatpush1.msra.mxu0 0.0
    %125 = vmatprep.subr.mxu0 0.0
    %126 = vmatpush1.msra.mxu0 0.0
    %127 = vmatprep.subr.mxu0 0.0
    %128 = vmatpush1.msra.mxu0 0.0
    %129 = vmatprep.subr.mxu0 0.0
    %130 = vmatpush1.msra.mxu0 0.0
    %131 = vmatprep.subr.mxu0 0.0
    %132 = vmatpush1.msra.mxu0 0.0
    %133 = vmatprep.subr.mxu0 0.0
    %134 = vmatpush1.msra.mxu0 0.0
    %135 = vmatprep.mubr.f32.mxu0 0.0
    %136 = vmatmul.mubr.f32.gmra.mrb[0].mxu0 0.0
    %v137 = vpop.f32.mrb[0].mxu0
    %v138 = vadd.f32 0.0, %v137
    %v139 = vpop.f32.mrb[0].mxu0
    %v140 = vadd.f32 0.0, %v139
    %141 = vdwg.mxu0
    %142 = vmatprep.subr.mxu0 0.0
    %143 = vmatpush1.msra.mxu0 %v23
    %144 = vmatprep.subr.mxu0 0.0
    %145 = vmatpush1.msra.mxu0 %v26
    %146 = vmatprep.subr.mxu0 0.0
    %147 = vmatpush1.msra.mxu0 %v29
    %148 = vmatprep.subr.mxu0 0.0
    %149 = vmatpush1.msra.mxu0 %v32
    %150 = vmatprep.subr.mxu0 0.0
    %151 = vmatpush1.msra.mxu0 %v35
    %152 = vmatprep.subr.mxu0 0.0
    %153 = vmatpush1.msra.mxu0 %v38
    %154 = vmatprep.subr.mxu0 0.0
    %155 = vmatpush1.msra.mxu0 %v41
    %156 = vmatprep.subr.mxu0 0.0
    %157 = vmatpush1.msra.mxu0 %v44
    %158 = vmatprep.subr.mxu0 0.0
    %159 = vmatpush1.msra.mxu0 %v47
    %160 = vmatprep.subr.mxu0 0.0
    %161 = vmatpush1.msra.mxu0 %v50
    %162 = vmatprep.subr.mxu0 0.0
    %163 = vmatpush1.msra.mxu0 %v53
    %164 = vmatprep.subr.mxu0 0.0
    %165 = vmatpush1.msra.mxu0 %v56
    %166 = vmatprep.subr.mxu0 0.0
    %167 = vmatpush1.msra.mxu0 %v59
    %168 = vmatprep.subr.mxu0 0.0
    %169 = vmatpush1.msra.mxu0 %v62
    %170 = vmatprep.subr.mxu0 0.0
    %171 = vmatpush1.msra.mxu0 %v65
    %172 = vmatprep.subr.mxu0 0.0
    %173 = vmatpush1.msra.mxu0 %v68
    %174 = vmatprep.subr.mxu0 0.0
    %175 = vmatpush1.msra.mxu0 0.0
    %176 = vmatprep.subr.mxu0 0.0
    %177 = vmatpush1.msra.mxu0 0.0
    %178 = vmatprep.subr.mxu0 0.0
    %179 = vmatpush1.msra.mxu0 0.0
    %180 = vmatprep.subr.mxu0 0.0
    %181 = vmatpush1.msra.mxu0 0.0
    %182 = vmatprep.subr.mxu0 0.0
    %183 = vmatpush1.msra.mxu0 0.0
    %184 = vmatprep.subr.mxu0 0.0
    %185 = vmatpush1.msra.mxu0 0.0
    %186 = vmatprep.subr.mxu0 0.0
    %187 = vmatpush1.msra.mxu0 0.0
    %188 = vmatprep.subr.mxu0 0.0
    %189 = vmatpush1.msra.mxu0 0.0
    %190 = vmatprep.subr.mxu0 0.0
    %191 = vmatpush1.msra.mxu0 0.0
    %192 = vmatprep.subr.mxu0 0.0
    %193 = vmatpush1.msra.mxu0 0.0
    %194 = vmatprep.subr.mxu0 0.0
    %195 = vmatpush1.msra.mxu0 0.0
    %196 = vmatprep.subr.mxu0 0.0
    %197 = vmatpush1.msra.mxu0 0.0
    %198 = vmatprep.subr.mxu0 0.0
    %199 = vmatpush1.msra.mxu0 0.0
    %200 = vmatprep.subr.mxu0 0.0
    %201 = vmatpush1.msra.mxu0 0.0
    %202 = vmatprep.subr.mxu0 0.0
    %203 = vmatpush1.msra.mxu0 0.0
    %204 = vmatprep.subr.mxu0 0.0
    %205 = vmatpush1.msra.mxu0 0.0
    %206 = vmatprep.mubr.f32.mxu0 0.0
    %207 = vmatmul.mubr.f32.gmra.mrb[0].mxu0 0.0
    %v208 = vpop.f32.mrb[0].mxu0
    %v209 = vadd.f32 0.0, %v208
    %v210 = vpop.f32.mrb[0].mxu0
    %211 = vdwg.mxu0
    %v212 = vadd.f32 %v70, %v138
    %v213 = vxor.u32 %v212, 2147483648
    %v214 = vmul.f32 %v213, 1.442695
    %v215 = vpow.pop %v214
    %v216 = vadd.f32 %v215, 1.0
    %v217 = vrcp.pop %v216
    %v218 = vmul.f32 1.0, %v217
    %v220 = vrot.slane %v70, 2
    %v222 = vadd.f32 %v220, %v140
    %v223 = vxor.u32 %v222, 2147483648
    %v224 = vmul.f32 %v223, 1.442695
    %v225 = vpow.pop %v224
    %v226 = vadd.f32 %v225, 1.0
    %v227 = vrcp.pop %v226
    %v228 = vmul.f32 1.0, %v227
    %v230 = vlaneseq
    %v231 = vshrl.u32 %v230, 7
    %v232 = vsub.s32 0, %v231
    %v233 = vrot.slane %v69, %v232
    %v235 = vadd.f32 %v209, %v233
    %v236 = vmul.f32 %v218, %v235
    %v237 = vrot.slane %v70, 4
    %v239 = vadd.f32 %v237, %v236
    %v240 = vtanh.pop %v239
    %v241 = vsub.f32 1.0, %v228
    %v242 = vmul.f32 %v241, %v240
    %v243 = vmul.f32 %v228, 0.0
    %v244 = vadd.f32 %v242, %v243
    %s245 = scalar_lea.vmem %s0, 6
    %v246 = vld [vmem:[%s245] sm:$0x3f]
    %247 = vmatprep.subr.mxu0 %v22
    %248 = vmatpush1.msra.mxu0 %v21
    %249 = vmatprep.subr.mxu0 %v25
    %250 = vmatpush1.msra.mxu0 %v24
    %251 = vmatprep.subr.mxu0 %v28
    %252 = vmatpush1.msra.mxu0 %v27
    %253 = vmatprep.subr.mxu0 %v31
    %254 = vmatpush1.msra.mxu0 %v30
    %255 = vmatprep.subr.mxu0 %v34
    %256 = vmatpush1.msra.mxu0 %v33
    %257 = vmatprep.subr.mxu0 %v37
    %258 = vmatpush1.msra.mxu0 %v36
    %259 = vmatprep.subr.mxu0 %v40
    %260 = vmatpush1.msra.mxu0 %v39
    %261 = vmatprep.subr.mxu0 %v43
    %262 = vmatpush1.msra.mxu0 %v42
    %263 = vmatprep.subr.mxu0 %v46
    %264 = vmatpush1.msra.mxu0 %v45
    %265 = vmatprep.subr.mxu0 %v49
    %266 = vmatpush1.msra.mxu0 %v48
    %267 = vmatprep.subr.mxu0 %v52
    %268 = vmatpush1.msra.mxu0 %v51
    %269 = vmatprep.subr.mxu0 %v55
    %270 = vmatpush1.msra.mxu0 %v54
    %271 = vmatprep.subr.mxu0 %v58
    %272 = vmatpush1.msra.mxu0 %v57
    %273 = vmatprep.subr.mxu0 %v61
    %274 = vmatpush1.msra.mxu0 %v60
    %275 = vmatprep.subr.mxu0 %v64
    %276 = vmatpush1.msra.mxu0 %v63
    %277 = vmatprep.subr.mxu0 %v67
    %278 = vmatpush1.msra.mxu0 %v66
    %279 = vmatprep.subr.mxu0 0.0
    %280 = vmatpush1.msra.mxu0 0.0
    %281 = vmatprep.subr.mxu0 0.0
    %282 = vmatpush1.msra.mxu0 0.0
    %283 = vmatprep.subr.mxu0 0.0
    %284 = vmatpush1.msra.mxu0 0.0
    %285 = vmatprep.subr.mxu0 0.0
    %286 = vmatpush1.msra.mxu0 0.0
    %287 = vmatprep.subr.mxu0 0.0
    %288 = vmatpush1.msra.mxu0 0.0
    %289 = vmatprep.subr.mxu0 0.0
    %290 = vmatpush1.msra.mxu0 0.0
    %291 = vmatprep.subr.mxu0 0.0
    %292 = vmatpush1.msra.mxu0 0.0
    %293 = vmatprep.subr.mxu0 0.0
    %294 = vmatpush1.msra.mxu0 0.0
    %295 = vmatprep.subr.mxu0 0.0
    %296 = vmatpush1.msra.mxu0 0.0
    %297 = vmatprep.subr.mxu0 0.0
    %298 = vmatpush1.msra.mxu0 0.0
    %299 = vmatprep.subr.mxu0 0.0
    %300 = vmatpush1.msra.mxu0 0.0
    %301 = vmatprep.subr.mxu0 0.0
    %302 = vmatpush1.msra.mxu0 0.0
    %303 = vmatprep.subr.mxu0 0.0
    %304 = vmatpush1.msra.mxu0 0.0
    %305 = vmatprep.subr.mxu0 0.0
    %306 = vmatpush1.msra.mxu0 0.0
    %307 = vmatprep.subr.mxu0 0.0
    %308 = vmatpush1.msra.mxu0 0.0
    %309 = vmatprep.subr.mxu0 0.0
    %310 = vmatpush1.msra.mxu0 0.0
    %311 = vmatprep.mubr.f32.mxu0 0.0
    %312 = vmatmul.mubr.f32.gmra.mrb[0].mxu0 %v244
    %v313 = vpop.f32.mrb[0].mxu0
    %v314 = vadd.f32 0.0, %v313
    %v315 = vpop.f32.mrb[0].mxu0
    %v316 = vadd.f32 0.0, %v315
    %317 = vdwg.mxu0
    %318 = vmatprep.subr.mxu0 0.0
    %319 = vmatpush1.msra.mxu0 %v23
    %320 = vmatprep.subr.mxu0 0.0
    %321 = vmatpush1.msra.mxu0 %v26
    %322 = vmatprep.subr.mxu0 0.0
    %323 = vmatpush1.msra.mxu0 %v29
    %324 = vmatprep.subr.mxu0 0.0
    %325 = vmatpush1.msra.mxu0 %v32
    %326 = vmatprep.subr.mxu0 0.0
    %327 = vmatpush1.msra.mxu0 %v35
    %328 = vmatprep.subr.mxu0 0.0
    %329 = vmatpush1.msra.mxu0 %v38
    %330 = vmatprep.subr.mxu0 0.0
    %331 = vmatpush1.msra.mxu0 %v41
    %332 = vmatprep.subr.mxu0 0.0
    %333 = vmatpush1.msra.mxu0 %v44
    %334 = vmatprep.subr.mxu0 0.0
    %335 = vmatpush1.msra.mxu0 %v47
    %336 = vmatprep.subr.mxu0 0.0
    %337 = vmatpush1.msra.mxu0 %v50
    %338 = vmatprep.subr.mxu0 0.0
    %339 = vmatpush1.msra.mxu0 %v53
    %340 = vmatprep.subr.mxu0 0.0
    %341 = vmatpush1.msra.mxu0 %v56
    %342 = vmatprep.subr.mxu0 0.0
    %343 = vmatpush1.msra.mxu0 %v59
    %344 = vmatprep.subr.mxu0 0.0
    %345 = vmatpush1.msra.mxu0 %v62
    %346 = vmatprep.subr.mxu0 0.0
    %347 = vmatpush1.msra.mxu0 %v65
    %348 = vmatprep.subr.mxu0 0.0
    %349 = vmatpush1.msra.mxu0 %v68
    %350 = vmatprep.subr.mxu0 0.0
    %351 = vmatpush1.msra.mxu0 0.0
    %352 = vmatprep.subr.mxu0 0.0
    %353 = vmatpush1.msra.mxu0 0.0
    %354 = vmatprep.subr.mxu0 0.0
    %355 = vmatpush1.msra.mxu0 0.0
    %356 = vmatprep.subr.mxu0 0.0
    %357 = vmatpush1.msra.mxu0 0.0
    %358 = vmatprep.subr.mxu0 0.0
    %359 = vmatpush1.msra.mxu0 0.0
    %360 = vmatprep.subr.mxu0 0.0
    %361 = vmatpush1.msra.mxu0 0.0
    %362 = vmatprep.subr.mxu0 0.0
    %363 = vmatpush1.msra.mxu0 0.0
    %364 = vmatprep.subr.mxu0 0.0
    %365 = vmatpush1.msra.mxu0 0.0
    %366 = vmatprep.subr.mxu0 0.0
    %367 = vmatpush1.msra.mxu0 0.0
    %368 = vmatprep.subr.mxu0 0.0
    %369 = vmatpush1.msra.mxu0 0.0
    %370 = vmatprep.subr.mxu0 0.0
    %371 = vmatpush1.msra.mxu0 0.0
    %372 = vmatprep.subr.mxu0 0.0
    %373 = vmatpush1.msra.mxu0 0.0
    %374 = vmatprep.subr.mxu0 0.0
    %375 = vmatpush1.msra.mxu0 0.0
    %376 = vmatprep.subr.mxu0 0.0
    %377 = vmatpush1.msra.mxu0 0.0
    %378 = vmatprep.subr.mxu0 0.0
    %379 = vmatpush1.msra.mxu0 0.0
    %380 = vmatprep.subr.mxu0 0.0
    %381 = vmatpush1.msra.mxu0 0.0
    %382 = vmatprep.mubr.f32.mxu0 0.0
    %383 = vmatmul.mubr.f32.gmra.mrb[0].mxu0 %v244
    %v384 = vpop.f32.mrb[0].mxu0
    %v385 = vadd.f32 0.0, %v384
    %v386 = vpop.f32.mrb[0].mxu0
    %387 = vdwg.mxu0
    %v388 = vadd.f32 %v246, %v314
    %v389 = vxor.u32 %v388, 2147483648
    %v390 = vmul.f32 %v389, 1.442695
    %v391 = vpow.pop %v390
    %v392 = vadd.f32 %v391, 1.0
    %v393 = vrcp.pop %v392
    %v394 = vmul.f32 1.0, %v393
    %v396 = vrot.slane %v246, 2
    %v398 = vadd.f32 %v396, %v316
    %v399 = vxor.u32 %v398, 2147483648
    %v400 = vmul.f32 %v399, 1.442695
    %v401 = vpow.pop %v400
    %v402 = vadd.f32 %v401, 1.0
    %v403 = vrcp.pop %v402
    %v404 = vmul.f32 1.0, %v403
    %v405 = vadd.f32 %v385, %v233
    %v406 = vmul.f32 %v394, %v405
    %v407 = vrot.slane %v246, 4
    %v409 = vadd.f32 %v407, %v406
    %v410 = vtanh.pop %v409
    %v411 = vsub.f32 1.0, %v404
    %v412 = vmul.f32 %v411, %v410
    %v413 = vmul.f32 %v404, %v244
    %v414 = vadd.f32 %v412, %v413
    %s415 = scalar_lea.vmem %s0, 12
    %v416 = vld [vmem:[%s415] sm:$0x3f]
    %417 = vmatprep.subr.mxu0 %v22
    %418 = vmatpush1.msra.mxu0 %v21
    %419 = vmatprep.subr.mxu0 %v25
    %420 = vmatpush1.msra.mxu0 %v24
    %421 = vmatprep.subr.mxu0 %v28
    %422 = vmatpush1.msra.mxu0 %v27
    %423 = vmatprep.subr.mxu0 %v31
    %424 = vmatpush1.msra.mxu0 %v30
    %425 = vmatprep.subr.mxu0 %v34
    %426 = vmatpush1.msra.mxu0 %v33
    %427 = vmatprep.subr.mxu0 %v37
    %428 = vmatpush1.msra.mxu0 %v36
    %429 = vmatprep.subr.mxu0 %v40
    %430 = vmatpush1.msra.mxu0 %v39
    %431 = vmatprep.subr.mxu0 %v43
    %432 = vmatpush1.msra.mxu0 %v42
    %433 = vmatprep.subr.mxu0 %v46
    %434 = vmatpush1.msra.mxu0 %v45
    %435 = vmatprep.subr.mxu0 %v49
    %436 = vmatpush1.msra.mxu0 %v48
    %437 = vmatprep.subr.mxu0 %v52
    %438 = vmatpush1.msra.mxu0 %v51
    %439 = vmatprep.subr.mxu0 %v55
    %440 = vmatpush1.msra.mxu0 %v54
    %441 = vmatprep.subr.mxu0 %v58
    %442 = vmatpush1.msra.mxu0 %v57
    %443 = vmatprep.subr.mxu0 %v61
    %444 = vmatpush1.msra.mxu0 %v60
    %445 = vmatprep.subr.mxu0 %v64
    %446 = vmatpush1.msra.mxu0 %v63
    %447 = vmatprep.subr.mxu0 %v67
    %448 = vmatpush1.msra.mxu0 %v66
    %449 = vmatprep.subr.mxu0 0.0
    %450 = vmatpush1.msra.mxu0 0.0
    %451 = vmatprep.subr.mxu0 0.0
    %452 = vmatpush1.msra.mxu0 0.0
    %453 = vmatprep.subr.mxu0 0.0
    %454 = vmatpush1.msra.mxu0 0.0
    %455 = vmatprep.subr.mxu0 0.0
    %456 = vmatpush1.msra.mxu0 0.0
    %457 = vmatprep.subr.mxu0 0.0
    %458 = vmatpush1.msra.mxu0 0.0
    %459 = vmatprep.subr.mxu0 0.0
    %460 = vmatpush1.msra.mxu0 0.0
    %461 = vmatprep.subr.mxu0 0.0
    %462 = vmatpush1.msra.mxu0 0.0
    %463 = vmatprep.subr.mxu0 0.0
    %464 = vmatpush1.msra.mxu0 0.0
    %465 = vmatprep.subr.mxu0 0.0
    %466 = vmatpush1.msra.mxu0 0.0
    %467 = vmatprep.subr.mxu0 0.0
    %468 = vmatpush1.msra.mxu0 0.0
    %469 = vmatprep.subr.mxu0 0.0
    %470 = vmatpush1.msra.mxu0 0.0
    %471 = vmatprep.subr.mxu0 0.0
    %472 = vmatpush1.msra.mxu0 0.0
    %473 = vmatprep.subr.mxu0 0.0
    %474 = vmatpush1.msra.mxu0 0.0
    %475 = vmatprep.subr.mxu0 0.0
    %476 = vmatpush1.msra.mxu0 0.0
    %477 = vmatprep.subr.mxu0 0.0
    %478 = vmatpush1.msra.mxu0 0.0
    %479 = vmatprep.subr.mxu0 0.0
    %480 = vmatpush1.msra.mxu0 0.0
    %481 = vmatprep.mubr.f32.mxu0 0.0
    %482 = vmatmul.mubr.f32.gmra.mrb[0].mxu0 %v414
    %v483 = vpop.f32.mrb[0].mxu0
    %v484 = vadd.f32 0.0, %v483
    %v485 = vpop.f32.mrb[0].mxu0
    %v486 = vadd.f32 0.0, %v485
    %487 = vdwg.mxu0
    %488 = vmatprep.subr.mxu0 0.0
    %489 = vmatpush1.msra.mxu0 %v23
    %490 = vmatprep.subr.mxu0 0.0
    %491 = vmatpush1.msra.mxu0 %v26
    %492 = vmatprep.subr.mxu0 0.0
    %493 = vmatpush1.msra.mxu0 %v29
    %494 = vmatprep.subr.mxu0 0.0
    %495 = vmatpush1.msra.mxu0 %v32
    %496 = vmatprep.subr.mxu0 0.0
    %497 = vmatpush1.msra.mxu0 %v35
    %498 = vmatprep.subr.mxu0 0.0
    %499 = vmatpush1.msra.mxu0 %v38
    %500 = vmatprep.subr.mxu0 0.0
    %501 = vmatpush1.msra.mxu0 %v41
    %502 = vmatprep.subr.mxu0 0.0
    %503 = vmatpush1.msra.mxu0 %v44
    %504 = vmatprep.subr.mxu0 0.0
    %505 = vmatpush1.msra.mxu0 %v47
    %506 = vmatprep.subr.mxu0 0.0
    %507 = vmatpush1.msra.mxu0 %v50
    %508 = vmatprep.subr.mxu0 0.0
    %509 = vmatpush1.msra.mxu0 %v53
    %510 = vmatprep.subr.mxu0 0.0
    %511 = vmatpush1.msra.mxu0 %v56
    %512 = vmatprep.subr.mxu0 0.0
    %513 = vmatpush1.msra.mxu0 %v59
    %514 = vmatprep.subr.mxu0 0.0
    %515 = vmatpush1.msra.mxu0 %v62
    %516 = vmatprep.subr.mxu0 0.0
    %517 = vmatpush1.msra.mxu0 %v65
    %518 = vmatprep.subr.mxu0 0.0
    %519 = vmatpush1.msra.mxu0 %v68
    %520 = vmatprep.subr.mxu0 0.0
    %521 = vmatpush1.msra.mxu0 0.0
    %522 = vmatprep.subr.mxu0 0.0
    %523 = vmatpush1.msra.mxu0 0.0
    %524 = vmatprep.subr.mxu0 0.0
    %525 = vmatpush1.msra.mxu0 0.0
    %526 = vmatprep.subr.mxu0 0.0
    %527 = vmatpush1.msra.mxu0 0.0
    %528 = vmatprep.subr.mxu0 0.0
    %529 = vmatpush1.msra.mxu0 0.0
    %530 = vmatprep.subr.mxu0 0.0
    %531 = vmatpush1.msra.mxu0 0.0
    %532 = vmatprep.subr.mxu0 0.0
    %533 = vmatpush1.msra.mxu0 0.0
    %534 = vmatprep.subr.mxu0 0.0
    %535 = vmatpush1.msra.mxu0 0.0
    %536 = vmatprep.subr.mxu0 0.0
    %537 = vmatpush1.msra.mxu0 0.0
    %538 = vmatprep.subr.mxu0 0.0
    %539 = vmatpush1.msra.mxu0 0.0
    %540 = vmatprep.subr.mxu0 0.0
    %541 = vmatpush1.msra.mxu0 0.0
    %542 = vmatprep.subr.mxu0 0.0
    %543 = vmatpush1.msra.mxu0 0.0
    %544 = vmatprep.subr.mxu0 0.0
    %545 = vmatpush1.msra.mxu0 0.0
    %546 = vmatprep.subr.mxu0 0.0
    %547 = vmatpush1.msra.mxu0 0.0
    %548 = vmatprep.subr.mxu0 0.0
    %549 = vmatpush1.msra.mxu0 0.0
    %550 = vmatprep.subr.mxu0 0.0
    %551 = vmatpush1.msra.mxu0 0.0
    %552 = vmatprep.mubr.f32.mxu0 0.0
    %553 = vmatmul.mubr.f32.gmra.mrb[0].mxu0 %v414
    %v554 = vpop.f32.mrb[0].mxu0
    %v555 = vadd.f32 0.0, %v554
    %v556 = vpop.f32.mrb[0].mxu0
    %557 = vdwg.mxu0
    %v558 = vadd.f32 %v416, %v484
    %v559 = vxor.u32 %v558, 2147483648
    %v560 = vmul.f32 %v559, 1.442695
    %v561 = vpow.pop %v560
    %v562 = vadd.f32 %v561, 1.0
    %v563 = vrcp.pop %v562
    %v564 = vmul.f32 1.0, %v563
    %v566 = vrot.slane %v416, 2
    %v568 = vadd.f32 %v566, %v486
    %v569 = vxor.u32 %v568, 2147483648
    %v570 = vmul.f32 %v569, 1.442695
    %v571 = vpow.pop %v570
    %v572 = vadd.f32 %v571, 1.0
    %v573 = vrcp.pop %v572
    %v574 = vmul.f32 1.0, %v573
    %v575 = vadd.f32 %v555, %v233
    %v576 = vmul.f32 %v564, %v575
    %v577 = vrot.slane %v416, 4
    %v579 = vadd.f32 %v577, %v576
    %v580 = vtanh.pop %v579
    %v581 = vsub.f32 1.0, %v574
    %v582 = vmul.f32 %v581, %v580
    %v583 = vmul.f32 %v574, %v414
    %v584 = vadd.f32 %v582, %v583
    %s585 = scalar_lea.vmem %s0, 18
    %v586 = vld [vmem:[%s585] sm:$0x3f]
    %587 = vmatprep.subr.mxu0 %v22
    %588 = vmatpush1.msra.mxu0 %v21
    %589 = vmatprep.subr.mxu0 %v25
    %590 = vmatpush1.msra.mxu0 %v24
    %591 = vmatprep.subr.mxu0 %v28
    %592 = vmatpush1.msra.mxu0 %v27
    %593 = vmatprep.subr.mxu0 %v31
    %594 = vmatpush1.msra.mxu0 %v30
    %595 = vmatprep.subr.mxu0 %v34
    %596 = vmatpush1.msra.mxu0 %v33
    %597 = vmatprep.subr.mxu0 %v37
    %598 = vmatpush1.msra.mxu0 %v36
    %599 = vmatprep.subr.mxu0 %v40
    %600 = vmatpush1.msra.mxu0 %v39
    %601 = vmatprep.subr.mxu0 %v43
    %602 = vmatpush1.msra.mxu0 %v42
    %603 = vmatprep.subr.mxu0 %v46
    %604 = vmatpush1.msra.mxu0 %v45
    %605 = vmatprep.subr.mxu0 %v49
    %606 = vmatpush1.msra.mxu0 %v48
    %607 = vmatprep.subr.mxu0 %v52
    %608 = vmatpush1.msra.mxu0 %v51
    %609 = vmatprep.subr.mxu0 %v55
    %610 = vmatpush1.msra.mxu0 %v54
    %611 = vmatprep.subr.mxu0 %v58
    %612 = vmatpush1.msra.mxu0 %v57
    %613 = vmatprep.subr.mxu0 %v61
    %614 = vmatpush1.msra.mxu0 %v60
    %615 = vmatprep.subr.mxu0 %v64
    %616 = vmatpush1.msra.mxu0 %v63
    %617 = vmatprep.subr.mxu0 %v67
    %618 = vmatpush1.msra.mxu0 %v66
    %619 = vmatprep.subr.mxu0 0.0
    %620 = vmatpush1.msra.mxu0 0.0
    %621 = vmatprep.subr.mxu0 0.0
    %622 = vmatpush1.msra.mxu0 0.0
    %623 = vmatprep.subr.mxu0 0.0
    %624 = vmatpush1.msra.mxu0 0.0
    %625 = vmatprep.subr.mxu0 0.0
    %626 = vmatpush1.msra.mxu0 0.0
    %627 = vmatprep.subr.mxu0 0.0
    %628 = vmatpush1.msra.mxu0 0.0
    %629 = vmatprep.subr.mxu0 0.0
    %630 = vmatpush1.msra.mxu0 0.0
    %631 = vmatprep.subr.mxu0 0.0
    %632 = vmatpush1.msra.mxu0 0.0
    %633 = vmatprep.subr.mxu0 0.0
    %634 = vmatpush1.msra.mxu0 0.0
    %635 = vmatprep.subr.mxu0 0.0
    %636 = vmatpush1.msra.mxu0 0.0
    %637 = vmatprep.subr.mxu0 0.0
    %638 = vmatpush1.msra.mxu0 0.0
    %639 = vmatprep.subr.mxu0 0.0
    %640 = vmatpush1.msra.mxu0 0.0
    %641 = vmatprep.subr.mxu0 0.0
    %642 = vmatpush1.msra.mxu0 0.0
    %643 = vmatprep.subr.mxu0 0.0
    %644 = vmatpush1.msra.mxu0 0.0
    %645 = vmatprep.subr.mxu0 0.0
    %646 = vmatpush1.msra.mxu0 0.0
    %647 = vmatprep.subr.mxu0 0.0
    %648 = vmatpush1.msra.mxu0 0.0
    %649 = vmatprep.subr.mxu0 0.0
    %650 = vmatpush1.msra.mxu0 0.0
    %651 = vmatprep.mubr.f32.mxu0 0.0
    %652 = vmatmul.mubr.f32.gmra.mrb[0].mxu0 %v584
    %v653 = vpop.f32.mrb[0].mxu0
    %v654 = vadd.f32 0.0, %v653
    %v655 = vpop.f32.mrb[0].mxu0
    %v656 = vadd.f32 0.0, %v655
    %657 = vdwg.mxu0
    %658 = vmatprep.subr.mxu0 0.0
    %659 = vmatpush1.msra.mxu0 %v23
    %660 = vmatprep.subr.mxu0 0.0
    %661 = vmatpush1.msra.mxu0 %v26
    %662 = vmatprep.subr.mxu0 0.0
    %663 = vmatpush1.msra.mxu0 %v29
    %664 = vmatprep.subr.mxu0 0.0
    %665 = vmatpush1.msra.mxu0 %v32
    %666 = vmatprep.subr.mxu0 0.0
    %667 = vmatpush1.msra.mxu0 %v35
    %668 = vmatprep.subr.mxu0 0.0
    %669 = vmatpush1.msra.mxu0 %v38
    %670 = vmatprep.subr.mxu0 0.0
    %671 = vmatpush1.msra.mxu0 %v41
    %672 = vmatprep.subr.mxu0 0.0
    %673 = vmatpush1.msra.mxu0 %v44
    %674 = vmatprep.subr.mxu0 0.0
    %675 = vmatpush1.msra.mxu0 %v47
    %676 = vmatprep.subr.mxu0 0.0
    %677 = vmatpush1.msra.mxu0 %v50
    %678 = vmatprep.subr.mxu0 0.0
    %679 = vmatpush1.msra.mxu0 %v53
    %680 = vmatprep.subr.mxu0 0.0
    %681 = vmatpush1.msra.mxu0 %v56
    %682 = vmatprep.subr.mxu0 0.0
    %683 = vmatpush1.msra.mxu0 %v59
    %684 = vmatprep.subr.mxu0 0.0
    %685 = vmatpush1.msra.mxu0 %v62
    %686 = vmatprep.subr.mxu0 0.0
    %687 = vmatpush1.msra.mxu0 %v65
    %688 = vmatprep.subr.mxu0 0.0
    %689 = vmatpush1.msra.mxu0 %v68
    %690 = vmatprep.subr.mxu0 0.0
    %691 = vmatpush1.msra.mxu0 0.0
    %692 = vmatprep.subr.mxu0 0.0
    %693 = vmatpush1.msra.mxu0 0.0
    %694 = vmatprep.subr.mxu0 0.0
    %695 = vmatpush1.msra.mxu0 0.0
    %696 = vmatprep.subr.mxu0 0.0
    %697 = vmatpush1.msra.mxu0 0.0
    %698 = vmatprep.subr.mxu0 0.0
    %699 = vmatpush1.msra.mxu0 0.0
    %700 = vmatprep.subr.mxu0 0.0
    %701 = vmatpush1.msra.mxu0 0.0
    %702 = vmatprep.subr.mxu0 0.0
    %703 = vmatpush1.msra.mxu0 0.0
    %704 = vmatprep.subr.mxu0 0.0
    %705 = vmatpush1.msra.mxu0 0.0
    %706 = vmatprep.subr.mxu0 0.0
    %707 = vmatpush1.msra.mxu0 0.0
    %708 = vmatprep.subr.mxu0 0.0
    %709 = vmatpush1.msra.mxu0 0.0
    %710 = vmatprep.subr.mxu0 0.0
    %711 = vmatpush1.msra.mxu0 0.0
    %712 = vmatprep.subr.mxu0 0.0
    %713 = vmatpush1.msra.mxu0 0.0
    %714 = vmatprep.subr.mxu0 0.0
    %715 = vmatpush1.msra.mxu0 0.0
    %716 = vmatprep.subr.mxu0 0.0
    %717 = vmatpush1.msra.mxu0 0.0
    %718 = vmatprep.subr.mxu0 0.0
    %719 = vmatpush1.msra.mxu0 0.0
    %720 = vmatprep.subr.mxu0 0.0
    %721 = vmatpush1.msra.mxu0 0.0
    %722 = vmatprep.mubr.f32.mxu0 0.0
    %723 = vmatmul.mubr.f32.gmra.mrb[0].mxu0 %v584
    %v724 = vpop.f32.mrb[0].mxu0
    %v725 = vadd.f32 0.0, %v724
    %v726 = vpop.f32.mrb[0].mxu0
    %727 = vdwg.mxu0
    %v728 = vadd.f32 %v586, %v654
    %v729 = vxor.u32 %v728, 2147483648
    %v730 = vmul.f32 %v729, 1.442695
    %v731 = vpow.pop %v730
    %v732 = vadd.f32 %v731, 1.0
    %v733 = vrcp.pop %v732
    %v734 = vmul.f32 1.0, %v733
    %v736 = vrot.slane %v586, 2
    %v738 = vadd.f32 %v736, %v656
    %v739 = vxor.u32 %v738, 2147483648
    %v740 = vmul.f32 %v739, 1.442695
    %v741 = vpow.pop %v740
    %v742 = vadd.f32 %v741, 1.0
    %v743 = vrcp.pop %v742
    %v744 = vmul.f32 1.0, %v743
    %v745 = vadd.f32 %v725, %v233
    %v746 = vmul.f32 %v734, %v745
    %v747 = vrot.slane %v586, 4
    %v749 = vadd.f32 %v747, %v746
    %v750 = vtanh.pop %v749
    %v751 = vsub.f32 1.0, %v744
    %v752 = vmul.f32 %v751, %v750
    %v753 = vmul.f32 %v744, %v584
    %v754 = vadd.f32 %v752, %v753
    %s755 = scalar_lea.vmem %s0, 24
    %v756 = vld [vmem:[%s755] sm:$0x3f]
    %757 = vmatprep.subr.mxu0 %v22
    %758 = vmatpush1.msra.mxu0 %v21
    %759 = vmatprep.subr.mxu0 %v25
    %760 = vmatpush1.msra.mxu0 %v24
    %761 = vmatprep.subr.mxu0 %v28
    %762 = vmatpush1.msra.mxu0 %v27
    %763 = vmatprep.subr.mxu0 %v31
    %764 = vmatpush1.msra.mxu0 %v30
    %765 = vmatprep.subr.mxu0 %v34
    %766 = vmatpush1.msra.mxu0 %v33
    %767 = vmatprep.subr.mxu0 %v37
    %768 = vmatpush1.msra.mxu0 %v36
    %769 = vmatprep.subr.mxu0 %v40
    %770 = vmatpush1.msra.mxu0 %v39
    %771 = vmatprep.subr.mxu0 %v43
    %772 = vmatpush1.msra.mxu0 %v42
    %773 = vmatprep.subr.mxu0 %v46
    %774 = vmatpush1.msra.mxu0 %v45
    %775 = vmatprep.subr.mxu0 %v49
    %776 = vmatpush1.msra.mxu0 %v48
    %777 = vmatprep.subr.mxu0 %v52
    %778 = vmatpush1.msra.mxu0 %v51
    %779 = vmatprep.subr.mxu0 %v55
    %780 = vmatpush1.msra.mxu0 %v54
    %781 = vmatprep.subr.mxu0 %v58
    %782 = vmatpush1.msra.mxu0 %v57
    %783 = vmatprep.subr.mxu0 %v61
    %784 = vmatpush1.msra.mxu0 %v60
    %785 = vmatprep.subr.mxu0 %v64
    %786 = vmatpush1.msra.mxu0 %v63
    %787 = vmatprep.subr.mxu0 %v67
    %788 = vmatpush1.msra.mxu0 %v66
    %789 = vmatprep.subr.mxu0 0.0
    %790 = vmatpush1.msra.mxu0 0.0
    %791 = vmatprep.subr.mxu0 0.0
    %792 = vmatpush1.msra.mxu0 0.0
    %793 = vmatprep.subr.mxu0 0.0
    %794 = vmatpush1.msra.mxu0 0.0
    %795 = vmatprep.subr.mxu0 0.0
    %796 = vmatpush1.msra.mxu0 0.0
    %797 = vmatprep.subr.mxu0 0.0
    %798 = vmatpush1.msra.mxu0 0.0
    %799 = vmatprep.subr.mxu0 0.0
    %800 = vmatpush1.msra.mxu0 0.0
    %801 = vmatprep.subr.mxu0 0.0
    %802 = vmatpush1.msra.mxu0 0.0
    %803 = vmatprep.subr.mxu0 0.0
    %804 = vmatpush1.msra.mxu0 0.0
    %805 = vmatprep.subr.mxu0 0.0
    %806 = vmatpush1.msra.mxu0 0.0
    %807 = vmatprep.subr.mxu0 0.0
    %808 = vmatpush1.msra.mxu0 0.0
    %809 = vmatprep.subr.mxu0 0.0
    %810 = vmatpush1.msra.mxu0 0.0
    %811 = vmatprep.subr.mxu0 0.0
    %812 = vmatpush1.msra.mxu0 0.0
    %813 = vmatprep.subr.mxu0 0.0
    %814 = vmatpush1.msra.mxu0 0.0
    %815 = vmatprep.subr.mxu0 0.0
    %816 = vmatpush1.msra.mxu0 0.0
    %817 = vmatprep.subr.mxu0 0.0
    %818 = vmatpush1.msra.mxu0 0.0
    %819 = vmatprep.subr.mxu0 0.0
    %820 = vmatpush1.msra.mxu0 0.0
    %821 = vmatprep.mubr.f32.mxu0 0.0
    %822 = vmatmul.mubr.f32.gmra.mrb[0].mxu0 %v754
    %v823 = vpop.f32.mrb[0].mxu0
    %v824 = vadd.f32 0.0, %v823
    %v825 = vpop.f32.mrb[0].mxu0
    %v826 = vadd.f32 0.0, %v825
    %827 = vdwg.mxu0
    %828 = vmatprep.subr.mxu0 0.0
    %829 = vmatpush1.msra.mxu0 %v23
    %830 = vmatprep.subr.mxu0 0.0
    %831 = vmatpush1.msra.mxu0 %v26
    %832 = vmatprep.subr.mxu0 0.0
    %833 = vmatpush1.msra.mxu0 %v29
    %834 = vmatprep.subr.mxu0 0.0
    %835 = vmatpush1.msra.mxu0 %v32
    %836 = vmatprep.subr.mxu0 0.0
    %837 = vmatpush1.msra.mxu0 %v35
    %838 = vmatprep.subr.mxu0 0.0
    %839 = vmatpush1.msra.mxu0 %v38
    %840 = vmatprep.subr.mxu0 0.0
    %841 = vmatpush1.msra.mxu0 %v41
    %842 = vmatprep.subr.mxu0 0.0
    %843 = vmatpush1.msra.mxu0 %v44
    %844 = vmatprep.subr.mxu0 0.0
    %845 = vmatpush1.msra.mxu0 %v47
    %846 = vmatprep.subr.mxu0 0.0
    %847 = vmatpush1.msra.mxu0 %v50
    %848 = vmatprep.subr.mxu0 0.0
    %849 = vmatpush1.msra.mxu0 %v53
    %850 = vmatprep.subr.mxu0 0.0
    %851 = vmatpush1.msra.mxu0 %v56
    %852 = vmatprep.subr.mxu0 0.0
    %853 = vmatpush1.msra.mxu0 %v59
    %854 = vmatprep.subr.mxu0 0.0
    %855 = vmatpush1.msra.mxu0 %v62
    %856 = vmatprep.subr.mxu0 0.0
    %857 = vmatpush1.msra.mxu0 %v65
    %858 = vmatprep.subr.mxu0 0.0
    %859 = vmatpush1.msra.mxu0 %v68
    %860 = vmatprep.subr.mxu0 0.0
    %861 = vmatpush1.msra.mxu0 0.0
    %862 = vmatprep.subr.mxu0 0.0
    %863 = vmatpush1.msra.mxu0 0.0
    %864 = vmatprep.subr.mxu0 0.0
    %865 = vmatpush1.msra.mxu0 0.0
    %866 = vmatprep.subr.mxu0 0.0
    %867 = vmatpush1.msra.mxu0 0.0
    %868 = vmatprep.subr.mxu0 0.0
    %869 = vmatpush1.msra.mxu0 0.0
    %870 = vmatprep.subr.mxu0 0.0
    %871 = vmatpush1.msra.mxu0 0.0
    %872 = vmatprep.subr.mxu0 0.0
    %873 = vmatpush1.msra.mxu0 0.0
    %874 = vmatprep.subr.mxu0 0.0
    %875 = vmatpush1.msra.mxu0 0.0
    %876 = vmatprep.subr.mxu0 0.0
    %877 = vmatpush1.msra.mxu0 0.0
    %878 = vmatprep.subr.mxu0 0.0
    %879 = vmatpush1.msra.mxu0 0.0
    %880 = vmatprep.subr.mxu0 0.0
    %881 = vmatpush1.msra.mxu0 0.0
    %882 = vmatprep.subr.mxu0 0.0
    %883 = vmatpush1.msra.mxu0 0.0
    %884 = vmatprep.subr.mxu0 0.0
    %885 = vmatpush1.msra.mxu0 0.0
    %886 = vmatprep.subr.mxu0 0.0
    %887 = vmatpush1.msra.mxu0 0.0
    %888 = vmatprep.subr.mxu0 0.0
    %889 = vmatpush1.msra.mxu0 0.0
    %890 = vmatprep.subr.mxu0 0.0
    %891 = vmatpush1.msra.mxu0 0.0
    %892 = vmatprep.mubr.f32.mxu0 0.0
    %893 = vmatmul.mubr.f32.gmra.mrb[0].mxu0 %v754
    %v894 = vpop.f32.mrb[0].mxu0
    %v895 = vadd.f32 0.0, %v894
    %v896 = vpop.f32.mrb[0].mxu0
    %897 = vdwg.mxu0
    %v898 = vadd.f32 %v756, %v824
    %v899 = vxor.u32 %v898, 2147483648
    %v900 = vmul.f32 %v899, 1.442695
    %v901 = vpow.pop %v900
    %v902 = vadd.f32 %v901, 1.0
    %v903 = vrcp.pop %v902
    %v904 = vmul.f32 1.0, %v903
    %v906 = vrot.slane %v756, 2
    %v908 = vadd.f32 %v906, %v826
    %v909 = vxor.u32 %v908, 2147483648
    %v910 = vmul.f32 %v909, 1.442695
    %v911 = vpow.pop %v910
    %v912 = vadd.f32 %v911, 1.0
    %v913 = vrcp.pop %v912
    %v914 = vmul.f32 1.0, %v913
    %v915 = vadd.f32 %v895, %v233
    %v916 = vmul.f32 %v904, %v915
    %v917 = vrot.slane %v756, 4
    %v919 = vadd.f32 %v917, %v916
    %v920 = vtanh.pop %v919
    %v921 = vsub.f32 1.0, %v914
    %v922 = vmul.f32 %v921, %v920
    %v923 = vmul.f32 %v914, %v754
    %v924 = vadd.f32 %v922, %v923
    %s925 = scalar_lea.vmem %s0, 30
    %v926 = vld [vmem:[%s925] sm:$0x3f]
    %927 = vmatprep.subr.mxu0 %v22
    %928 = vmatpush1.msra.mxu0 %v21
    %929 = vmatprep.subr.mxu0 %v25
    %930 = vmatpush1.msra.mxu0 %v24
    %931 = vmatprep.subr.mxu0 %v28
    %932 = vmatpush1.msra.mxu0 %v27
    %933 = vmatprep.subr.mxu0 %v31
    %934 = vmatpush1.msra.mxu0 %v30
    %935 = vmatprep.subr.mxu0 %v34
    %936 = vmatpush1.msra.mxu0 %v33
    %937 = vmatprep.subr.mxu0 %v37
    %938 = vmatpush1.msra.mxu0 %v36
    %939 = vmatprep.subr.mxu0 %v40
    %940 = vmatpush1.msra.mxu0 %v39
    %941 = vmatprep.subr.mxu0 %v43
    %942 = vmatpush1.msra.mxu0 %v42
    %943 = vmatprep.subr.mxu0 %v46
    %944 = vmatpush1.msra.mxu0 %v45
    %945 = vmatprep.subr.mxu0 %v49
    %946 = vmatpush1.msra.mxu0 %v48
    %947 = vmatprep.subr.mxu0 %v52
    %948 = vmatpush1.msra.mxu0 %v51
    %949 = vmatprep.subr.mxu0 %v55
    %950 = vmatpush1.msra.mxu0 %v54
    %951 = vmatprep.subr.mxu0 %v58
    %952 = vmatpush1.msra.mxu0 %v57
    %953 = vmatprep.subr.mxu0 %v61
    %954 = vmatpush1.msra.mxu0 %v60
    %955 = vmatprep.subr.mxu0 %v64
    %956 = vmatpush1.msra.mxu0 %v63
    %957 = vmatprep.subr.mxu0 %v67
    %958 = vmatpush1.msra.mxu0 %v66
    %959 = vmatprep.subr.mxu0 0.0
    %960 = vmatpush1.msra.mxu0 0.0
    %961 = vmatprep.subr.mxu0 0.0
    %962 = vmatpush1.msra.mxu0 0.0
    %963 = vmatprep.subr.mxu0 0.0
    %964 = vmatpush1.msra.mxu0 0.0
    %965 = vmatprep.subr.mxu0 0.0
    %966 = vmatpush1.msra.mxu0 0.0
    %967 = vmatprep.subr.mxu0 0.0
    %968 = vmatpush1.msra.mxu0 0.0
    %969 = vmatprep.subr.mxu0 0.0
    %970 = vmatpush1.msra.mxu0 0.0
    %971 = vmatprep.subr.mxu0 0.0
    %972 = vmatpush1.msra.mxu0 0.0
    %973 = vmatprep.subr.mxu0 0.0
    %974 = vmatpush1.msra.mxu0 0.0
    %975 = vmatprep.subr.mxu0 0.0
    %976 = vmatpush1.msra.mxu0 0.0
    %977 = vmatprep.subr.mxu0 0.0
    %978 = vmatpush1.msra.mxu0 0.0
    %979 = vmatprep.subr.mxu0 0.0
    %980 = vmatpush1.msra.mxu0 0.0
    %981 = vmatprep.subr.mxu0 0.0
    %982 = vmatpush1.msra.mxu0 0.0
    %983 = vmatprep.subr.mxu0 0.0
    %984 = vmatpush1.msra.mxu0 0.0
    %985 = vmatprep.subr.mxu0 0.0
    %986 = vmatpush1.msra.mxu0 0.0
    %987 = vmatprep.subr.mxu0 0.0
    %988 = vmatpush1.msra.mxu0 0.0
    %989 = vmatprep.subr.mxu0 0.0
    %990 = vmatpush1.msra.mxu0 0.0
    %991 = vmatprep.mubr.f32.mxu0 0.0
    %992 = vmatmul.mubr.f32.gmra.mrb[0].mxu0 %v924
    %v993 = vpop.f32.mrb[0].mxu0
    %v994 = vadd.f32 0.0, %v993
    %v995 = vpop.f32.mrb[0].mxu0
    %v996 = vadd.f32 0.0, %v995
    %997 = vdwg.mxu0
    %998 = vmatprep.subr.mxu0 0.0
    %999 = vmatpush1.msra.mxu0 %v23
    %1000 = vmatprep.subr.mxu0 0.0
    %1001 = vmatpush1.msra.mxu0 %v26
    %1002 = vmatprep.subr.mxu0 0.0
    %1003 = vmatpush1.msra.mxu0 %v29
    %1004 = vmatprep.subr.mxu0 0.0
    %1005 = vmatpush1.msra.mxu0 %v32
    %1006 = vmatprep.subr.mxu0 0.0
    %1007 = vmatpush1.msra.mxu0 %v35
    %1008 = vmatprep.subr.mxu0 0.0
    %1009 = vmatpush1.msra.mxu0 %v38
    %1010 = vmatprep.subr.mxu0 0.0
    %1011 = vmatpush1.msra.mxu0 %v41
    %1012 = vmatprep.subr.mxu0 0.0
    %1013 = vmatpush1.msra.mxu0 %v44
    %1014 = vmatprep.subr.mxu0 0.0
    %1015 = vmatpush1.msra.mxu0 %v47
    %1016 = vmatprep.subr.mxu0 0.0
    %1017 = vmatpush1.msra.mxu0 %v50
    %1018 = vmatprep.subr.mxu0 0.0
    %1019 = vmatpush1.msra.mxu0 %v53
    %1020 = vmatprep.subr.mxu0 0.0
    %1021 = vmatpush1.msra.mxu0 %v56
    %1022 = vmatprep.subr.mxu0 0.0
    %1023 = vmatpush1.msra.mxu0 %v59
    %1024 = vmatprep.subr.mxu0 0.0
    %1025 = vmatpush1.msra.mxu0 %v62
    %1026 = vmatprep.subr.mxu0 0.0
    %1027 = vmatpush1.msra.mxu0 %v65
    %1028 = vmatprep.subr.mxu0 0.0
    %1029 = vmatpush1.msra.mxu0 %v68
    %1030 = vmatprep.subr.mxu0 0.0
    %1031 = vmatpush1.msra.mxu0 0.0
    %1032 = vmatprep.subr.mxu0 0.0
    %1033 = vmatpush1.msra.mxu0 0.0
    %1034 = vmatprep.subr.mxu0 0.0
    %1035 = vmatpush1.msra.mxu0 0.0
    %1036 = vmatprep.subr.mxu0 0.0
    %1037 = vmatpush1.msra.mxu0 0.0
    %1038 = vmatprep.subr.mxu0 0.0
    %1039 = vmatpush1.msra.mxu0 0.0
    %1040 = vmatprep.subr.mxu0 0.0
    %1041 = vmatpush1.msra.mxu0 0.0
    %1042 = vmatprep.subr.mxu0 0.0
    %1043 = vmatpush1.msra.mxu0 0.0
    %1044 = vmatprep.subr.mxu0 0.0
    %1045 = vmatpush1.msra.mxu0 0.0
    %1046 = vmatprep.subr.mxu0 0.0
    %1047 = vmatpush1.msra.mxu0 0.0
    %1048 = vmatprep.subr.mxu0 0.0
    %1049 = vmatpush1.msra.mxu0 0.0
    %1050 = vmatprep.subr.mxu0 0.0
    %1051 = vmatpush1.msra.mxu0 0.0
    %1052 = vmatprep.subr.mxu0 0.0
    %1053 = vmatpush1.msra.mxu0 0.0
    %1054 = vmatprep.subr.mxu0 0.0
    %1055 = vmatpush1.msra.mxu0 0.0
    %1056 = vmatprep.subr.mxu0 0.0
    %1057 = vmatpush1.msra.mxu0 0.0
    %1058 = vmatprep.subr.mxu0 0.0
    %1059 = vmatpush1.msra.mxu0 0.0
    %1060 = vmatprep.subr.mxu0 0.0
    %1061 = vmatpush1.msra.mxu0 0.0
    %1062 = vmatprep.mubr.f32.mxu0 0.0
    %1063 = vmatmul.mubr.f32.gmra.mrb[0].mxu0 %v924
    %v1064 = vpop.f32.mrb[0].mxu0
    %v1065 = vadd.f32 0.0, %v1064
    %v1066 = vpop.f32.mrb[0].mxu0
    %1067 = vdwg.mxu0
    %v1068 = vadd.f32 %v926, %v994
    %v1069 = vxor.u32 %v1068, 2147483648
    %v1070 = vmul.f32 %v1069, 1.442695
    %v1071 = vpow.pop %v1070
    %v1072 = vadd.f32 %v1071, 1.0
    %v1073 = vrcp.pop %v1072
    %v1074 = vmul.f32 1.0, %v1073
    %v1076 = vrot.slane %v926, 2
    %v1078 = vadd.f32 %v1076, %v996
    %v1079 = vxor.u32 %v1078, 2147483648
    %v1080 = vmul.f32 %v1079, 1.442695
    %v1081 = vpow.pop %v1080
    %v1082 = vadd.f32 %v1081, 1.0
    %v1083 = vrcp.pop %v1082
    %v1084 = vmul.f32 1.0, %v1083
    %v1085 = vadd.f32 %v1065, %v233
    %v1086 = vmul.f32 %v1074, %v1085
    %v1087 = vrot.slane %v926, 4
    %v1089 = vadd.f32 %v1087, %v1086
    %v1090 = vtanh.pop %v1089
    %v1091 = vsub.f32 1.0, %v1084
    %v1092 = vmul.f32 %v1091, %v1090
    %v1093 = vmul.f32 %v1084, %v924
    %v1094 = vadd.f32 %v1092, %v1093
    %s1095 = scalar_lea.vmem %s0, 36
    %v1096 = vld [vmem:[%s1095] sm:$0x3f]
    %1097 = vmatprep.subr.mxu0 %v22
    %1098 = vmatpush1.msra.mxu0 %v21
    %1099 = vmatprep.subr.mxu0 %v25
    %1100 = vmatpush1.msra.mxu0 %v24
    %1101 = vmatprep.subr.mxu0 %v28
    %1102 = vmatpush1.msra.mxu0 %v27
    %1103 = vmatprep.subr.mxu0 %v31
    %1104 = vmatpush1.msra.mxu0 %v30
    %1105 = vmatprep.subr.mxu0 %v34
    %1106 = vmatpush1.msra.mxu0 %v33
    %1107 = vmatprep.subr.mxu0 %v37
    %1108 = vmatpush1.msra.mxu0 %v36
    %1109 = vmatprep.subr.mxu0 %v40
    %1110 = vmatpush1.msra.mxu0 %v39
    %1111 = vmatprep.subr.mxu0 %v43
    %1112 = vmatpush1.msra.mxu0 %v42
    %1113 = vmatprep.subr.mxu0 %v46
    %1114 = vmatpush1.msra.mxu0 %v45
    %1115 = vmatprep.subr.mxu0 %v49
    %1116 = vmatpush1.msra.mxu0 %v48
    %1117 = vmatprep.subr.mxu0 %v52
    %1118 = vmatpush1.msra.mxu0 %v51
    %1119 = vmatprep.subr.mxu0 %v55
    %1120 = vmatpush1.msra.mxu0 %v54
    %1121 = vmatprep.subr.mxu0 %v58
    %1122 = vmatpush1.msra.mxu0 %v57
    %1123 = vmatprep.subr.mxu0 %v61
    %1124 = vmatpush1.msra.mxu0 %v60
    %1125 = vmatprep.subr.mxu0 %v64
    %1126 = vmatpush1.msra.mxu0 %v63
    %1127 = vmatprep.subr.mxu0 %v67
    %1128 = vmatpush1.msra.mxu0 %v66
    %1129 = vmatprep.subr.mxu0 0.0
    %1130 = vmatpush1.msra.mxu0 0.0
    %1131 = vmatprep.subr.mxu0 0.0
    %1132 = vmatpush1.msra.mxu0 0.0
    %1133 = vmatprep.subr.mxu0 0.0
    %1134 = vmatpush1.msra.mxu0 0.0
    %1135 = vmatprep.subr.mxu0 0.0
    %1136 = vmatpush1.msra.mxu0 0.0
    %1137 = vmatprep.subr.mxu0 0.0
    %1138 = vmatpush1.msra.mxu0 0.0
    %1139 = vmatprep.subr.mxu0 0.0
    %1140 = vmatpush1.msra.mxu0 0.0
    %1141 = vmatprep.subr.mxu0 0.0
    %1142 = vmatpush1.msra.mxu0 0.0
    %1143 = vmatprep.subr.mxu0 0.0
    %1144 = vmatpush1.msra.mxu0 0.0
    %1145 = vmatprep.subr.mxu0 0.0
    %1146 = vmatpush1.msra.mxu0 0.0
    %1147 = vmatprep.subr.mxu0 0.0
    %1148 = vmatpush1.msra.mxu0 0.0
    %1149 = vmatprep.subr.mxu0 0.0
    %1150 = vmatpush1.msra.mxu0 0.0
    %1151 = vmatprep.subr.mxu0 0.0
    %1152 = vmatpush1.msra.mxu0 0.0
    %1153 = vmatprep.subr.mxu0 0.0
    %1154 = vmatpush1.msra.mxu0 0.0
    %1155 = vmatprep.subr.mxu0 0.0
    %1156 = vmatpush1.msra.mxu0 0.0
    %1157 = vmatprep.subr.mxu0 0.0
    %1158 = vmatpush1.msra.mxu0 0.0
    %1159 = vmatprep.subr.mxu0 0.0
    %1160 = vmatpush1.msra.mxu0 0.0
    %1161 = vmatprep.mubr.f32.mxu0 0.0
    %1162 = vmatmul.mubr.f32.gmra.mrb[0].mxu0 %v1094
    %v1163 = vpop.f32.mrb[0].mxu0
    %v1164 = vadd.f32 0.0, %v1163
    %v1165 = vpop.f32.mrb[0].mxu0
    %v1166 = vadd.f32 0.0, %v1165
    %1167 = vdwg.mxu0
    %1168 = vmatprep.subr.mxu0 0.0
    %1169 = vmatpush1.msra.mxu0 %v23
    %1170 = vmatprep.subr.mxu0 0.0
    %1171 = vmatpush1.msra.mxu0 %v26
    %1172 = vmatprep.subr.mxu0 0.0
    %1173 = vmatpush1.msra.mxu0 %v29
    %1174 = vmatprep.subr.mxu0 0.0
    %1175 = vmatpush1.msra.mxu0 %v32
    %1176 = vmatprep.subr.mxu0 0.0
    %1177 = vmatpush1.msra.mxu0 %v35
    %1178 = vmatprep.subr.mxu0 0.0
    %1179 = vmatpush1.msra.mxu0 %v38
    %1180 = vmatprep.subr.mxu0 0.0
    %1181 = vmatpush1.msra.mxu0 %v41
    %1182 = vmatprep.subr.mxu0 0.0
    %1183 = vmatpush1.msra.mxu0 %v44
    %1184 = vmatprep.subr.mxu0 0.0
    %1185 = vmatpush1.msra.mxu0 %v47
    %1186 = vmatprep.subr.mxu0 0.0
    %1187 = vmatpush1.msra.mxu0 %v50
    %1188 = vmatprep.subr.mxu0 0.0
    %1189 = vmatpush1.msra.mxu0 %v53
    %1190 = vmatprep.subr.mxu0 0.0
    %1191 = vmatpush1.msra.mxu0 %v56
    %1192 = vmatprep.subr.mxu0 0.0
    %1193 = vmatpush1.msra.mxu0 %v59
    %1194 = vmatprep.subr.mxu0 0.0
    %1195 = vmatpush1.msra.mxu0 %v62
    %1196 = vmatprep.subr.mxu0 0.0
    %1197 = vmatpush1.msra.mxu0 %v65
    %1198 = vmatprep.subr.mxu0 0.0
    %1199 = vmatpush1.msra.mxu0 %v68
    %1200 = vmatprep.subr.mxu0 0.0
    %1201 = vmatpush1.msra.mxu0 0.0
    %1202 = vmatprep.subr.mxu0 0.0
    %1203 = vmatpush1.msra.mxu0 0.0
    %1204 = vmatprep.subr.mxu0 0.0
    %1205 = vmatpush1.msra.mxu0 0.0
    %1206 = vmatprep.subr.mxu0 0.0
    %1207 = vmatpush1.msra.mxu0 0.0
    %1208 = vmatprep.subr.mxu0 0.0
    %1209 = vmatpush1.msra.mxu0 0.0
    %1210 = vmatprep.subr.mxu0 0.0
    %1211 = vmatpush1.msra.mxu0 0.0
    %1212 = vmatprep.subr.mxu0 0.0
    %1213 = vmatpush1.msra.mxu0 0.0
    %1214 = vmatprep.subr.mxu0 0.0
    %1215 = vmatpush1.msra.mxu0 0.0
    %1216 = vmatprep.subr.mxu0 0.0
    %1217 = vmatpush1.msra.mxu0 0.0
    %1218 = vmatprep.subr.mxu0 0.0
    %1219 = vmatpush1.msra.mxu0 0.0
    %1220 = vmatprep.subr.mxu0 0.0
    %1221 = vmatpush1.msra.mxu0 0.0
    %1222 = vmatprep.subr.mxu0 0.0
    %1223 = vmatpush1.msra.mxu0 0.0
    %1224 = vmatprep.subr.mxu0 0.0
    %1225 = vmatpush1.msra.mxu0 0.0
    %1226 = vmatprep.subr.mxu0 0.0
    %1227 = vmatpush1.msra.mxu0 0.0
    %1228 = vmatprep.subr.mxu0 0.0
    %1229 = vmatpush1.msra.mxu0 0.0
    %1230 = vmatprep.subr.mxu0 0.0
    %1231 = vmatpush1.msra.mxu0 0.0
    %1232 = vmatprep.mubr.f32.mxu0 0.0
    %1233 = vmatmul.mubr.f32.gmra.mrb[0].mxu0 %v1094
    %v1234 = vpop.f32.mrb[0].mxu0
    %v1235 = vadd.f32 0.0, %v1234
    %v1236 = vpop.f32.mrb[0].mxu0
    %1237 = vdwg.mxu0
    %v1238 = vadd.f32 %v1096, %v1164
    %v1239 = vxor.u32 %v1238, 2147483648
    %v1240 = vmul.f32 %v1239, 1.442695
    %v1241 = vpow.pop %v1240
    %v1242 = vadd.f32 %v1241, 1.0
    %v1243 = vrcp.pop %v1242
    %v1244 = vmul.f32 1.0, %v1243
    %v1246 = vrot.slane %v1096, 2
    %v1248 = vadd.f32 %v1246, %v1166
    %v1249 = vxor.u32 %v1248, 2147483648
    %v1250 = vmul.f32 %v1249, 1.442695
    %v1251 = vpow.pop %v1250
    %v1252 = vadd.f32 %v1251, 1.0
    %v1253 = vrcp.pop %v1252
    %v1254 = vmul.f32 1.0, %v1253
    %v1255 = vadd.f32 %v1235, %v233
    %v1256 = vmul.f32 %v1244, %v1255
    %v1257 = vrot.slane %v1096, 4
    %v1259 = vadd.f32 %v1257, %v1256
    %v1260 = vtanh.pop %v1259
    %v1261 = vsub.f32 1.0, %v1254
    %v1262 = vmul.f32 %v1261, %v1260
    %v1263 = vmul.f32 %v1254, %v1094
    %v1264 = vadd.f32 %v1262, %v1263
    %s1265 = scalar_lea.vmem %s0, 42
    %v1266 = vld [vmem:[%s1265] sm:$0x3f]
    %1267 = vmatprep.subr.mxu0 %v22
    %1268 = vmatpush1.msra.mxu0 %v21
    %1269 = vmatprep.subr.mxu0 %v25
    %1270 = vmatpush1.msra.mxu0 %v24
    %1271 = vmatprep.subr.mxu0 %v28
    %1272 = vmatpush1.msra.mxu0 %v27
    %1273 = vmatprep.subr.mxu0 %v31
    %1274 = vmatpush1.msra.mxu0 %v30
    %1275 = vmatprep.subr.mxu0 %v34
    %1276 = vmatpush1.msra.mxu0 %v33
    %1277 = vmatprep.subr.mxu0 %v37
    %1278 = vmatpush1.msra.mxu0 %v36
    %1279 = vmatprep.subr.mxu0 %v40
    %1280 = vmatpush1.msra.mxu0 %v39
    %1281 = vmatprep.subr.mxu0 %v43
    %1282 = vmatpush1.msra.mxu0 %v42
    %1283 = vmatprep.subr.mxu0 %v46
    %1284 = vmatpush1.msra.mxu0 %v45
    %1285 = vmatprep.subr.mxu0 %v49
    %1286 = vmatpush1.msra.mxu0 %v48
    %1287 = vmatprep.subr.mxu0 %v52
    %1288 = vmatpush1.msra.mxu0 %v51
    %1289 = vmatprep.subr.mxu0 %v55
    %1290 = vmatpush1.msra.mxu0 %v54
    %1291 = vmatprep.subr.mxu0 %v58
    %1292 = vmatpush1.msra.mxu0 %v57
    %1293 = vmatprep.subr.mxu0 %v61
    %1294 = vmatpush1.msra.mxu0 %v60
    %1295 = vmatprep.subr.mxu0 %v64
    %1296 = vmatpush1.msra.mxu0 %v63
    %1297 = vmatprep.subr.mxu0 %v67
    %1298 = vmatpush1.msra.mxu0 %v66
    %1299 = vmatprep.subr.mxu0 0.0
    %1300 = vmatpush1.msra.mxu0 0.0
    %1301 = vmatprep.subr.mxu0 0.0
    %1302 = vmatpush1.msra.mxu0 0.0
    %1303 = vmatprep.subr.mxu0 0.0
    %1304 = vmatpush1.msra.mxu0 0.0
    %1305 = vmatprep.subr.mxu0 0.0
    %1306 = vmatpush1.msra.mxu0 0.0
    %1307 = vmatprep.subr.mxu0 0.0
    %1308 = vmatpush1.msra.mxu0 0.0
    %1309 = vmatprep.subr.mxu0 0.0
    %1310 = vmatpush1.msra.mxu0 0.0
    %1311 = vmatprep.subr.mxu0 0.0
    %1312 = vmatpush1.msra.mxu0 0.0
    %1313 = vmatprep.subr.mxu0 0.0
    %1314 = vmatpush1.msra.mxu0 0.0
    %1315 = vmatprep.subr.mxu0 0.0
    %1316 = vmatpush1.msra.mxu0 0.0
    %1317 = vmatprep.subr.mxu0 0.0
    %1318 = vmatpush1.msra.mxu0 0.0
    %1319 = vmatprep.subr.mxu0 0.0
    %1320 = vmatpush1.msra.mxu0 0.0
    %1321 = vmatprep.subr.mxu0 0.0
    %1322 = vmatpush1.msra.mxu0 0.0
    %1323 = vmatprep.subr.mxu0 0.0
    %1324 = vmatpush1.msra.mxu0 0.0
    %1325 = vmatprep.subr.mxu0 0.0
    %1326 = vmatpush1.msra.mxu0 0.0
    %1327 = vmatprep.subr.mxu0 0.0
    %1328 = vmatpush1.msra.mxu0 0.0
    %1329 = vmatprep.subr.mxu0 0.0
    %1330 = vmatpush1.msra.mxu0 0.0
    %1331 = vmatprep.mubr.f32.mxu0 0.0
    %1332 = vmatmul.mubr.f32.gmra.mrb[0].mxu0 %v1264
    %v1333 = vpop.f32.mrb[0].mxu0
    %v1334 = vadd.f32 0.0, %v1333
    %v1335 = vpop.f32.mrb[0].mxu0
    %v1336 = vadd.f32 0.0, %v1335
    %1337 = vdwg.mxu0
    %1338 = vmatprep.subr.mxu0 0.0
    %1339 = vmatpush1.msra.mxu0 %v23
    %1340 = vmatprep.subr.mxu0 0.0
    %1341 = vmatpush1.msra.mxu0 %v26
    %1342 = vmatprep.subr.mxu0 0.0
    %1343 = vmatpush1.msra.mxu0 %v29
    %1344 = vmatprep.subr.mxu0 0.0
    %1345 = vmatpush1.msra.mxu0 %v32
    %1346 = vmatprep.subr.mxu0 0.0
    %1347 = vmatpush1.msra.mxu0 %v35
    %1348 = vmatprep.subr.mxu0 0.0
    %1349 = vmatpush1.msra.mxu0 %v38
    %1350 = vmatprep.subr.mxu0 0.0
    %1351 = vmatpush1.msra.mxu0 %v41
    %1352 = vmatprep.subr.mxu0 0.0
    %1353 = vmatpush1.msra.mxu0 %v44
    %1354 = vmatprep.subr.mxu0 0.0
    %1355 = vmatpush1.msra.mxu0 %v47
    %1356 = vmatprep.subr.mxu0 0.0
    %1357 = vmatpush1.msra.mxu0 %v50
    %1358 = vmatprep.subr.mxu0 0.0
    %1359 = vmatpush1.msra.mxu0 %v53
    %1360 = vmatprep.subr.mxu0 0.0
    %1361 = vmatpush1.msra.mxu0 %v56
    %1362 = vmatprep.subr.mxu0 0.0
    %1363 = vmatpush1.msra.mxu0 %v59
    %1364 = vmatprep.subr.mxu0 0.0
    %1365 = vmatpush1.msra.mxu0 %v62
    %1366 = vmatprep.subr.mxu0 0.0
    %1367 = vmatpush1.msra.mxu0 %v65
    %1368 = vmatprep.subr.mxu0 0.0
    %1369 = vmatpush1.msra.mxu0 %v68
    %1370 = vmatprep.subr.mxu0 0.0
    %1371 = vmatpush1.msra.mxu0 0.0
    %1372 = vmatprep.subr.mxu0 0.0
    %1373 = vmatpush1.msra.mxu0 0.0
    %1374 = vmatprep.subr.mxu0 0.0
    %1375 = vmatpush1.msra.mxu0 0.0
    %1376 = vmatprep.subr.mxu0 0.0
    %1377 = vmatpush1.msra.mxu0 0.0
    %1378 = vmatprep.subr.mxu0 0.0
    %1379 = vmatpush1.msra.mxu0 0.0
    %1380 = vmatprep.subr.mxu0 0.0
    %1381 = vmatpush1.msra.mxu0 0.0
    %1382 = vmatprep.subr.mxu0 0.0
    %1383 = vmatpush1.msra.mxu0 0.0
    %1384 = vmatprep.subr.mxu0 0.0
    %1385 = vmatpush1.msra.mxu0 0.0
    %1386 = vmatprep.subr.mxu0 0.0
    %1387 = vmatpush1.msra.mxu0 0.0
    %1388 = vmatprep.subr.mxu0 0.0
    %1389 = vmatpush1.msra.mxu0 0.0
    %1390 = vmatprep.subr.mxu0 0.0
    %1391 = vmatpush1.msra.mxu0 0.0
    %1392 = vmatprep.subr.mxu0 0.0
    %1393 = vmatpush1.msra.mxu0 0.0
    %1394 = vmatprep.subr.mxu0 0.0
    %1395 = vmatpush1.msra.mxu0 0.0
    %1396 = vmatprep.subr.mxu0 0.0
    %1397 = vmatpush1.msra.mxu0 0.0
    %1398 = vmatprep.subr.mxu0 0.0
    %1399 = vmatpush1.msra.mxu0 0.0
    %1400 = vmatprep.subr.mxu0 0.0
    %1401 = vmatpush1.msra.mxu0 0.0
    %1402 = vmatprep.mubr.f32.mxu0 0.0
    %1403 = vmatmul.mubr.f32.gmra.mrb[0].mxu0 %v1264
    %v1404 = vpop.f32.mrb[0].mxu0
    %v1405 = vadd.f32 0.0, %v1404
    %v1406 = vpop.f32.mrb[0].mxu0
    %1407 = vdwg.mxu0
    %v1408 = vadd.f32 %v1266, %v1334
    %v1409 = vxor.u32 %v1408, 2147483648
    %v1410 = vmul.f32 %v1409, 1.442695
    %v1411 = vpow.pop %v1410
    %v1412 = vadd.f32 %v1411, 1.0
    %v1413 = vrcp.pop %v1412
    %v1414 = vmul.f32 1.0, %v1413
    %v1416 = vrot.slane %v1266, 2
    %v1418 = vadd.f32 %v1416, %v1336
    %v1419 = vxor.u32 %v1418, 2147483648
    %v1420 = vmul.f32 %v1419, 1.442695
    %v1421 = vpow.pop %v1420
    %v1422 = vadd.f32 %v1421, 1.0
    %v1423 = vrcp.pop %v1422
    %v1424 = vmul.f32 1.0, %v1423
    %v1425 = vadd.f32 %v1405, %v233
    %v1426 = vmul.f32 %v1414, %v1425
    %v1427 = vrot.slane %v1266, 4
    %v1429 = vadd.f32 %v1427, %v1426
    %v1430 = vtanh.pop %v1429
    %v1431 = vsub.f32 1.0, %v1424
    %v1432 = vmul.f32 %v1431, %v1430
    %v1433 = vmul.f32 %v1424, %v1264
    %v1434 = vadd.f32 %v1432, %v1433
    %v1435 = vld [vmem:[%s3] sm:$0xff]
    %v1436 = vld [vmem:[%s3 + $0x8] sm:$0xff]
    %v1437 = vld [vmem:[%s3 + $0x10] sm:$0xff]
    %v1438 = vld [vmem:[%s3 + $0x18] sm:$0xff]
    %v1439 = vld [vmem:[%s3 + $0x20] sm:$0xff]
    %v1440 = vld [vmem:[%s3 + $0x28] sm:$0xff]
    %v1441 = vld [vmem:[%s3 + $0x30] sm:$0xff]
    %v1442 = vld [vmem:[%s3 + $0x38] sm:$0xff]
    %v1443 = vld [vmem:[%s3 + $0x40] sm:$0xff]
    %v1444 = vld [vmem:[%s3 + $0x48] sm:$0xff]
    %v1445 = vld [vmem:[%s3 + $0x50] sm:$0xff]
    %v1446 = vld [vmem:[%s3 + $0x58] sm:$0xff]
    %v1447 = vld [vmem:[%s3 + $0x60] sm:$0xff]
    %v1448 = vld [vmem:[%s3 + $0x68] sm:$0xff]
    %v1449 = vld [vmem:[%s3 + $0x70] sm:$0xff]
    %v1450 = vld [vmem:[%s3 + $0x78] sm:$0xff]
    %v1451 = vld [vmem:[%s4] sm:$0x1]
    %v1453 = vlaneseq
    %v1454 = vshrl.u32 %v1453, 7
    %v1455 = vsub.s32 0, %v1454
    %v1456 = vrot.slane %v1451, %v1455
    %1458 = vmatprep.subr.mxu0 0.0
    %1459 = vmatpush1.msra.mxu0 %v1435
    %1460 = vmatprep.subr.mxu0 0.0
    %1461 = vmatpush1.msra.mxu0 %v1436
    %1462 = vmatprep.subr.mxu0 0.0
    %1463 = vmatpush1.msra.mxu0 %v1437
    %1464 = vmatprep.subr.mxu0 0.0
    %1465 = vmatpush1.msra.mxu0 %v1438
    %1466 = vmatprep.subr.mxu0 0.0
    %1467 = vmatpush1.msra.mxu0 %v1439
    %1468 = vmatprep.subr.mxu0 0.0
    %1469 = vmatpush1.msra.mxu0 %v1440
    %1470 = vmatprep.subr.mxu0 0.0
    %1471 = vmatpush1.msra.mxu0 %v1441
    %1472 = vmatprep.subr.mxu0 0.0
    %1473 = vmatpush1.msra.mxu0 %v1442
    %1474 = vmatprep.subr.mxu0 0.0
    %1475 = vmatpush1.msra.mxu0 %v1443
    %1476 = vmatprep.subr.mxu0 0.0
    %1477 = vmatpush1.msra.mxu0 %v1444
    %1478 = vmatprep.subr.mxu0 0.0
    %1479 = vmatpush1.msra.mxu0 %v1445
    %1480 = vmatprep.subr.mxu0 0.0
    %1481 = vmatpush1.msra.mxu0 %v1446
    %1482 = vmatprep.subr.mxu0 0.0
    %1483 = vmatpush1.msra.mxu0 %v1447
    %1484 = vmatprep.subr.mxu0 0.0
    %1485 = vmatpush1.msra.mxu0 %v1448
    %1486 = vmatprep.subr.mxu0 0.0
    %1487 = vmatpush1.msra.mxu0 %v1449
    %1488 = vmatprep.subr.mxu0 0.0
    %1489 = vmatpush1.msra.mxu0 %v1450
    %1490 = vmatprep.subr.mxu0 0.0
    %1491 = vmatpush1.msra.mxu0 0.0
    %1492 = vmatprep.subr.mxu0 0.0
    %1493 = vmatpush1.msra.mxu0 0.0
    %1494 = vmatprep.subr.mxu0 0.0
    %1495 = vmatpush1.msra.mxu0 0.0
    %1496 = vmatprep.subr.mxu0 0.0
    %1497 = vmatpush1.msra.mxu0 0.0
    %1498 = vmatprep.subr.mxu0 0.0
    %1499 = vmatpush1.msra.mxu0 0.0
    %1500 = vmatprep.subr.mxu0 0.0
    %1501 = vmatpush1.msra.mxu0 0.0
    %1502 = vmatprep.subr.mxu0 0.0
    %1503 = vmatpush1.msra.mxu0 0.0
    %1504 = vmatprep.subr.mxu0 0.0
    %1505 = vmatpush1.msra.mxu0 0.0
    %1506 = vmatprep.subr.mxu0 0.0
    %1507 = vmatpush1.msra.mxu0 0.0
    %1508 = vmatprep.subr.mxu0 0.0
    %1509 = vmatpush1.msra.mxu0 0.0
    %1510 = vmatprep.subr.mxu0 0.0
    %1511 = vmatpush1.msra.mxu0 0.0
    %1512 = vmatprep.subr.mxu0 0.0
    %1513 = vmatpush1.msra.mxu0 0.0
    %1514 = vmatprep.subr.mxu0 0.0
    %1515 = vmatpush1.msra.mxu0 0.0
    %1516 = vmatprep.subr.mxu0 0.0
    %1517 = vmatpush1.msra.mxu0 0.0
    %1518 = vmatprep.subr.mxu0 0.0
    %1519 = vmatpush1.msra.mxu0 0.0
    %1520 = vmatprep.subr.mxu0 0.0
    %1521 = vmatpush1.msra.mxu0 0.0
    %1522 = vmatprep.mubr.f32.mxu0 0.0
    %1523 = vmatmul.mubr.f32.gmra.mrb[0].mxu0 %v1434
    %v1524 = vpop.f32.mrb[0].mxu0
    %v1525 = vadd.f32 %v1456, %v1524
    %v1526 = vpop.f32.mrb[0].mxu0
    %1527 = vdwg.mxu0
    %v1528 = vmax.f32 %v1525, 0.0
    %vm1529 = vcmask 58368
    %v1530 = vsel %vm1529, %v1528, -inf
    %1531 = vmax.xlane.f32.xlu0 %v1530
    %v1532 = vpop.xlane.xlu0 %1531
    %v1533 = vsub.f32 %v1528, %v1532
    %v1534 = vmul.f32 %v1533, 1.442695
    %v1535 = vpow.pop %v1534
    %v1536 = vsel %vm1529, %v1535, 0.0
    %1537 = vadd.xlane.f32.xlu0 %v1536
    %v1538 = vpop.xlane.xlu0 %1537
    %v1539 = vrcp.pop %v1538
    %v1540 = vmul.f32 %v1535, %v1539
    %1541 = vst.msk [vmem:[#allocation2] sm:$0x3] %vm1529, %v1540
    // Predicated region
    $region22: #{gru_forward.7} parent=1 // pred_check
      _
    $region23: #{gru_forward.7} parent=1 // pred_check_branch
      %1543 = sbr.rel (0) target = $region25
    $region24: #{gru_forward.7} parent=1 // pred_region
      %s1545 = ssub.s32 32, 32
      %1546 = vsyncadd [#allocation3], %s1545
      %s1548 = sshll.u32 [#allocation2], 4
      %s1549 = int_to_ptr.vmem [resolvable:$true] %s1548
      %1551 = dma.vmem_to_hbm [thread:$0]  %s1549, 32, %s5, [#allocation3]
    $region25: #{gru_forward.7} parent=1 // pred_fallthru
      _
    // Predicated region
    $region26: #{gru_forward.7} parent=1 // pred_check
      _
    $region27: #{gru_forward.7} parent=1 // pred_check_branch
      %1553 = sbr.rel (0) target = $region29
    $region28: #{gru_forward.7} parent=1 // pred_region
      %1554 = dma.done [#allocation3], 32
    $region29: #{gru_forward.7} parent=1 // pred_fallthru
      _
    %1555 = vsyncpa [#allocation3], 1

</llo_original>
